<compile_context>
chip_gen: v5e
topology: v5e:2x2
jax: 0.10.0
libtpu: 0.0.40
codegen_flags: <defaults>
</compile_context>

<pallas_src>
from functools import partial

import jax
import jax.numpy as jnp
import numpy as np
from jax.experimental import pallas as pl
from jax.experimental.pallas import tpu as pltpu


def apla_attention_kernel(x_ref, wq_ref, wkv_ref, wp3_ref, bp_ref,
                          out_ref, attn_ref,
                          kv_ref, q_ref, acc_ref,
                          *, num_heads, q_tile):
    # x_ref:    (1, N, C)            full sequence of one batch element
    # wq_ref:   (C, C)   bf16        q weight, (in, out), softmax scale folded in
    # wkv_ref:  (C, 2C)  bf16        fused k|v weight, (in, out)
    # wp3_ref:  (H, hd, C) bf16      scatter-folded output projection, head-split
    # bp_ref:   (1, C)   f32         scatter-folded output projection bias
    # out_ref:  (1, tq, C)           one query tile of the output
    # attn_ref: (1, H, tq, N)        one query tile of the attention map
    # kv_ref:   VMEM (N, 2C) bf16    k|v staging (persists across query tiles)
    # q_ref:    VMEM (tq, C) bf16    q staging for this tile
    # acc_ref:  VMEM (tq, C) f32     output accumulator
    _, N, C = x_ref.shape
    H = num_heads
    hd = C // H
    qi = pl.program_id(1)

    # --- once per batch element: fused k|v projection (bf16 MXU, f32 acc),
    #     ONE store into the VMEM scratch; reused by all query tiles. ---------
    @pl.when(qi == 0)
    def _():
        x_bf = x_ref[0].astype(jnp.bfloat16)                              # (N, C)
        kv = jnp.dot(x_bf, wkv_ref[...],
                     preferred_element_type=jnp.float32)                  # (N, 2C)
        kv_ref[...] = kv.astype(jnp.bfloat16)

    # --- per query tile: q projection (scale already folded into wq). --------
    q_start = pl.multiple_of(qi * q_tile, q_tile)
    xq_bf = x_ref[0, pl.ds(q_start, q_tile), :].astype(jnp.bfloat16)      # (tq, C)
    q_ref[...] = jnp.dot(xq_bf, wq_ref[...],
                         preferred_element_type=jnp.float32).astype(jnp.bfloat16)

    acc_ref[...] = jnp.zeros_like(acc_ref)

    # --- per-head attention: all operands are small VMEM-ref slices (no large
    #     value kept live across the unrolled loop); head stitch is folded into
    #     the projection by accumulating ctx_h @ wp3[h] into acc. -------------
    for h in range(H):
        qh = q_ref[:, h * hd:(h + 1) * hd]                    # (tq, hd) bf16
        kh = kv_ref[:, h * hd:(h + 1) * hd]                   # (N,  hd) bf16
        vh = kv_ref[:, C + h * hd:C + (h + 1) * hd]           # (N,  hd) bf16

        s = jax.lax.dot_general(qh, kh, (((1,), (1,)), ((), ())),
                                preferred_element_type=jnp.float32)       # (tq, N)
        s = s - jnp.max(s, axis=-1, keepdims=True)
        e = jnp.exp(s)
        den = jnp.sum(e, axis=-1, keepdims=True)                          # (tq, 1)

        # Exact probabilities for the *returned* attention map ...
        attn_ref[0, h] = (e * pl.reciprocal(den)).astype(attn_ref.dtype)
        # ... approximate (EUP-slot) reciprocal for the context path.
        p = (e * pl.reciprocal(den, approx=True)).astype(jnp.bfloat16)    # (tq, N)

        ctx = jnp.dot(p, vh, preferred_element_type=jnp.float32)          # (tq, hd)
        acc_ref[...] += jnp.dot(ctx.astype(jnp.bfloat16), wp3_ref[h],
                                preferred_element_type=jnp.float32)       # (tq, C)

    out_ref[0] = (acc_ref[...] + bp_ref[...]).astype(out_ref.dtype)


def prepare_weights(w_qkv, proj_w1, proj_b1, proj_w2, proj_b2, indices,
                    num_heads, partial_size, qk_scale=None,
                    compute_dtype=jnp.bfloat16):
    """One-time, host-side weight preparation (hoisted out of the forward path).

    - q weight transposed to (in, out) with the softmax scale folded in.
    - k|v fused into a single (C, 2C) (in, out) weight.
    - The torch scatter_ of the trainable/frozen projection halves is folded
      into one combined projection; it is reshaped to (H, hd, C) so the head
      stitch happens inside the projection accumulation.
    - Matmul weights are stored in bf16 (MXU-native); bias stays f32.
    """
    C = w_qkv.shape[1]
    hd = C // num_heads
    scale = qk_scale if qk_scale is not None else hd ** -0.5

    idx = np.asarray(jax.device_get(indices))
    if not np.array_equal(np.sort(idx), np.arange(C)):
        raise ValueError(
            "`indices` must be a permutation of range(dim): the trainable/"
            "frozen scatter halves are folded into one projection weight and "
            "must cover every output column exactly once.")

    wq = jnp.transpose(w_qkv[:C]) * scale                 # (C, C), scale folded
    wk = jnp.transpose(w_qkv[C:2 * C])                    # (C, C)
    wv = jnp.transpose(w_qkv[2 * C:])                     # (C, C)
    wkv = jnp.concatenate([wk, wv], axis=1)               # (C, 2C)

    t_idx = indices[:partial_size]
    f_idx = indices[partial_size:]
    w_comb = (jnp.zeros((C, C), jnp.float32)
              .at[t_idx].set(proj_w1.astype(jnp.float32))
              .at[f_idx].set(proj_w2.astype(jnp.float32)))
    b_comb = (jnp.zeros((C,), jnp.float32)
              .at[t_idx].set(proj_b1.astype(jnp.float32))
              .at[f_idx].set(proj_b2.astype(jnp.float32)))
    wp3 = jnp.transpose(w_comb).reshape(num_heads, hd, C)  # (H, hd, C), (in,out)
    bp = b_comb.reshape(1, C)

    return (wq.astype(compute_dtype), wkv.astype(compute_dtype),
            wp3.astype(compute_dtype), bp.astype(jnp.float32))


def apla_attention_fused(x, wq, wkv, wp3, bp, num_heads, *,
                         q_tile=None,
                         attn_dtype=jnp.bfloat16,
                         vmem_limit_bytes=48 * 1024 * 1024,
                         buffered_weights=True):
    """Forward pass given pre-fused weights (see prepare_weights)."""
    B, N, C = x.shape
    H = num_heads
    assert C % H == 0
    hd = C // H
    if q_tile is None:
        q_tile = min(N, 256)            # >=256 keeps MXU M-dim full on v6e/v7x
    assert N % q_tile == 0, "N must be divisible by q_tile"
    n_q_tiles = N // q_tile

    kernel = partial(apla_attention_kernel, num_heads=H, q_tile=q_tile)
    # Grid-invariant weights: single-buffer them (no wasted second copy).
    w_kwargs = {"pipeline_mode": pl.Buffered(1)} if buffered_weights else {}

    grid_spec = pltpu.PrefetchScalarGridSpec(
        num_scalar_prefetch=0,
        grid=(B, n_q_tiles),
        in_specs=[
            pl.BlockSpec((1, N, C), lambda b, q: (b, 0, 0)),
            pl.BlockSpec((C, C), lambda b, q: (0, 0), **w_kwargs),
            pl.BlockSpec((C, 2 * C), lambda b, q: (0, 0), **w_kwargs),
            pl.BlockSpec((H, hd, C), lambda b, q: (0, 0, 0), **w_kwargs),
            pl.BlockSpec((1, C), lambda b, q: (0, 0), **w_kwargs),
        ],
        out_specs=(
            pl.BlockSpec((1, q_tile, C), lambda b, q: (b, q, 0)),
            pl.BlockSpec((1, H, q_tile, N), lambda b, q: (b, 0, q, 0)),
        ),
        scratch_shapes=[
            pltpu.VMEM((N, 2 * C), jnp.bfloat16),    # k|v staging (per batch elem)
            pltpu.VMEM((q_tile, C), jnp.bfloat16),   # q staging (per tile)
            pltpu.VMEM((q_tile, C), jnp.float32),    # output accumulator
        ],
    )

    out, attn = pl.pallas_call(
        kernel,
        out_shape=(jax.ShapeDtypeStruct((B, N, C), x.dtype),
                   jax.ShapeDtypeStruct((B, H, N, N), attn_dtype)),
        grid_spec=grid_spec,
        compiler_params=pltpu.CompilerParams(
            dimension_semantics=("parallel", "arbitrary"),
            vmem_limit_bytes=vmem_limit_bytes),
    )(x, wq, wkv, wp3, bp)
    return out, attn


def apla_attention(x, w_qkv, proj_w1, proj_b1, proj_w2, proj_b2, indices,
                   num_heads=8, partial_size=8):
    """Convenience wrapper. In real use, call prepare_weights once and reuse."""
    wq, wkv, wp3, bp = prepare_weights(w_qkv, proj_w1, proj_b1, proj_w2, proj_b2,
                                       indices, num_heads, partial_size)
    return apla_attention_fused(x, wq, wkv, wp3, bp, num_heads)


def reference(x, w_qkv, proj_w1, proj_b1, proj_w2, proj_b2, indices,
              num_heads, partial_size):
    """Pure-JAX f32 transcription of the PyTorch forward (for verification)."""
    B, N, C = x.shape
    hd = C // num_heads
    scale = hd ** -0.5
    qkv = x @ w_qkv.T
    qkv = qkv.reshape(B, N, 3, num_heads, hd).transpose(2, 0, 3, 1, 4)
    q, k, v = qkv[0], qkv[1], qkv[2]
    attn = jax.nn.softmax(q @ jnp.swapaxes(k, -2, -1) * scale, axis=-1)
    xo = (attn @ v).transpose(0, 2, 1, 3).reshape(B, N, C)
    t_out = xo @ proj_w1.T + proj_b1
    f_out = xo @ proj_w2.T + proj_b2
    out = jnp.zeros((B, N, C), x.dtype)
    out = out.at[..., indices[:partial_size]].set(t_out)
    out = out.at[..., indices[partial_size:]].set(f_out)
    return out, attn


if __name__ == "__main__":
    # config: dim=32, num_heads=8 (head_dim=4), partial_size=8, B=2, N=8
    B, N, C, H, P = 2, 8, 32, 8, 8

    key = jax.random.PRNGKey(0)
    k1, k2, k3, k4, k5, k6, k7 = jax.random.split(key, 7)
    x       = jax.random.normal(k1, (B, N, C), jnp.float32)
    w_qkv   = jax.random.normal(k2, (3 * C, C), jnp.float32) * 0.1
    proj_w1 = jax.random.normal(k3, (P, C), jnp.float32) * 0.1      # trainable rows
    proj_w2 = jax.random.normal(k4, (C - P, C), jnp.float32) * 0.1  # frozen rows
    proj_b1 = jax.random.normal(k5, (P,), jnp.float32) * 0.1
    proj_b2 = jax.random.normal(k6, (C - P,), jnp.float32) * 0.1
    indices = jax.random.permutation(k7, C)                          # torch.randperm(dim)

    # Weight prep is hoisted out of the per-call path.
    wq, wkv, wp3, bp = prepare_weights(w_qkv, proj_w1, proj_b1, proj_w2, proj_b2,
                                       indices, num_heads=H, partial_size=P)

    fwd = jax.jit(partial(apla_attention_fused, num_heads=H))
    try:
        out, attn = fwd(x, wq, wkv, wp3, bp)
        jax.block_until_ready((out, attn))
    except Exception:
        # Fallback for JAX versions without pl.Buffered(1) single-buffering:
        # identical kernel, default (double-buffered) weight pipelining.
        fwd = jax.jit(partial(apla_attention_fused, num_heads=H,
                              buffered_weights=False))
        out, attn = fwd(x, wq, wkv, wp3, bp)
        jax.block_until_ready((out, attn))

    out_r, attn_r = reference(x, w_qkv, proj_w1, proj_b1, proj_w2, proj_b2,
                              indices, num_heads=H, partial_size=P)
    assert out.shape == (B, N, C) and attn.shape == (B, H, N, N)
    # Tolerances account for bf16 MXU operands (probs/weights) and the bf16
    # attention-map output; softmax math and accumulation stay f32.
    assert jnp.allclose(out, out_r, atol=2e-2, rtol=2e-2), "output mismatch"
    assert jnp.allclose(attn.astype(jnp.float32), attn_r,
                        atol=2e-2, rtol=2e-2), "attn mismatch"

    print("KERNEL_OK")
</pallas_src>

<mosaic_0001>
module attributes {stable_mosaic.version = 11 : i64} {
  func.func @apla_attention_kernel(%arg0: i32, %arg1: i32, %arg2: memref<1x8x32xf32, #tpu.memory_space<vmem>>, %arg3: memref<32x32xbf16, #tpu.memory_space<vmem>>, %arg4: memref<32x64xbf16, #tpu.memory_space<vmem>>, %arg5: memref<8x4x32xbf16, #tpu.memory_space<vmem>>, %arg6: memref<1x32xf32, #tpu.memory_space<vmem>>, %arg7: memref<1x8x32xf32, #tpu.memory_space<vmem>>, %arg8: memref<1x8x8x8xbf16, #tpu.memory_space<vmem>>, %arg9: memref<8x64xbf16, #tpu.memory_space<vmem>>, %arg10: memref<8x32xbf16, #tpu.memory_space<vmem>>, %arg11: memref<8x32xf32, #tpu.memory_space<vmem>>) attributes {dimension_semantics = [#tpu.dimension_semantics<parallel>, #tpu.dimension_semantics<arbitrary>], iteration_bounds = array<i64: 2, 1>, scalar_prefetch = 0 : i64, scratch_operands = 3 : i64, tpu.core_type = #tpu.core_type<tc>, window_params = [{transform_indices = @transform_0, window_bounds = array<i64: 1, 8, 32>}, {pipeline_mode = #tpu.pipeline_mode<synchronous>, transform_indices = @transform_1, window_bounds = array<i64: 32, 32>}, {pipeline_mode = #tpu.pipeline_mode<synchronous>, transform_indices = @transform_2, window_bounds = array<i64: 32, 64>}, {pipeline_mode = #tpu.pipeline_mode<synchronous>, transform_indices = @transform_3, window_bounds = array<i64: 8, 4, 32>}, {pipeline_mode = #tpu.pipeline_mode<synchronous>, transform_indices = @transform_4, window_bounds = array<i64: 1, 32>}, {transform_indices = @transform_5, window_bounds = array<i64: 1, 8, 32>}, {transform_indices = @transform_6, window_bounds = array<i64: 1, 8, 8, 8>}]} {
    %c0_i32 = arith.constant 0 : i32
    %0 = arith.cmpi eq, %arg1, %c0_i32 : i32
    %1 = arith.extui %0 : i1 to i32
    %c0_i32_0 = arith.constant 0 : i32
    %2 = arith.cmpi ne, %1, %c0_i32_0 : i32
    scf.if %2 {
      %c0_171 = arith.constant 0 : index
      %c0_172 = arith.constant 0 : index
      %c0_173 = arith.constant 0 : index
      %262 = vector.load %arg2[%c0_171, %c0_172, %c0_173] : memref<1x8x32xf32, #tpu.memory_space<vmem>>, vector<1x8x32xf32>
      %263 = vector.shape_cast %262 : vector<1x8x32xf32> to vector<8x32xf32>
      %264 = arith.truncf %263 : vector<8x32xf32> to vector<8x32xbf16>
      %c0_174 = arith.constant 0 : index
      %c0_175 = arith.constant 0 : index
      %265 = vector.load %arg4[%c0_174, %c0_175] : memref<32x64xbf16, #tpu.memory_space<vmem>>, vector<32x64xbf16>
      %cst_176 = arith.constant dense<0.000000e+00> : vector<8x64xf32>
      %266 = tpu.matmul %264, %265, %cst_176 {dimension_numbers = #tpu.dot_dimension_numbers<[1], [0], [0], [1], [0, 0, 1, 1], [], []>} : vector<8x32xbf16>, vector<32x64xbf16>, vector<8x64xf32> -> vector<8x64xf32>
      %267 = arith.truncf %266 : vector<8x64xf32> to vector<8x64xbf16>
      %c0_177 = arith.constant 0 : index
      %c0_178 = arith.constant 0 : index
      %268 = vector.load %arg9[%c0_177, %c0_178] : memref<8x64xbf16, #tpu.memory_space<vmem>>, vector<8x64xbf16>
      tpu.vector_store %arg9[%c0_177, %c0_178], %267 {strides = array<i32>} : memref<8x64xbf16, #tpu.memory_space<vmem>>, vector<8x64xbf16>,
    } else {
    }
    %c8_i32 = arith.constant 8 : i32
    %3 = arith.muli %arg1, %c8_i32 : i32
    %4 = tpu.assume_multiple %3, 8 : i32
    %c0 = arith.constant 0 : index
    %5 = arith.index_cast %4 : i32 to index
    %c0_1 = arith.constant 0 : index
    %6 = vector.load %arg2[%c0, %5, %c0_1] : memref<1x8x32xf32, #tpu.memory_space<vmem>>, vector<1x8x32xf32>
    %7 = vector.shape_cast %6 : vector<1x8x32xf32> to vector<8x32xf32>
    %8 = arith.truncf %7 : vector<8x32xf32> to vector<8x32xbf16>
    %c0_2 = arith.constant 0 : index
    %c0_3 = arith.constant 0 : index
    %9 = vector.load %arg3[%c0_2, %c0_3] : memref<32x32xbf16, #tpu.memory_space<vmem>>, vector<32x32xbf16>
    %cst = arith.constant dense<0.000000e+00> : vector<8x32xf32>
    %10 = tpu.matmul %8, %9, %cst {dimension_numbers = #tpu.dot_dimension_numbers<[1], [0], [0], [1], [0, 0, 1, 1], [], []>} : vector<8x32xbf16>, vector<32x32xbf16>, vector<8x32xf32> -> vector<8x32xf32>
    %11 = arith.truncf %10 : vector<8x32xf32> to vector<8x32xbf16>
    %c0_4 = arith.constant 0 : index
    %c0_5 = arith.constant 0 : index
    %12 = vector.load %arg10[%c0_4, %c0_5] : memref<8x32xbf16, #tpu.memory_space<vmem>>, vector<8x32xbf16>
    tpu.vector_store %arg10[%c0_4, %c0_5], %11 {strides = array<i32>} : memref<8x32xbf16, #tpu.memory_space<vmem>>, vector<8x32xbf16>,
    %cst_6 = arith.constant 0.000000e+00 : f32
    %13 = vector.broadcast %cst_6 : f32 to vector<8x32xf32>
    %c0_7 = arith.constant 0 : index
    %c0_8 = arith.constant 0 : index
    %14 = vector.load %arg11[%c0_7, %c0_8] : memref<8x32xf32, #tpu.memory_space<vmem>>, vector<8x32xf32>
    tpu.vector_store %arg11[%c0_7, %c0_8], %13 {strides = array<i32>} : memref<8x32xf32, #tpu.memory_space<vmem>>, vector<8x32xf32>,
    %c0_9 = arith.constant 0 : index
    %c0_10 = arith.constant 0 : index
    %15 = vector.load %arg10[%c0_9, %c0_10] : memref<8x32xbf16, #tpu.memory_space<vmem>>, vector<8x4xbf16>
    %c0_11 = arith.constant 0 : index
    %c0_12 = arith.constant 0 : index
    %16 = vector.load %arg9[%c0_11, %c0_12] : memref<8x64xbf16, #tpu.memory_space<vmem>>, vector<8x4xbf16>
    %c0_13 = arith.constant 0 : index
    %c32 = arith.constant 32 : index
    %17 = vector.load %arg9[%c0_13, %c32] : memref<8x64xbf16, #tpu.memory_space<vmem>>, vector<8x4xbf16>
    %cst_14 = arith.constant dense<0.000000e+00> : vector<8x8xf32>
    %18 = tpu.matmul %15, %16, %cst_14 {dimension_numbers = #tpu.dot_dimension_numbers<[1], [1], [0], [0], [0, 0, 1, 0], [], []>} : vector<8x4xbf16>, vector<8x4xbf16>, vector<8x8xf32> -> vector<8x8xf32>
    %cst_15 = arith.constant dense<0xFF800000> : vector<8xf32>
    %19 = vector.multi_reduction <maximumf>, %18, %cst_15 [1] : vector<8x8xf32> to vector<8xf32>
    %20 = vector.shape_cast %19 : vector<8xf32> to vector<8x1xf32>
    %21 = vector.broadcast %20 : vector<8x1xf32> to vector<8x8xf32>
    %22 = arith.subf %18, %21 : vector<8x8xf32>
    %23 = math.exp %22 : vector<8x8xf32>
    %cst_16 = arith.constant dense<0.000000e+00> : vector<8xf32>
    %24 = vector.multi_reduction <add>, %23, %cst_16 [1] : vector<8x8xf32> to vector<8xf32>
    %25 = vector.shape_cast %24 : vector<8xf32> to vector<8x1xf32>
    %26 = tpu.reciprocal %25 : vector<8x1xf32> -> vector<8x1xf32>
    %27 = vector.broadcast %26 : vector<8x1xf32> to vector<8x8xf32>
    %28 = arith.mulf %23, %27 : vector<8x8xf32>
    %29 = arith.truncf %28 : vector<8x8xf32> to vector<8x8xbf16>
    %c0_17 = arith.constant 0 : index
    %c0_18 = arith.constant 0 : index
    %c0_19 = arith.constant 0 : index
    %c0_20 = arith.constant 0 : index
    %30 = vector.load %arg8[%c0_17, %c0_18, %c0_19, %c0_20] : memref<1x8x8x8xbf16, #tpu.memory_space<vmem>>, vector<1x1x8x8xbf16>
    %31 = vector.shape_cast %30 : vector<1x1x8x8xbf16> to vector<8x8xbf16>
    %32 = vector.shape_cast %29 : vector<8x8xbf16> to vector<1x1x8x8xbf16>
    tpu.vector_store %arg8[%c0_17, %c0_18, %c0_19, %c0_20], %32 {strides = array<i32>} : memref<1x8x8x8xbf16, #tpu.memory_space<vmem>>, vector<1x1x8x8xbf16>,
    %33 = tpu.reciprocal %25 {approx = true} : vector<8x1xf32> -> vector<8x1xf32>
    %34 = vector.broadcast %33 : vector<8x1xf32> to vector<8x8xf32>
    %35 = arith.mulf %23, %34 : vector<8x8xf32>
    %36 = arith.truncf %35 : vector<8x8xf32> to vector<8x8xbf16>
    %cst_21 = arith.constant dense<0.000000e+00> : vector<8x4xf32>
    %37 = tpu.matmul %36, %17, %cst_21 {dimension_numbers = #tpu.dot_dimension_numbers<[1], [0], [0], [1], [0, 0, 1, 1], [], []>} : vector<8x8xbf16>, vector<8x4xbf16>, vector<8x4xf32> -> vector<8x4xf32>
    %c0_22 = arith.constant 0 : index
    %c0_23 = arith.constant 0 : index
    %38 = vector.load %arg11[%c0_22, %c0_23] : memref<8x32xf32, #tpu.memory_space<vmem>>, vector<8x32xf32>
    %39 = arith.truncf %37 : vector<8x4xf32> to vector<8x4xbf16>
    %c0_24 = arith.constant 0 : index
    %c0_25 = arith.constant 0 : index
    %c0_26 = arith.constant 0 : index
    %40 = vector.load %arg5[%c0_24, %c0_25, %c0_26] : memref<8x4x32xbf16, #tpu.memory_space<vmem>>, vector<1x4x32xbf16>
    %41 = vector.shape_cast %40 : vector<1x4x32xbf16> to vector<4x32xbf16>
    %cst_27 = arith.constant dense<0.000000e+00> : vector<8x32xf32>
    %42 = tpu.matmul %39, %41, %cst_27 {dimension_numbers = #tpu.dot_dimension_numbers<[1], [0], [0], [1], [0, 0, 1, 1], [], []>} : vector<8x4xbf16>, vector<4x32xbf16>, vector<8x32xf32> -> vector<8x32xf32>
    %43 = arith.addf %38, %42 : vector<8x32xf32>
    %c0_28 = arith.constant 0 : index
    %c0_29 = arith.constant 0 : index
    %44 = vector.load %arg11[%c0_28, %c0_29] : memref<8x32xf32, #tpu.memory_space<vmem>>, vector<8x32xf32>
    tpu.vector_store %arg11[%c0_28, %c0_29], %43 {strides = array<i32>} : memref<8x32xf32, #tpu.memory_space<vmem>>, vector<8x32xf32>,
    %c0_30 = arith.constant 0 : index
    %c4 = arith.constant 4 : index
    %45 = vector.load %arg10[%c0_30, %c4] : memref<8x32xbf16, #tpu.memory_space<vmem>>, vector<8x4xbf16>
    %c0_31 = arith.constant 0 : index
    %c4_32 = arith.constant 4 : index
    %46 = vector.load %arg9[%c0_31, %c4_32] : memref<8x64xbf16, #tpu.memory_space<vmem>>, vector<8x4xbf16>
    %c0_33 = arith.constant 0 : index
    %c36 = arith.constant 36 : index
    %47 = vector.load %arg9[%c0_33, %c36] : memref<8x64xbf16, #tpu.memory_space<vmem>>, vector<8x4xbf16>
    %cst_34 = arith.constant dense<0.000000e+00> : vector<8x8xf32>
    %48 = tpu.matmul %45, %46, %cst_34 {dimension_numbers = #tpu.dot_dimension_numbers<[1], [1], [0], [0], [0, 0, 1, 0], [], []>} : vector<8x4xbf16>, vector<8x4xbf16>, vector<8x8xf32> -> vector<8x8xf32>
    %cst_35 = arith.constant dense<0xFF800000> : vector<8xf32>
    %49 = vector.multi_reduction <maximumf>, %48, %cst_35 [1] : vector<8x8xf32> to vector<8xf32>
    %50 = vector.shape_cast %49 : vector<8xf32> to vector<8x1xf32>
    %51 = vector.broadcast %50 : vector<8x1xf32> to vector<8x8xf32>
    %52 = arith.subf %48, %51 : vector<8x8xf32>
    %53 = math.exp %52 : vector<8x8xf32>
    %cst_36 = arith.constant dense<0.000000e+00> : vector<8xf32>
    %54 = vector.multi_reduction <add>, %53, %cst_36 [1] : vector<8x8xf32> to vector<8xf32>
    %55 = vector.shape_cast %54 : vector<8xf32> to vector<8x1xf32>
    %56 = tpu.reciprocal %55 : vector<8x1xf32> -> vector<8x1xf32>
    %57 = vector.broadcast %56 : vector<8x1xf32> to vector<8x8xf32>
    %58 = arith.mulf %53, %57 : vector<8x8xf32>
    %59 = arith.truncf %58 : vector<8x8xf32> to vector<8x8xbf16>
    %c0_37 = arith.constant 0 : index
    %c1 = arith.constant 1 : index
    %c0_38 = arith.constant 0 : index
    %c0_39 = arith.constant 0 : index
    %60 = vector.load %arg8[%c0_37, %c1, %c0_38, %c0_39] : memref<1x8x8x8xbf16, #tpu.memory_space<vmem>>, vector<1x1x8x8xbf16>
    %61 = vector.shape_cast %60 : vector<1x1x8x8xbf16> to vector<8x8xbf16>
    %62 = vector.shape_cast %59 : vector<8x8xbf16> to vector<1x1x8x8xbf16>
    tpu.vector_store %arg8[%c0_37, %c1, %c0_38, %c0_39], %62 {strides = array<i32>} : memref<1x8x8x8xbf16, #tpu.memory_space<vmem>>, vector<1x1x8x8xbf16>,
    %63 = tpu.reciprocal %55 {approx = true} : vector<8x1xf32> -> vector<8x1xf32>
    %64 = vector.broadcast %63 : vector<8x1xf32> to vector<8x8xf32>
    %65 = arith.mulf %53, %64 : vector<8x8xf32>
    %66 = arith.truncf %65 : vector<8x8xf32> to vector<8x8xbf16>
    %cst_40 = arith.constant dense<0.000000e+00> : vector<8x4xf32>
    %67 = tpu.matmul %66, %47, %cst_40 {dimension_numbers = #tpu.dot_dimension_numbers<[1], [0], [0], [1], [0, 0, 1, 1], [], []>} : vector<8x8xbf16>, vector<8x4xbf16>, vector<8x4xf32> -> vector<8x4xf32>
    %c0_41 = arith.constant 0 : index
    %c0_42 = arith.constant 0 : index
    %68 = vector.load %arg11[%c0_41, %c0_42] : memref<8x32xf32, #tpu.memory_space<vmem>>, vector<8x32xf32>
    %69 = arith.truncf %67 : vector<8x4xf32> to vector<8x4xbf16>
    %c1_43 = arith.constant 1 : index
    %c0_44 = arith.constant 0 : index
    %c0_45 = arith.constant 0 : index
    %70 = vector.load %arg5[%c1_43, %c0_44, %c0_45] : memref<8x4x32xbf16, #tpu.memory_space<vmem>>, vector<1x4x32xbf16>
    %71 = vector.shape_cast %70 : vector<1x4x32xbf16> to vector<4x32xbf16>
    %cst_46 = arith.constant dense<0.000000e+00> : vector<8x32xf32>
    %72 = tpu.matmul %69, %71, %cst_46 {dimension_numbers = #tpu.dot_dimension_numbers<[1], [0], [0], [1], [0, 0, 1, 1], [], []>} : vector<8x4xbf16>, vector<4x32xbf16>, vector<8x32xf32> -> vector<8x32xf32>
    %73 = arith.addf %68, %72 : vector<8x32xf32>
    %c0_47 = arith.constant 0 : index
    %c0_48 = arith.constant 0 : index
    %74 = vector.load %arg11[%c0_47, %c0_48] : memref<8x32xf32, #tpu.memory_space<vmem>>, vector<8x32xf32>
    tpu.vector_store %arg11[%c0_47, %c0_48], %73 {strides = array<i32>} : memref<8x32xf32, #tpu.memory_space<vmem>>, vector<8x32xf32>,
    %c0_49 = arith.constant 0 : index
    %c8 = arith.constant 8 : index
    %75 = vector.load %arg10[%c0_49, %c8] : memref<8x32xbf16, #tpu.memory_space<vmem>>, vector<8x4xbf16>
    %c0_50 = arith.constant 0 : index
    %c8_51 = arith.constant 8 : index
    %76 = vector.load %arg9[%c0_50, %c8_51] : memref<8x64xbf16, #tpu.memory_space<vmem>>, vector<8x4xbf16>
    %c0_52 = arith.constant 0 : index
    %c40 = arith.constant 40 : index
    %77 = vector.load %arg9[%c0_52, %c40] : memref<8x64xbf16, #tpu.memory_space<vmem>>, vector<8x4xbf16>
    %cst_53 = arith.constant dense<0.000000e+00> : vector<8x8xf32>
    %78 = tpu.matmul %75, %76, %cst_53 {dimension_numbers = #tpu.dot_dimension_numbers<[1], [1], [0], [0], [0, 0, 1, 0], [], []>} : vector<8x4xbf16>, vector<8x4xbf16>, vector<8x8xf32> -> vector<8x8xf32>
    %cst_54 = arith.constant dense<0xFF800000> : vector<8xf32>
    %79 = vector.multi_reduction <maximumf>, %78, %cst_54 [1] : vector<8x8xf32> to vector<8xf32>
    %80 = vector.shape_cast %79 : vector<8xf32> to vector<8x1xf32>
    %81 = vector.broadcast %80 : vector<8x1xf32> to vector<8x8xf32>
    %82 = arith.subf %78, %81 : vector<8x8xf32>
    %83 = math.exp %82 : vector<8x8xf32>
    %cst_55 = arith.constant dense<0.000000e+00> : vector<8xf32>
    %84 = vector.multi_reduction <add>, %83, %cst_55 [1] : vector<8x8xf32> to vector<8xf32>
    %85 = vector.shape_cast %84 : vector<8xf32> to vector<8x1xf32>
    %86 = tpu.reciprocal %85 : vector<8x1xf32> -> vector<8x1xf32>
    %87 = vector.broadcast %86 : vector<8x1xf32> to vector<8x8xf32>
    %88 = arith.mulf %83, %87 : vector<8x8xf32>
    %89 = arith.truncf %88 : vector<8x8xf32> to vector<8x8xbf16>
    %c0_56 = arith.constant 0 : index
    %c2 = arith.constant 2 : index
    %c0_57 = arith.constant 0 : index
    %c0_58 = arith.constant 0 : index
    %90 = vector.load %arg8[%c0_56, %c2, %c0_57, %c0_58] : memref<1x8x8x8xbf16, #tpu.memory_space<vmem>>, vector<1x1x8x8xbf16>
    %91 = vector.shape_cast %90 : vector<1x1x8x8xbf16> to vector<8x8xbf16>
    %92 = vector.shape_cast %89 : vector<8x8xbf16> to vector<1x1x8x8xbf16>
    tpu.vector_store %arg8[%c0_56, %c2, %c0_57, %c0_58], %92 {strides = array<i32>} : memref<1x8x8x8xbf16, #tpu.memory_space<vmem>>, vector<1x1x8x8xbf16>,
    %93 = tpu.reciprocal %85 {approx = true} : vector<8x1xf32> -> vector<8x1xf32>
    %94 = vector.broadcast %93 : vector<8x1xf32> to vector<8x8xf32>
    %95 = arith.mulf %83, %94 : vector<8x8xf32>
    %96 = arith.truncf %95 : vector<8x8xf32> to vector<8x8xbf16>
    %cst_59 = arith.constant dense<0.000000e+00> : vector<8x4xf32>
    %97 = tpu.matmul %96, %77, %cst_59 {dimension_numbers = #tpu.dot_dimension_numbers<[1], [0], [0], [1], [0, 0, 1, 1], [], []>} : vector<8x8xbf16>, vector<8x4xbf16>, vector<8x4xf32> -> vector<8x4xf32>
    %c0_60 = arith.constant 0 : index
    %c0_61 = arith.constant 0 : index
    %98 = vector.load %arg11[%c0_60, %c0_61] : memref<8x32xf32, #tpu.memory_space<vmem>>, vector<8x32xf32>
    %99 = arith.truncf %97 : vector<8x4xf32> to vector<8x4xbf16>
    %c2_62 = arith.constant 2 : index
    %c0_63 = arith.constant 0 : index
    %c0_64 = arith.constant 0 : index
    %100 = vector.load %arg5[%c2_62, %c0_63, %c0_64] : memref<8x4x32xbf16, #tpu.memory_space<vmem>>, vector<1x4x32xbf16>
    %101 = vector.shape_cast %100 : vector<1x4x32xbf16> to vector<4x32xbf16>
    %cst_65 = arith.constant dense<0.000000e+00> : vector<8x32xf32>
    %102 = tpu.matmul %99, %101, %cst_65 {dimension_numbers = #tpu.dot_dimension_numbers<[1], [0], [0], [1], [0, 0, 1, 1], [], []>} : vector<8x4xbf16>, vector<4x32xbf16>, vector<8x32xf32> -> vector<8x32xf32>
    %103 = arith.addf %98, %102 : vector<8x32xf32>
    %c0_66 = arith.constant 0 : index
    %c0_67 = arith.constant 0 : index
    %104 = vector.load %arg11[%c0_66, %c0_67] : memref<8x32xf32, #tpu.memory_space<vmem>>, vector<8x32xf32>
    tpu.vector_store %arg11[%c0_66, %c0_67], %103 {strides = array<i32>} : memref<8x32xf32, #tpu.memory_space<vmem>>, vector<8x32xf32>,
    %c0_68 = arith.constant 0 : index
    %c12 = arith.constant 12 : index
    %105 = vector.load %arg10[%c0_68, %c12] : memref<8x32xbf16, #tpu.memory_space<vmem>>, vector<8x4xbf16>
    %c0_69 = arith.constant 0 : index
    %c12_70 = arith.constant 12 : index
    %106 = vector.load %arg9[%c0_69, %c12_70] : memref<8x64xbf16, #tpu.memory_space<vmem>>, vector<8x4xbf16>
    %c0_71 = arith.constant 0 : index
    %c44 = arith.constant 44 : index
    %107 = vector.load %arg9[%c0_71, %c44] : memref<8x64xbf16, #tpu.memory_space<vmem>>, vector<8x4xbf16>
    %cst_72 = arith.constant dense<0.000000e+00> : vector<8x8xf32>
    %108 = tpu.matmul %105, %106, %cst_72 {dimension_numbers = #tpu.dot_dimension_numbers<[1], [1], [0], [0], [0, 0, 1, 0], [], []>} : vector<8x4xbf16>, vector<8x4xbf16>, vector<8x8xf32> -> vector<8x8xf32>
    %cst_73 = arith.constant dense<0xFF800000> : vector<8xf32>
    %109 = vector.multi_reduction <maximumf>, %108, %cst_73 [1] : vector<8x8xf32> to vector<8xf32>
    %110 = vector.shape_cast %109 : vector<8xf32> to vector<8x1xf32>
    %111 = vector.broadcast %110 : vector<8x1xf32> to vector<8x8xf32>
    %112 = arith.subf %108, %111 : vector<8x8xf32>
    %113 = math.exp %112 : vector<8x8xf32>
    %cst_74 = arith.constant dense<0.000000e+00> : vector<8xf32>
    %114 = vector.multi_reduction <add>, %113, %cst_74 [1] : vector<8x8xf32> to vector<8xf32>
    %115 = vector.shape_cast %114 : vector<8xf32> to vector<8x1xf32>
    %116 = tpu.reciprocal %115 : vector<8x1xf32> -> vector<8x1xf32>
    %117 = vector.broadcast %116 : vector<8x1xf32> to vector<8x8xf32>
    %118 = arith.mulf %113, %117 : vector<8x8xf32>
    %119 = arith.truncf %118 : vector<8x8xf32> to vector<8x8xbf16>
    %c0_75 = arith.constant 0 : index
    %c3 = arith.constant 3 : index
    %c0_76 = arith.constant 0 : index
    %c0_77 = arith.constant 0 : index
    %120 = vector.load %arg8[%c0_75, %c3, %c0_76, %c0_77] : memref<1x8x8x8xbf16, #tpu.memory_space<vmem>>, vector<1x1x8x8xbf16>
    %121 = vector.shape_cast %120 : vector<1x1x8x8xbf16> to vector<8x8xbf16>
    %122 = vector.shape_cast %119 : vector<8x8xbf16> to vector<1x1x8x8xbf16>
    tpu.vector_store %arg8[%c0_75, %c3, %c0_76, %c0_77], %122 {strides = array<i32>} : memref<1x8x8x8xbf16, #tpu.memory_space<vmem>>, vector<1x1x8x8xbf16>,
    %123 = tpu.reciprocal %115 {approx = true} : vector<8x1xf32> -> vector<8x1xf32>
    %124 = vector.broadcast %123 : vector<8x1xf32> to vector<8x8xf32>
    %125 = arith.mulf %113, %124 : vector<8x8xf32>
    %126 = arith.truncf %125 : vector<8x8xf32> to vector<8x8xbf16>
    %cst_78 = arith.constant dense<0.000000e+00> : vector<8x4xf32>
    %127 = tpu.matmul %126, %107, %cst_78 {dimension_numbers = #tpu.dot_dimension_numbers<[1], [0], [0], [1], [0, 0, 1, 1], [], []>} : vector<8x8xbf16>, vector<8x4xbf16>, vector<8x4xf32> -> vector<8x4xf32>
    %c0_79 = arith.constant 0 : index
    %c0_80 = arith.constant 0 : index
    %128 = vector.load %arg11[%c0_79, %c0_80] : memref<8x32xf32, #tpu.memory_space<vmem>>, vector<8x32xf32>
    %129 = arith.truncf %127 : vector<8x4xf32> to vector<8x4xbf16>
    %c3_81 = arith.constant 3 : index
    %c0_82 = arith.constant 0 : index
    %c0_83 = arith.constant 0 : index
    %130 = vector.load %arg5[%c3_81, %c0_82, %c0_83] : memref<8x4x32xbf16, #tpu.memory_space<vmem>>, vector<1x4x32xbf16>
    %131 = vector.shape_cast %130 : vector<1x4x32xbf16> to vector<4x32xbf16>
    %cst_84 = arith.constant dense<0.000000e+00> : vector<8x32xf32>
    %132 = tpu.matmul %129, %131, %cst_84 {dimension_numbers = #tpu.dot_dimension_numbers<[1], [0], [0], [1], [0, 0, 1, 1], [], []>} : vector<8x4xbf16>, vector<4x32xbf16>, vector<8x32xf32> -> vector<8x32xf32>
    %133 = arith.addf %128, %132 : vector<8x32xf32>
    %c0_85 = arith.constant 0 : index
    %c0_86 = arith.constant 0 : index
    %134 = vector.load %arg11[%c0_85, %c0_86] : memref<8x32xf32, #tpu.memory_space<vmem>>, vector<8x32xf32>
    tpu.vector_store %arg11[%c0_85, %c0_86], %133 {strides = array<i32>} : memref<8x32xf32, #tpu.memory_space<vmem>>, vector<8x32xf32>,
    %c0_87 = arith.constant 0 : index
    %c16 = arith.constant 16 : index
    %135 = vector.load %arg10[%c0_87, %c16] : memref<8x32xbf16, #tpu.memory_space<vmem>>, vector<8x4xbf16>
    %c0_88 = arith.constant 0 : index
    %c16_89 = arith.constant 16 : index
    %136 = vector.load %arg9[%c0_88, %c16_89] : memref<8x64xbf16, #tpu.memory_space<vmem>>, vector<8x4xbf16>
    %c0_90 = arith.constant 0 : index
    %c48 = arith.constant 48 : index
    %137 = vector.load %arg9[%c0_90, %c48] : memref<8x64xbf16, #tpu.memory_space<vmem>>, vector<8x4xbf16>
    %cst_91 = arith.constant dense<0.000000e+00> : vector<8x8xf32>
    %138 = tpu.matmul %135, %136, %cst_91 {dimension_numbers = #tpu.dot_dimension_numbers<[1], [1], [0], [0], [0, 0, 1, 0], [], []>} : vector<8x4xbf16>, vector<8x4xbf16>, vector<8x8xf32> -> vector<8x8xf32>
    %cst_92 = arith.constant dense<0xFF800000> : vector<8xf32>
    %139 = vector.multi_reduction <maximumf>, %138, %cst_92 [1] : vector<8x8xf32> to vector<8xf32>
    %140 = vector.shape_cast %139 : vector<8xf32> to vector<8x1xf32>
    %141 = vector.broadcast %140 : vector<8x1xf32> to vector<8x8xf32>
    %142 = arith.subf %138, %141 : vector<8x8xf32>
    %143 = math.exp %142 : vector<8x8xf32>
    %cst_93 = arith.constant dense<0.000000e+00> : vector<8xf32>
    %144 = vector.multi_reduction <add>, %143, %cst_93 [1] : vector<8x8xf32> to vector<8xf32>
    %145 = vector.shape_cast %144 : vector<8xf32> to vector<8x1xf32>
    %146 = tpu.reciprocal %145 : vector<8x1xf32> -> vector<8x1xf32>
    %147 = vector.broadcast %146 : vector<8x1xf32> to vector<8x8xf32>
    %148 = arith.mulf %143, %147 : vector<8x8xf32>
    %149 = arith.truncf %148 : vector<8x8xf32> to vector<8x8xbf16>
    %c0_94 = arith.constant 0 : index
    %c4_95 = arith.constant 4 : index
    %c0_96 = arith.constant 0 : index
    %c0_97 = arith.constant 0 : index
    %150 = vector.load %arg8[%c0_94, %c4_95, %c0_96, %c0_97] : memref<1x8x8x8xbf16, #tpu.memory_space<vmem>>, vector<1x1x8x8xbf16>
    %151 = vector.shape_cast %150 : vector<1x1x8x8xbf16> to vector<8x8xbf16>
    %152 = vector.shape_cast %149 : vector<8x8xbf16> to vector<1x1x8x8xbf16>
    tpu.vector_store %arg8[%c0_94, %c4_95, %c0_96, %c0_97], %152 {strides = array<i32>} : memref<1x8x8x8xbf16, #tpu.memory_space<vmem>>, vector<1x1x8x8xbf16>,
    %153 = tpu.reciprocal %145 {approx = true} : vector<8x1xf32> -> vector<8x1xf32>
    %154 = vector.broadcast %153 : vector<8x1xf32> to vector<8x8xf32>
    %155 = arith.mulf %143, %154 : vector<8x8xf32>
    %156 = arith.truncf %155 : vector<8x8xf32> to vector<8x8xbf16>
    %cst_98 = arith.constant dense<0.000000e+00> : vector<8x4xf32>
    %157 = tpu.matmul %156, %137, %cst_98 {dimension_numbers = #tpu.dot_dimension_numbers<[1], [0], [0], [1], [0, 0, 1, 1], [], []>} : vector<8x8xbf16>, vector<8x4xbf16>, vector<8x4xf32> -> vector<8x4xf32>
    %c0_99 = arith.constant 0 : index
    %c0_100 = arith.constant 0 : index
    %158 = vector.load %arg11[%c0_99, %c0_100] : memref<8x32xf32, #tpu.memory_space<vmem>>, vector<8x32xf32>
    %159 = arith.truncf %157 : vector<8x4xf32> to vector<8x4xbf16>
    %c4_101 = arith.constant 4 : index
    %c0_102 = arith.constant 0 : index
    %c0_103 = arith.constant 0 : index
    %160 = vector.load %arg5[%c4_101, %c0_102, %c0_103] : memref<8x4x32xbf16, #tpu.memory_space<vmem>>, vector<1x4x32xbf16>
    %161 = vector.shape_cast %160 : vector<1x4x32xbf16> to vector<4x32xbf16>
    %cst_104 = arith.constant dense<0.000000e+00> : vector<8x32xf32>
    %162 = tpu.matmul %159, %161, %cst_104 {dimension_numbers = #tpu.dot_dimension_numbers<[1], [0], [0], [1], [0, 0, 1, 1], [], []>} : vector<8x4xbf16>, vector<4x32xbf16>, vector<8x32xf32> -> vector<8x32xf32>
    %163 = arith.addf %158, %162 : vector<8x32xf32>
    %c0_105 = arith.constant 0 : index
    %c0_106 = arith.constant 0 : index
    %164 = vector.load %arg11[%c0_105, %c0_106] : memref<8x32xf32, #tpu.memory_space<vmem>>, vector<8x32xf32>
    tpu.vector_store %arg11[%c0_105, %c0_106], %163 {strides = array<i32>} : memref<8x32xf32, #tpu.memory_space<vmem>>, vector<8x32xf32>,
    %c0_107 = arith.constant 0 : index
    %c20 = arith.constant 20 : index
    %165 = vector.load %arg10[%c0_107, %c20] : memref<8x32xbf16, #tpu.memory_space<vmem>>, vector<8x4xbf16>
    %c0_108 = arith.constant 0 : index
    %c20_109 = arith.constant 20 : index
    %166 = vector.load %arg9[%c0_108, %c20_109] : memref<8x64xbf16, #tpu.memory_space<vmem>>, vector<8x4xbf16>
    %c0_110 = arith.constant 0 : index
    %c52 = arith.constant 52 : index
    %167 = vector.load %arg9[%c0_110, %c52] : memref<8x64xbf16, #tpu.memory_space<vmem>>, vector<8x4xbf16>
    %cst_111 = arith.constant dense<0.000000e+00> : vector<8x8xf32>
    %168 = tpu.matmul %165, %166, %cst_111 {dimension_numbers = #tpu.dot_dimension_numbers<[1], [1], [0], [0], [0, 0, 1, 0], [], []>} : vector<8x4xbf16>, vector<8x4xbf16>, vector<8x8xf32> -> vector<8x8xf32>
    %cst_112 = arith.constant dense<0xFF800000> : vector<8xf32>
    %169 = vector.multi_reduction <maximumf>, %168, %cst_112 [1] : vector<8x8xf32> to vector<8xf32>
    %170 = vector.shape_cast %169 : vector<8xf32> to vector<8x1xf32>
    %171 = vector.broadcast %170 : vector<8x1xf32> to vector<8x8xf32>
    %172 = arith.subf %168, %171 : vector<8x8xf32>
    %173 = math.exp %172 : vector<8x8xf32>
    %cst_113 = arith.constant dense<0.000000e+00> : vector<8xf32>
    %174 = vector.multi_reduction <add>, %173, %cst_113 [1] : vector<8x8xf32> to vector<8xf32>
    %175 = vector.shape_cast %174 : vector<8xf32> to vector<8x1xf32>
    %176 = tpu.reciprocal %175 : vector<8x1xf32> -> vector<8x1xf32>
    %177 = vector.broadcast %176 : vector<8x1xf32> to vector<8x8xf32>
    %178 = arith.mulf %173, %177 : vector<8x8xf32>
    %179 = arith.truncf %178 : vector<8x8xf32> to vector<8x8xbf16>
    %c0_114 = arith.constant 0 : index
    %c5 = arith.constant 5 : index
    %c0_115 = arith.constant 0 : index
    %c0_116 = arith.constant 0 : index
    %180 = vector.load %arg8[%c0_114, %c5, %c0_115, %c0_116] : memref<1x8x8x8xbf16, #tpu.memory_space<vmem>>, vector<1x1x8x8xbf16>
    %181 = vector.shape_cast %180 : vector<1x1x8x8xbf16> to vector<8x8xbf16>
    %182 = vector.shape_cast %179 : vector<8x8xbf16> to vector<1x1x8x8xbf16>
    tpu.vector_store %arg8[%c0_114, %c5, %c0_115, %c0_116], %182 {strides = array<i32>} : memref<1x8x8x8xbf16, #tpu.memory_space<vmem>>, vector<1x1x8x8xbf16>,
    %183 = tpu.reciprocal %175 {approx = true} : vector<8x1xf32> -> vector<8x1xf32>
    %184 = vector.broadcast %183 : vector<8x1xf32> to vector<8x8xf32>
    %185 = arith.mulf %173, %184 : vector<8x8xf32>
    %186 = arith.truncf %185 : vector<8x8xf32> to vector<8x8xbf16>
    %cst_117 = arith.constant dense<0.000000e+00> : vector<8x4xf32>
    %187 = tpu.matmul %186, %167, %cst_117 {dimension_numbers = #tpu.dot_dimension_numbers<[1], [0], [0], [1], [0, 0, 1, 1], [], []>} : vector<8x8xbf16>, vector<8x4xbf16>, vector<8x4xf32> -> vector<8x4xf32>
    %c0_118 = arith.constant 0 : index
    %c0_119 = arith.constant 0 : index
    %188 = vector.load %arg11[%c0_118, %c0_119] : memref<8x32xf32, #tpu.memory_space<vmem>>, vector<8x32xf32>
    %189 = arith.truncf %187 : vector<8x4xf32> to vector<8x4xbf16>
    %c5_120 = arith.constant 5 : index
    %c0_121 = arith.constant 0 : index
    %c0_122 = arith.constant 0 : index
    %190 = vector.load %arg5[%c5_120, %c0_121, %c0_122] : memref<8x4x32xbf16, #tpu.memory_space<vmem>>, vector<1x4x32xbf16>
    %191 = vector.shape_cast %190 : vector<1x4x32xbf16> to vector<4x32xbf16>
    %cst_123 = arith.constant dense<0.000000e+00> : vector<8x32xf32>
    %192 = tpu.matmul %189, %191, %cst_123 {dimension_numbers = #tpu.dot_dimension_numbers<[1], [0], [0], [1], [0, 0, 1, 1], [], []>} : vector<8x4xbf16>, vector<4x32xbf16>, vector<8x32xf32> -> vector<8x32xf32>
    %193 = arith.addf %188, %192 : vector<8x32xf32>
    %c0_124 = arith.constant 0 : index
    %c0_125 = arith.constant 0 : index
    %194 = vector.load %arg11[%c0_124, %c0_125] : memref<8x32xf32, #tpu.memory_space<vmem>>, vector<8x32xf32>
    tpu.vector_store %arg11[%c0_124, %c0_125], %193 {strides = array<i32>} : memref<8x32xf32, #tpu.memory_space<vmem>>, vector<8x32xf32>,
    %c0_126 = arith.constant 0 : index
    %c24 = arith.constant 24 : index
    %195 = vector.load %arg10[%c0_126, %c24] : memref<8x32xbf16, #tpu.memory_space<vmem>>, vector<8x4xbf16>
    %c0_127 = arith.constant 0 : index
    %c24_128 = arith.constant 24 : index
    %196 = vector.load %arg9[%c0_127, %c24_128] : memref<8x64xbf16, #tpu.memory_space<vmem>>, vector<8x4xbf16>
    %c0_129 = arith.constant 0 : index
    %c56 = arith.constant 56 : index
    %197 = vector.load %arg9[%c0_129, %c56] : memref<8x64xbf16, #tpu.memory_space<vmem>>, vector<8x4xbf16>
    %cst_130 = arith.constant dense<0.000000e+00> : vector<8x8xf32>
    %198 = tpu.matmul %195, %196, %cst_130 {dimension_numbers = #tpu.dot_dimension_numbers<[1], [1], [0], [0], [0, 0, 1, 0], [], []>} : vector<8x4xbf16>, vector<8x4xbf16>, vector<8x8xf32> -> vector<8x8xf32>
    %cst_131 = arith.constant dense<0xFF800000> : vector<8xf32>
    %199 = vector.multi_reduction <maximumf>, %198, %cst_131 [1] : vector<8x8xf32> to vector<8xf32>
    %200 = vector.shape_cast %199 : vector<8xf32> to vector<8x1xf32>
    %201 = vector.broadcast %200 : vector<8x1xf32> to vector<8x8xf32>
    %202 = arith.subf %198, %201 : vector<8x8xf32>
    %203 = math.exp %202 : vector<8x8xf32>
    %cst_132 = arith.constant dense<0.000000e+00> : vector<8xf32>
    %204 = vector.multi_reduction <add>, %203, %cst_132 [1] : vector<8x8xf32> to vector<8xf32>
    %205 = vector.shape_cast %204 : vector<8xf32> to vector<8x1xf32>
    %206 = tpu.reciprocal %205 : vector<8x1xf32> -> vector<8x1xf32>
    %207 = vector.broadcast %206 : vector<8x1xf32> to vector<8x8xf32>
    %208 = arith.mulf %203, %207 : vector<8x8xf32>
    %209 = arith.truncf %208 : vector<8x8xf32> to vector<8x8xbf16>
    %c0_133 = arith.constant 0 : index
    %c6 = arith.constant 6 : index
    %c0_134 = arith.constant 0 : index
    %c0_135 = arith.constant 0 : index
    %210 = vector.load %arg8[%c0_133, %c6, %c0_134, %c0_135] : memref<1x8x8x8xbf16, #tpu.memory_space<vmem>>, vector<1x1x8x8xbf16>
    %211 = vector.shape_cast %210 : vector<1x1x8x8xbf16> to vector<8x8xbf16>
    %212 = vector.shape_cast %209 : vector<8x8xbf16> to vector<1x1x8x8xbf16>
    tpu.vector_store %arg8[%c0_133, %c6, %c0_134, %c0_135], %212 {strides = array<i32>} : memref<1x8x8x8xbf16, #tpu.memory_space<vmem>>, vector<1x1x8x8xbf16>,
    %213 = tpu.reciprocal %205 {approx = true} : vector<8x1xf32> -> vector<8x1xf32>
    %214 = vector.broadcast %213 : vector<8x1xf32> to vector<8x8xf32>
    %215 = arith.mulf %203, %214 : vector<8x8xf32>
    %216 = arith.truncf %215 : vector<8x8xf32> to vector<8x8xbf16>
    %cst_136 = arith.constant dense<0.000000e+00> : vector<8x4xf32>
    %217 = tpu.matmul %216, %197, %cst_136 {dimension_numbers = #tpu.dot_dimension_numbers<[1], [0], [0], [1], [0, 0, 1, 1], [], []>} : vector<8x8xbf16>, vector<8x4xbf16>, vector<8x4xf32> -> vector<8x4xf32>
    %c0_137 = arith.constant 0 : index
    %c0_138 = arith.constant 0 : index
    %218 = vector.load %arg11[%c0_137, %c0_138] : memref<8x32xf32, #tpu.memory_space<vmem>>, vector<8x32xf32>
    %219 = arith.truncf %217 : vector<8x4xf32> to vector<8x4xbf16>
    %c6_139 = arith.constant 6 : index
    %c0_140 = arith.constant 0 : index
    %c0_141 = arith.constant 0 : index
    %220 = vector.load %arg5[%c6_139, %c0_140, %c0_141] : memref<8x4x32xbf16, #tpu.memory_space<vmem>>, vector<1x4x32xbf16>
    %221 = vector.shape_cast %220 : vector<1x4x32xbf16> to vector<4x32xbf16>
    %cst_142 = arith.constant dense<0.000000e+00> : vector<8x32xf32>
    %222 = tpu.matmul %219, %221, %cst_142 {dimension_numbers = #tpu.dot_dimension_numbers<[1], [0], [0], [1], [0, 0, 1, 1], [], []>} : vector<8x4xbf16>, vector<4x32xbf16>, vector<8x32xf32> -> vector<8x32xf32>
    %223 = arith.addf %218, %222 : vector<8x32xf32>
    %c0_143 = arith.constant 0 : index
    %c0_144 = arith.constant 0 : index
    %224 = vector.load %arg11[%c0_143, %c0_144] : memref<8x32xf32, #tpu.memory_space<vmem>>, vector<8x32xf32>
    tpu.vector_store %arg11[%c0_143, %c0_144], %223 {strides = array<i32>} : memref<8x32xf32, #tpu.memory_space<vmem>>, vector<8x32xf32>,
    %c0_145 = arith.constant 0 : index
    %c28 = arith.constant 28 : index
    %225 = vector.load %arg10[%c0_145, %c28] : memref<8x32xbf16, #tpu.memory_space<vmem>>, vector<8x4xbf16>
    %c0_146 = arith.constant 0 : index
    %c28_147 = arith.constant 28 : index
    %226 = vector.load %arg9[%c0_146, %c28_147] : memref<8x64xbf16, #tpu.memory_space<vmem>>, vector<8x4xbf16>
    %c0_148 = arith.constant 0 : index
    %c60 = arith.constant 60 : index
    %227 = vector.load %arg9[%c0_148, %c60] : memref<8x64xbf16, #tpu.memory_space<vmem>>, vector<8x4xbf16>
    %cst_149 = arith.constant dense<0.000000e+00> : vector<8x8xf32>
    %228 = tpu.matmul %225, %226, %cst_149 {dimension_numbers = #tpu.dot_dimension_numbers<[1], [1], [0], [0], [0, 0, 1, 0], [], []>} : vector<8x4xbf16>, vector<8x4xbf16>, vector<8x8xf32> -> vector<8x8xf32>
    %cst_150 = arith.constant dense<0xFF800000> : vector<8xf32>
    %229 = vector.multi_reduction <maximumf>, %228, %cst_150 [1] : vector<8x8xf32> to vector<8xf32>
    %230 = vector.shape_cast %229 : vector<8xf32> to vector<8x1xf32>
    %231 = vector.broadcast %230 : vector<8x1xf32> to vector<8x8xf32>
    %232 = arith.subf %228, %231 : vector<8x8xf32>
    %233 = math.exp %232 : vector<8x8xf32>
    %cst_151 = arith.constant dense<0.000000e+00> : vector<8xf32>
    %234 = vector.multi_reduction <add>, %233, %cst_151 [1] : vector<8x8xf32> to vector<8xf32>
    %235 = vector.shape_cast %234 : vector<8xf32> to vector<8x1xf32>
    %236 = tpu.reciprocal %235 : vector<8x1xf32> -> vector<8x1xf32>
    %237 = vector.broadcast %236 : vector<8x1xf32> to vector<8x8xf32>
    %238 = arith.mulf %233, %237 : vector<8x8xf32>
    %239 = arith.truncf %238 : vector<8x8xf32> to vector<8x8xbf16>
    %c0_152 = arith.constant 0 : index
    %c7 = arith.constant 7 : index
    %c0_153 = arith.constant 0 : index
    %c0_154 = arith.constant 0 : index
    %240 = vector.load %arg8[%c0_152, %c7, %c0_153, %c0_154] : memref<1x8x8x8xbf16, #tpu.memory_space<vmem>>, vector<1x1x8x8xbf16>
    %241 = vector.shape_cast %240 : vector<1x1x8x8xbf16> to vector<8x8xbf16>
    %242 = vector.shape_cast %239 : vector<8x8xbf16> to vector<1x1x8x8xbf16>
    tpu.vector_store %arg8[%c0_152, %c7, %c0_153, %c0_154], %242 {strides = array<i32>} : memref<1x8x8x8xbf16, #tpu.memory_space<vmem>>, vector<1x1x8x8xbf16>,
    %243 = tpu.reciprocal %235 {approx = true} : vector<8x1xf32> -> vector<8x1xf32>
    %244 = vector.broadcast %243 : vector<8x1xf32> to vector<8x8xf32>
    %245 = arith.mulf %233, %244 : vector<8x8xf32>
    %246 = arith.truncf %245 : vector<8x8xf32> to vector<8x8xbf16>
    %cst_155 = arith.constant dense<0.000000e+00> : vector<8x4xf32>
    %247 = tpu.matmul %246, %227, %cst_155 {dimension_numbers = #tpu.dot_dimension_numbers<[1], [0], [0], [1], [0, 0, 1, 1], [], []>} : vector<8x8xbf16>, vector<8x4xbf16>, vector<8x4xf32> -> vector<8x4xf32>
    %c0_156 = arith.constant 0 : index
    %c0_157 = arith.constant 0 : index
    %248 = vector.load %arg11[%c0_156, %c0_157] : memref<8x32xf32, #tpu.memory_space<vmem>>, vector<8x32xf32>
    %249 = arith.truncf %247 : vector<8x4xf32> to vector<8x4xbf16>
    %c7_158 = arith.constant 7 : index
    %c0_159 = arith.constant 0 : index
    %c0_160 = arith.constant 0 : index
    %250 = vector.load %arg5[%c7_158, %c0_159, %c0_160] : memref<8x4x32xbf16, #tpu.memory_space<vmem>>, vector<1x4x32xbf16>
    %251 = vector.shape_cast %250 : vector<1x4x32xbf16> to vector<4x32xbf16>
    %cst_161 = arith.constant dense<0.000000e+00> : vector<8x32xf32>
    %252 = tpu.matmul %249, %251, %cst_161 {dimension_numbers = #tpu.dot_dimension_numbers<[1], [0], [0], [1], [0, 0, 1, 1], [], []>} : vector<8x4xbf16>, vector<4x32xbf16>, vector<8x32xf32> -> vector<8x32xf32>
    %253 = arith.addf %248, %252 : vector<8x32xf32>
    %c0_162 = arith.constant 0 : index
    %c0_163 = arith.constant 0 : index
    %254 = vector.load %arg11[%c0_162, %c0_163] : memref<8x32xf32, #tpu.memory_space<vmem>>, vector<8x32xf32>
    tpu.vector_store %arg11[%c0_162, %c0_163], %253 {strides = array<i32>} : memref<8x32xf32, #tpu.memory_space<vmem>>, vector<8x32xf32>,
    %c0_164 = arith.constant 0 : index
    %c0_165 = arith.constant 0 : index
    %255 = vector.load %arg11[%c0_164, %c0_165] : memref<8x32xf32, #tpu.memory_space<vmem>>, vector<8x32xf32>
    %c0_166 = arith.constant 0 : index
    %c0_167 = arith.constant 0 : index
    %256 = vector.load %arg6[%c0_166, %c0_167] : memref<1x32xf32, #tpu.memory_space<vmem>>, vector<1x32xf32>
    %257 = vector.broadcast %256 : vector<1x32xf32> to vector<8x32xf32>
    %258 = arith.addf %255, %257 : vector<8x32xf32>
    %c0_168 = arith.constant 0 : index
    %c0_169 = arith.constant 0 : index
    %c0_170 = arith.constant 0 : index
    %259 = vector.load %arg7[%c0_168, %c0_169, %c0_170] : memref<1x8x32xf32, #tpu.memory_space<vmem>>, vector<1x8x32xf32>
    %260 = vector.shape_cast %259 : vector<1x8x32xf32> to vector<8x32xf32>
    %261 = vector.shape_cast %258 : vector<8x32xf32> to vector<1x8x32xf32>
    tpu.vector_store %arg7[%c0_168, %c0_169, %c0_170], %261 {strides = array<i32>} : memref<1x8x32xf32, #tpu.memory_space<vmem>>, vector<1x8x32xf32>,
    return
  }
  func.func @transform_0(%arg0: i32, %arg1: i32) -> (i32, i32, i32) {
    %c0_i32 = arith.constant 0 : i32
    %c0_i32_0 = arith.constant 0 : i32
    %c0_i32_1 = arith.constant 0 : i32
    return %arg0, %c0_i32, %c0_i32_0 : i32, i32, i32
  }
  func.func @transform_1(%arg0: i32, %arg1: i32) -> (i32, i32) {
    %c0_i32 = arith.constant 0 : i32
    %c0_i32_0 = arith.constant 0 : i32
    %c0_i32_1 = arith.constant 0 : i32
    return %c0_i32, %c0_i32_0 : i32, i32
  }
  func.func @transform_2(%arg0: i32, %arg1: i32) -> (i32, i32) {
    %c0_i32 = arith.constant 0 : i32
    %c0_i32_0 = arith.constant 0 : i32
    %c0_i32_1 = arith.constant 0 : i32
    return %c0_i32, %c0_i32_0 : i32, i32
  }
  func.func @transform_3(%arg0: i32, %arg1: i32) -> (i32, i32, i32) {
    %c0_i32 = arith.constant 0 : i32
    %c0_i32_0 = arith.constant 0 : i32
    %c0_i32_1 = arith.constant 0 : i32
    %c0_i32_2 = arith.constant 0 : i32
    return %c0_i32, %c0_i32_0, %c0_i32_1 : i32, i32, i32
  }
  func.func @transform_4(%arg0: i32, %arg1: i32) -> (i32, i32) {
    %c0_i32 = arith.constant 0 : i32
    %c0_i32_0 = arith.constant 0 : i32
    %c0_i32_1 = arith.constant 0 : i32
    return %c0_i32, %c0_i32_0 : i32, i32
  }
  func.func @transform_5(%arg0: i32, %arg1: i32) -> (i32, i32, i32) {
    %c0_i32 = arith.constant 0 : i32
    %c0_i32_0 = arith.constant 0 : i32
    return %arg0, %arg1, %c0_i32 : i32, i32, i32
  }
  func.func @transform_6(%arg0: i32, %arg1: i32) -> (i32, i32, i32, i32) {
    %c0_i32 = arith.constant 0 : i32
    %c0_i32_0 = arith.constant 0 : i32
    %c0_i32_1 = arith.constant 0 : i32
    return %arg0, %c0_i32, %arg1, %c0_i32_0 : i32, i32, i32, i32
  }
}

module attributes {stable_mosaic.version = 11 : i64} {
  func.func @apla_attention_kernel(%arg0: i32, %arg1: i32, %arg2: memref<1x8x32xf32, #tpu.memory_space<vmem>>, %arg3: memref<32x32xbf16, #tpu.memory_space<vmem>>, %arg4: memref<32x64xbf16, #tpu.memory_space<vmem>>, %arg5: memref<8x4x32xbf16, #tpu.memory_space<vmem>>, %arg6: memref<1x32xf32, #tpu.memory_space<vmem>>, %arg7: memref<1x8x32xf32, #tpu.memory_space<vmem>>, %arg8: memref<1x8x8x8xbf16, #tpu.memory_space<vmem>>, %arg9: memref<8x64xbf16, #tpu.memory_space<vmem>>, %arg10: memref<8x32xbf16, #tpu.memory_space<vmem>>, %arg11: memref<8x32xf32, #tpu.memory_space<vmem>>) attributes {dimension_semantics = [#tpu.dimension_semantics<parallel>, #tpu.dimension_semantics<arbitrary>], iteration_bounds = array<i64: 2, 1>, scalar_prefetch = 0 : i64, scratch_operands = 3 : i64, tpu.core_type = #tpu.core_type<tc>, window_params = [{transform_indices = @transform_0, window_bounds = array<i64: 1, 8, 32>}, {pipeline_mode = #tpu.pipeline_mode<synchronous>, transform_indices = @transform_1, window_bounds = array<i64: 32, 32>}, {pipeline_mode = #tpu.pipeline_mode<synchronous>, transform_indices = @transform_2, window_bounds = array<i64: 32, 64>}, {pipeline_mode = #tpu.pipeline_mode<synchronous>, transform_indices = @transform_3, window_bounds = array<i64: 8, 4, 32>}, {pipeline_mode = #tpu.pipeline_mode<synchronous>, transform_indices = @transform_4, window_bounds = array<i64: 1, 32>}, {transform_indices = @transform_5, window_bounds = array<i64: 1, 8, 32>}, {transform_indices = @transform_6, window_bounds = array<i64: 1, 8, 8, 8>}]} {
    %c0_i32 = arith.constant 0 : i32
    %0 = arith.cmpi eq, %arg1, %c0_i32 : i32
    %1 = arith.extui %0 : i1 to i32
    %c0_i32_0 = arith.constant 0 : i32
    %2 = arith.cmpi ne, %1, %c0_i32_0 : i32
    scf.if %2 {
      %c0_171 = arith.constant 0 : index
      %c0_172 = arith.constant 0 : index
      %c0_173 = arith.constant 0 : index
      %262 = vector.load %arg2[%c0_171, %c0_172, %c0_173] : memref<1x8x32xf32, #tpu.memory_space<vmem>>, vector<1x8x32xf32>
      %263 = vector.shape_cast %262 : vector<1x8x32xf32> to vector<8x32xf32>
      %264 = arith.truncf %263 : vector<8x32xf32> to vector<8x32xbf16>
      %c0_174 = arith.constant 0 : index
      %c0_175 = arith.constant 0 : index
      %265 = vector.load %arg4[%c0_174, %c0_175] : memref<32x64xbf16, #tpu.memory_space<vmem>>, vector<32x64xbf16>
      %cst_176 = arith.constant dense<0.000000e+00> : vector<8x64xf32>
      %266 = tpu.matmul %264, %265, %cst_176 {dimension_numbers = #tpu.dot_dimension_numbers<[1], [0], [0], [1], [0, 0, 1, 1], [], []>} : vector<8x32xbf16>, vector<32x64xbf16>, vector<8x64xf32> -> vector<8x64xf32>
      %267 = arith.truncf %266 : vector<8x64xf32> to vector<8x64xbf16>
      %c0_177 = arith.constant 0 : index
      %c0_178 = arith.constant 0 : index
      %268 = vector.load %arg9[%c0_177, %c0_178] : memref<8x64xbf16, #tpu.memory_space<vmem>>, vector<8x64xbf16>
      tpu.vector_store %arg9[%c0_177, %c0_178], %267 {strides = array<i32>} : memref<8x64xbf16, #tpu.memory_space<vmem>>, vector<8x64xbf16>,
    } else {
    }
    %c8_i32 = arith.constant 8 : i32
    %3 = arith.muli %arg1, %c8_i32 : i32
    %4 = tpu.assume_multiple %3, 8 : i32
    %c0 = arith.constant 0 : index
    %5 = arith.index_cast %4 : i32 to index
    %c0_1 = arith.constant 0 : index
    %6 = vector.load %arg2[%c0, %5, %c0_1] : memref<1x8x32xf32, #tpu.memory_space<vmem>>, vector<1x8x32xf32>
    %7 = vector.shape_cast %6 : vector<1x8x32xf32> to vector<8x32xf32>
    %8 = arith.truncf %7 : vector<8x32xf32> to vector<8x32xbf16>
    %c0_2 = arith.constant 0 : index
    %c0_3 = arith.constant 0 : index
    %9 = vector.load %arg3[%c0_2, %c0_3] : memref<32x32xbf16, #tpu.memory_space<vmem>>, vector<32x32xbf16>
    %cst = arith.constant dense<0.000000e+00> : vector<8x32xf32>
    %10 = tpu.matmul %8, %9, %cst {dimension_numbers = #tpu.dot_dimension_numbers<[1], [0], [0], [1], [0, 0, 1, 1], [], []>} : vector<8x32xbf16>, vector<32x32xbf16>, vector<8x32xf32> -> vector<8x32xf32>
    %11 = arith.truncf %10 : vector<8x32xf32> to vector<8x32xbf16>
    %c0_4 = arith.constant 0 : index
    %c0_5 = arith.constant 0 : index
    %12 = vector.load %arg10[%c0_4, %c0_5] : memref<8x32xbf16, #tpu.memory_space<vmem>>, vector<8x32xbf16>
    tpu.vector_store %arg10[%c0_4, %c0_5], %11 {strides = array<i32>} : memref<8x32xbf16, #tpu.memory_space<vmem>>, vector<8x32xbf16>,
    %cst_6 = arith.constant 0.000000e+00 : f32
    %13 = vector.broadcast %cst_6 : f32 to vector<8x32xf32>
    %c0_7 = arith.constant 0 : index
    %c0_8 = arith.constant 0 : index
    %14 = vector.load %arg11[%c0_7, %c0_8] : memref<8x32xf32, #tpu.memory_space<vmem>>, vector<8x32xf32>
    tpu.vector_store %arg11[%c0_7, %c0_8], %13 {strides = array<i32>} : memref<8x32xf32, #tpu.memory_space<vmem>>, vector<8x32xf32>,
    %c0_9 = arith.constant 0 : index
    %c0_10 = arith.constant 0 : index
    %15 = vector.load %arg10[%c0_9, %c0_10] : memref<8x32xbf16, #tpu.memory_space<vmem>>, vector<8x4xbf16>
    %c0_11 = arith.constant 0 : index
    %c0_12 = arith.constant 0 : index
    %16 = vector.load %arg9[%c0_11, %c0_12] : memref<8x64xbf16, #tpu.memory_space<vmem>>, vector<8x4xbf16>
    %c0_13 = arith.constant 0 : index
    %c32 = arith.constant 32 : index
    %17 = vector.load %arg9[%c0_13, %c32] : memref<8x64xbf16, #tpu.memory_space<vmem>>, vector<8x4xbf16>
    %cst_14 = arith.constant dense<0.000000e+00> : vector<8x8xf32>
    %18 = tpu.matmul %15, %16, %cst_14 {dimension_numbers = #tpu.dot_dimension_numbers<[1], [1], [0], [0], [0, 0, 1, 0], [], []>} : vector<8x4xbf16>, vector<8x4xbf16>, vector<8x8xf32> -> vector<8x8xf32>
    %cst_15 = arith.constant dense<0xFF800000> : vector<8xf32>
    %19 = vector.multi_reduction <maximumf>, %18, %cst_15 [1] : vector<8x8xf32> to vector<8xf32>
    %20 = vector.shape_cast %19 : vector<8xf32> to vector<8x1xf32>
    %21 = vector.broadcast %20 : vector<8x1xf32> to vector<8x8xf32>
    %22 = arith.subf %18, %21 : vector<8x8xf32>
    %23 = math.exp %22 : vector<8x8xf32>
    %cst_16 = arith.constant dense<0.000000e+00> : vector<8xf32>
    %24 = vector.multi_reduction <add>, %23, %cst_16 [1] : vector<8x8xf32> to vector<8xf32>
    %25 = vector.shape_cast %24 : vector<8xf32> to vector<8x1xf32>
    %26 = tpu.reciprocal %25 : vector<8x1xf32> -> vector<8x1xf32>
    %27 = vector.broadcast %26 : vector<8x1xf32> to vector<8x8xf32>
    %28 = arith.mulf %23, %27 : vector<8x8xf32>
    %29 = arith.truncf %28 : vector<8x8xf32> to vector<8x8xbf16>
    %c0_17 = arith.constant 0 : index
    %c0_18 = arith.constant 0 : index
    %c0_19 = arith.constant 0 : index
    %c0_20 = arith.constant 0 : index
    %30 = vector.load %arg8[%c0_17, %c0_18, %c0_19, %c0_20] : memref<1x8x8x8xbf16, #tpu.memory_space<vmem>>, vector<1x1x8x8xbf16>
    %31 = vector.shape_cast %30 : vector<1x1x8x8xbf16> to vector<8x8xbf16>
    %32 = vector.shape_cast %29 : vector<8x8xbf16> to vector<1x1x8x8xbf16>
    tpu.vector_store %arg8[%c0_17, %c0_18, %c0_19, %c0_20], %32 {strides = array<i32>} : memref<1x8x8x8xbf16, #tpu.memory_space<vmem>>, vector<1x1x8x8xbf16>,
    %33 = tpu.reciprocal %25 {approx = true} : vector<8x1xf32> -> vector<8x1xf32>
    %34 = vector.broadcast %33 : vector<8x1xf32> to vector<8x8xf32>
    %35 = arith.mulf %23, %34 : vector<8x8xf32>
    %36 = arith.truncf %35 : vector<8x8xf32> to vector<8x8xbf16>
    %cst_21 = arith.constant dense<0.000000e+00> : vector<8x4xf32>
    %37 = tpu.matmul %36, %17, %cst_21 {dimension_numbers = #tpu.dot_dimension_numbers<[1], [0], [0], [1], [0, 0, 1, 1], [], []>} : vector<8x8xbf16>, vector<8x4xbf16>, vector<8x4xf32> -> vector<8x4xf32>
    %c0_22 = arith.constant 0 : index
    %c0_23 = arith.constant 0 : index
    %38 = vector.load %arg11[%c0_22, %c0_23] : memref<8x32xf32, #tpu.memory_space<vmem>>, vector<8x32xf32>
    %39 = arith.truncf %37 : vector<8x4xf32> to vector<8x4xbf16>
    %c0_24 = arith.constant 0 : index
    %c0_25 = arith.constant 0 : index
    %c0_26 = arith.constant 0 : index
    %40 = vector.load %arg5[%c0_24, %c0_25, %c0_26] : memref<8x4x32xbf16, #tpu.memory_space<vmem>>, vector<1x4x32xbf16>
    %41 = vector.shape_cast %40 : vector<1x4x32xbf16> to vector<4x32xbf16>
    %cst_27 = arith.constant dense<0.000000e+00> : vector<8x32xf32>
    %42 = tpu.matmul %39, %41, %cst_27 {dimension_numbers = #tpu.dot_dimension_numbers<[1], [0], [0], [1], [0, 0, 1, 1], [], []>} : vector<8x4xbf16>, vector<4x32xbf16>, vector<8x32xf32> -> vector<8x32xf32>
    %43 = arith.addf %38, %42 : vector<8x32xf32>
    %c0_28 = arith.constant 0 : index
    %c0_29 = arith.constant 0 : index
    %44 = vector.load %arg11[%c0_28, %c0_29] : memref<8x32xf32, #tpu.memory_space<vmem>>, vector<8x32xf32>
    tpu.vector_store %arg11[%c0_28, %c0_29], %43 {strides = array<i32>} : memref<8x32xf32, #tpu.memory_space<vmem>>, vector<8x32xf32>,
    %c0_30 = arith.constant 0 : index
    %c4 = arith.constant 4 : index
    %45 = vector.load %arg10[%c0_30, %c4] : memref<8x32xbf16, #tpu.memory_space<vmem>>, vector<8x4xbf16>
    %c0_31 = arith.constant 0 : index
    %c4_32 = arith.constant 4 : index
    %46 = vector.load %arg9[%c0_31, %c4_32] : memref<8x64xbf16, #tpu.memory_space<vmem>>, vector<8x4xbf16>
    %c0_33 = arith.constant 0 : index
    %c36 = arith.constant 36 : index
    %47 = vector.load %arg9[%c0_33, %c36] : memref<8x64xbf16, #tpu.memory_space<vmem>>, vector<8x4xbf16>
    %cst_34 = arith.constant dense<0.000000e+00> : vector<8x8xf32>
    %48 = tpu.matmul %45, %46, %cst_34 {dimension_numbers = #tpu.dot_dimension_numbers<[1], [1], [0], [0], [0, 0, 1, 0], [], []>} : vector<8x4xbf16>, vector<8x4xbf16>, vector<8x8xf32> -> vector<8x8xf32>
    %cst_35 = arith.constant dense<0xFF800000> : vector<8xf32>
    %49 = vector.multi_reduction <maximumf>, %48, %cst_35 [1] : vector<8x8xf32> to vector<8xf32>
    %50 = vector.shape_cast %49 : vector<8xf32> to vector<8x1xf32>
    %51 = vector.broadcast %50 : vector<8x1xf32> to vector<8x8xf32>
    %52 = arith.subf %48, %51 : vector<8x8xf32>
    %53 = math.exp %52 : vector<8x8xf32>
    %cst_36 = arith.constant dense<0.000000e+00> : vector<8xf32>
    %54 = vector.multi_reduction <add>, %53, %cst_36 [1] : vector<8x8xf32> to vector<8xf32>
    %55 = vector.shape_cast %54 : vector<8xf32> to vector<8x1xf32>
    %56 = tpu.reciprocal %55 : vector<8x1xf32> -> vector<8x1xf32>
    %57 = vector.broadcast %56 : vector<8x1xf32> to vector<8x8xf32>
    %58 = arith.mulf %53, %57 : vector<8x8xf32>
    %59 = arith.truncf %58 : vector<8x8xf32> to vector<8x8xbf16>
    %c0_37 = arith.constant 0 : index
    %c1 = arith.constant 1 : index
    %c0_38 = arith.constant 0 : index
    %c0_39 = arith.constant 0 : index
    %60 = vector.load %arg8[%c0_37, %c1, %c0_38, %c0_39] : memref<1x8x8x8xbf16, #tpu.memory_space<vmem>>, vector<1x1x8x8xbf16>
    %61 = vector.shape_cast %60 : vector<1x1x8x8xbf16> to vector<8x8xbf16>
    %62 = vector.shape_cast %59 : vector<8x8xbf16> to vector<1x1x8x8xbf16>
    tpu.vector_store %arg8[%c0_37, %c1, %c0_38, %c0_39], %62 {strides = array<i32>} : memref<1x8x8x8xbf16, #tpu.memory_space<vmem>>, vector<1x1x8x8xbf16>,
    %63 = tpu.reciprocal %55 {approx = true} : vector<8x1xf32> -> vector<8x1xf32>
    %64 = vector.broadcast %63 : vector<8x1xf32> to vector<8x8xf32>
    %65 = arith.mulf %53, %64 : vector<8x8xf32>
    %66 = arith.truncf %65 : vector<8x8xf32> to vector<8x8xbf16>
    %cst_40 = arith.constant dense<0.000000e+00> : vector<8x4xf32>
    %67 = tpu.matmul %66, %47, %cst_40 {dimension_numbers = #tpu.dot_dimension_numbers<[1], [0], [0], [1], [0, 0, 1, 1], [], []>} : vector<8x8xbf16>, vector<8x4xbf16>, vector<8x4xf32> -> vector<8x4xf32>
    %c0_41 = arith.constant 0 : index
    %c0_42 = arith.constant 0 : index
    %68 = vector.load %arg11[%c0_41, %c0_42] : memref<8x32xf32, #tpu.memory_space<vmem>>, vector<8x32xf32>
    %69 = arith.truncf %67 : vector<8x4xf32> to vector<8x4xbf16>
    %c1_43 = arith.constant 1 : index
    %c0_44 = arith.constant 0 : index
    %c0_45 = arith.constant 0 : index
    %70 = vector.load %arg5[%c1_43, %c0_44, %c0_45] : memref<8x4x32xbf16, #tpu.memory_space<vmem>>, vector<1x4x32xbf16>
    %71 = vector.shape_cast %70 : vector<1x4x32xbf16> to vector<4x32xbf16>
    %cst_46 = arith.constant dense<0.000000e+00> : vector<8x32xf32>
    %72 = tpu.matmul %69, %71, %cst_46 {dimension_numbers = #tpu.dot_dimension_numbers<[1], [0], [0], [1], [0, 0, 1, 1], [], []>} : vector<8x4xbf16>, vector<4x32xbf16>, vector<8x32xf32> -> vector<8x32xf32>
    %73 = arith.addf %68, %72 : vector<8x32xf32>
    %c0_47 = arith.constant 0 : index
    %c0_48 = arith.constant 0 : index
    %74 = vector.load %arg11[%c0_47, %c0_48] : memref<8x32xf32, #tpu.memory_space<vmem>>, vector<8x32xf32>
    tpu.vector_store %arg11[%c0_47, %c0_48], %73 {strides = array<i32>} : memref<8x32xf32, #tpu.memory_space<vmem>>, vector<8x32xf32>,
    %c0_49 = arith.constant 0 : index
    %c8 = arith.constant 8 : index
    %75 = vector.load %arg10[%c0_49, %c8] : memref<8x32xbf16, #tpu.memory_space<vmem>>, vector<8x4xbf16>
    %c0_50 = arith.constant 0 : index
    %c8_51 = arith.constant 8 : index
    %76 = vector.load %arg9[%c0_50, %c8_51] : memref<8x64xbf16, #tpu.memory_space<vmem>>, vector<8x4xbf16>
    %c0_52 = arith.constant 0 : index
    %c40 = arith.constant 40 : index
    %77 = vector.load %arg9[%c0_52, %c40] : memref<8x64xbf16, #tpu.memory_space<vmem>>, vector<8x4xbf16>
    %cst_53 = arith.constant dense<0.000000e+00> : vector<8x8xf32>
    %78 = tpu.matmul %75, %76, %cst_53 {dimension_numbers = #tpu.dot_dimension_numbers<[1], [1], [0], [0], [0, 0, 1, 0], [], []>} : vector<8x4xbf16>, vector<8x4xbf16>, vector<8x8xf32> -> vector<8x8xf32>
    %cst_54 = arith.constant dense<0xFF800000> : vector<8xf32>
    %79 = vector.multi_reduction <maximumf>, %78, %cst_54 [1] : vector<8x8xf32> to vector<8xf32>
    %80 = vector.shape_cast %79 : vector<8xf32> to vector<8x1xf32>
    %81 = vector.broadcast %80 : vector<8x1xf32> to vector<8x8xf32>
    %82 = arith.subf %78, %81 : vector<8x8xf32>
    %83 = math.exp %82 : vector<8x8xf32>
    %cst_55 = arith.constant dense<0.000000e+00> : vector<8xf32>
    %84 = vector.multi_reduction <add>, %83, %cst_55 [1] : vector<8x8xf32> to vector<8xf32>
    %85 = vector.shape_cast %84 : vector<8xf32> to vector<8x1xf32>
    %86 = tpu.reciprocal %85 : vector<8x1xf32> -> vector<8x1xf32>
    %87 = vector.broadcast %86 : vector<8x1xf32> to vector<8x8xf32>
    %88 = arith.mulf %83, %87 : vector<8x8xf32>
    %89 = arith.truncf %88 : vector<8x8xf32> to vector<8x8xbf16>
    %c0_56 = arith.constant 0 : index
    %c2 = arith.constant 2 : index
    %c0_57 = arith.constant 0 : index
    %c0_58 = arith.constant 0 : index
    %90 = vector.load %arg8[%c0_56, %c2, %c0_57, %c0_58] : memref<1x8x8x8xbf16, #tpu.memory_space<vmem>>, vector<1x1x8x8xbf16>
    %91 = vector.shape_cast %90 : vector<1x1x8x8xbf16> to vector<8x8xbf16>
    %92 = vector.shape_cast %89 : vector<8x8xbf16> to vector<1x1x8x8xbf16>
    tpu.vector_store %arg8[%c0_56, %c2, %c0_57, %c0_58], %92 {strides = array<i32>} : memref<1x8x8x8xbf16, #tpu.memory_space<vmem>>, vector<1x1x8x8xbf16>,
    %93 = tpu.reciprocal %85 {approx = true} : vector<8x1xf32> -> vector<8x1xf32>
    %94 = vector.broadcast %93 : vector<8x1xf32> to vector<8x8xf32>
    %95 = arith.mulf %83, %94 : vector<8x8xf32>
    %96 = arith.truncf %95 : vector<8x8xf32> to vector<8x8xbf16>
    %cst_59 = arith.constant dense<0.000000e+00> : vector<8x4xf32>
    %97 = tpu.matmul %96, %77, %cst_59 {dimension_numbers = #tpu.dot_dimension_numbers<[1], [0], [0], [1], [0, 0, 1, 1], [], []>} : vector<8x8xbf16>, vector<8x4xbf16>, vector<8x4xf32> -> vector<8x4xf32>
    %c0_60 = arith.constant 0 : index
    %c0_61 = arith.constant 0 : index
    %98 = vector.load %arg11[%c0_60, %c0_61] : memref<8x32xf32, #tpu.memory_space<vmem>>, vector<8x32xf32>
    %99 = arith.truncf %97 : vector<8x4xf32> to vector<8x4xbf16>
    %c2_62 = arith.constant 2 : index
    %c0_63 = arith.constant 0 : index
    %c0_64 = arith.constant 0 : index
    %100 = vector.load %arg5[%c2_62, %c0_63, %c0_64] : memref<8x4x32xbf16, #tpu.memory_space<vmem>>, vector<1x4x32xbf16>
    %101 = vector.shape_cast %100 : vector<1x4x32xbf16> to vector<4x32xbf16>
    %cst_65 = arith.constant dense<0.000000e+00> : vector<8x32xf32>
    %102 = tpu.matmul %99, %101, %cst_65 {dimension_numbers = #tpu.dot_dimension_numbers<[1], [0], [0], [1], [0, 0, 1, 1], [], []>} : vector<8x4xbf16>, vector<4x32xbf16>, vector<8x32xf32> -> vector<8x32xf32>
    %103 = arith.addf %98, %102 : vector<8x32xf32>
    %c0_66 = arith.constant 0 : index
    %c0_67 = arith.constant 0 : index
    %104 = vector.load %arg11[%c0_66, %c0_67] : memref<8x32xf32, #tpu.memory_space<vmem>>, vector<8x32xf32>
    tpu.vector_store %arg11[%c0_66, %c0_67], %103 {strides = array<i32>} : memref<8x32xf32, #tpu.memory_space<vmem>>, vector<8x32xf32>,
    %c0_68 = arith.constant 0 : index
    %c12 = arith.constant 12 : index
    %105 = vector.load %arg10[%c0_68, %c12] : memref<8x32xbf16, #tpu.memory_space<vmem>>, vector<8x4xbf16>
    %c0_69 = arith.constant 0 : index
    %c12_70 = arith.constant 12 : index
    %106 = vector.load %arg9[%c0_69, %c12_70] : memref<8x64xbf16, #tpu.memory_space<vmem>>, vector<8x4xbf16>
    %c0_71 = arith.constant 0 : index
    %c44 = arith.constant 44 : index
    %107 = vector.load %arg9[%c0_71, %c44] : memref<8x64xbf16, #tpu.memory_space<vmem>>, vector<8x4xbf16>
    %cst_72 = arith.constant dense<0.000000e+00> : vector<8x8xf32>
    %108 = tpu.matmul %105, %106, %cst_72 {dimension_numbers = #tpu.dot_dimension_numbers<[1], [1], [0], [0], [0, 0, 1, 0], [], []>} : vector<8x4xbf16>, vector<8x4xbf16>, vector<8x8xf32> -> vector<8x8xf32>
    %cst_73 = arith.constant dense<0xFF800000> : vector<8xf32>
    %109 = vector.multi_reduction <maximumf>, %108, %cst_73 [1] : vector<8x8xf32> to vector<8xf32>
    %110 = vector.shape_cast %109 : vector<8xf32> to vector<8x1xf32>
    %111 = vector.broadcast %110 : vector<8x1xf32> to vector<8x8xf32>
    %112 = arith.subf %108, %111 : vector<8x8xf32>
    %113 = math.exp %112 : vector<8x8xf32>
    %cst_74 = arith.constant dense<0.000000e+00> : vector<8xf32>
    %114 = vector.multi_reduction <add>, %113, %cst_74 [1] : vector<8x8xf32> to vector<8xf32>
    %115 = vector.shape_cast %114 : vector<8xf32> to vector<8x1xf32>
    %116 = tpu.reciprocal %115 : vector<8x1xf32> -> vector<8x1xf32>
    %117 = vector.broadcast %116 : vector<8x1xf32> to vector<8x8xf32>
    %118 = arith.mulf %113, %117 : vector<8x8xf32>
    %119 = arith.truncf %118 : vector<8x8xf32> to vector<8x8xbf16>
    %c0_75 = arith.constant 0 : index
    %c3 = arith.constant 3 : index
    %c0_76 = arith.constant 0 : index
    %c0_77 = arith.constant 0 : index
    %120 = vector.load %arg8[%c0_75, %c3, %c0_76, %c0_77] : memref<1x8x8x8xbf16, #tpu.memory_space<vmem>>, vector<1x1x8x8xbf16>
    %121 = vector.shape_cast %120 : vector<1x1x8x8xbf16> to vector<8x8xbf16>
    %122 = vector.shape_cast %119 : vector<8x8xbf16> to vector<1x1x8x8xbf16>
    tpu.vector_store %arg8[%c0_75, %c3, %c0_76, %c0_77], %122 {strides = array<i32>} : memref<1x8x8x8xbf16, #tpu.memory_space<vmem>>, vector<1x1x8x8xbf16>,
    %123 = tpu.reciprocal %115 {approx = true} : vector<8x1xf32> -> vector<8x1xf32>
    %124 = vector.broadcast %123 : vector<8x1xf32> to vector<8x8xf32>
    %125 = arith.mulf %113, %124 : vector<8x8xf32>
    %126 = arith.truncf %125 : vector<8x8xf32> to vector<8x8xbf16>
    %cst_78 = arith.constant dense<0.000000e+00> : vector<8x4xf32>
    %127 = tpu.matmul %126, %107, %cst_78 {dimension_numbers = #tpu.dot_dimension_numbers<[1], [0], [0], [1], [0, 0, 1, 1], [], []>} : vector<8x8xbf16>, vector<8x4xbf16>, vector<8x4xf32> -> vector<8x4xf32>
    %c0_79 = arith.constant 0 : index
    %c0_80 = arith.constant 0 : index
    %128 = vector.load %arg11[%c0_79, %c0_80] : memref<8x32xf32, #tpu.memory_space<vmem>>, vector<8x32xf32>
    %129 = arith.truncf %127 : vector<8x4xf32> to vector<8x4xbf16>
    %c3_81 = arith.constant 3 : index
    %c0_82 = arith.constant 0 : index
    %c0_83 = arith.constant 0 : index
    %130 = vector.load %arg5[%c3_81, %c0_82, %c0_83] : memref<8x4x32xbf16, #tpu.memory_space<vmem>>, vector<1x4x32xbf16>
    %131 = vector.shape_cast %130 : vector<1x4x32xbf16> to vector<4x32xbf16>
    %cst_84 = arith.constant dense<0.000000e+00> : vector<8x32xf32>
    %132 = tpu.matmul %129, %131, %cst_84 {dimension_numbers = #tpu.dot_dimension_numbers<[1], [0], [0], [1], [0, 0, 1, 1], [], []>} : vector<8x4xbf16>, vector<4x32xbf16>, vector<8x32xf32> -> vector<8x32xf32>
    %133 = arith.addf %128, %132 : vector<8x32xf32>
    %c0_85 = arith.constant 0 : index
    %c0_86 = arith.constant 0 : index
    %134 = vector.load %arg11[%c0_85, %c0_86] : memref<8x32xf32, #tpu.memory_space<vmem>>, vector<8x32xf32>
    tpu.vector_store %arg11[%c0_85, %c0_86], %133 {strides = array<i32>} : memref<8x32xf32, #tpu.memory_space<vmem>>, vector<8x32xf32>,
    %c0_87 = arith.constant 0 : index
    %c16 = arith.constant 16 : index
    %135 = vector.load %arg10[%c0_87, %c16] : memref<8x32xbf16, #tpu.memory_space<vmem>>, vector<8x4xbf16>
    %c0_88 = arith.constant 0 : index
    %c16_89 = arith.constant 16 : index
    %136 = vector.load %arg9[%c0_88, %c16_89] : memref<8x64xbf16, #tpu.memory_space<vmem>>, vector<8x4xbf16>
    %c0_90 = arith.constant 0 : index
    %c48 = arith.constant 48 : index
    %137 = vector.load %arg9[%c0_90, %c48] : memref<8x64xbf16, #tpu.memory_space<vmem>>, vector<8x4xbf16>
    %cst_91 = arith.constant dense<0.000000e+00> : vector<8x8xf32>
    %138 = tpu.matmul %135, %136, %cst_91 {dimension_numbers = #tpu.dot_dimension_numbers<[1], [1], [0], [0], [0, 0, 1, 0], [], []>} : vector<8x4xbf16>, vector<8x4xbf16>, vector<8x8xf32> -> vector<8x8xf32>
    %cst_92 = arith.constant dense<0xFF800000> : vector<8xf32>
    %139 = vector.multi_reduction <maximumf>, %138, %cst_92 [1] : vector<8x8xf32> to vector<8xf32>
    %140 = vector.shape_cast %139 : vector<8xf32> to vector<8x1xf32>
    %141 = vector.broadcast %140 : vector<8x1xf32> to vector<8x8xf32>
    %142 = arith.subf %138, %141 : vector<8x8xf32>
    %143 = math.exp %142 : vector<8x8xf32>
    %cst_93 = arith.constant dense<0.000000e+00> : vector<8xf32>
    %144 = vector.multi_reduction <add>, %143, %cst_93 [1] : vector<8x8xf32> to vector<8xf32>
    %145 = vector.shape_cast %144 : vector<8xf32> to vector<8x1xf32>
    %146 = tpu.reciprocal %145 : vector<8x1xf32> -> vector<8x1xf32>
    %147 = vector.broadcast %146 : vector<8x1xf32> to vector<8x8xf32>
    %148 = arith.mulf %143, %147 : vector<8x8xf32>
    %149 = arith.truncf %148 : vector<8x8xf32> to vector<8x8xbf16>
    %c0_94 = arith.constant 0 : index
    %c4_95 = arith.constant 4 : index
    %c0_96 = arith.constant 0 : index
    %c0_97 = arith.constant 0 : index
    %150 = vector.load %arg8[%c0_94, %c4_95, %c0_96, %c0_97] : memref<1x8x8x8xbf16, #tpu.memory_space<vmem>>, vector<1x1x8x8xbf16>
    %151 = vector.shape_cast %150 : vector<1x1x8x8xbf16> to vector<8x8xbf16>
    %152 = vector.shape_cast %149 : vector<8x8xbf16> to vector<1x1x8x8xbf16>
    tpu.vector_store %arg8[%c0_94, %c4_95, %c0_96, %c0_97], %152 {strides = array<i32>} : memref<1x8x8x8xbf16, #tpu.memory_space<vmem>>, vector<1x1x8x8xbf16>,
    %153 = tpu.reciprocal %145 {approx = true} : vector<8x1xf32> -> vector<8x1xf32>
    %154 = vector.broadcast %153 : vector<8x1xf32> to vector<8x8xf32>
    %155 = arith.mulf %143, %154 : vector<8x8xf32>
    %156 = arith.truncf %155 : vector<8x8xf32> to vector<8x8xbf16>
    %cst_98 = arith.constant dense<0.000000e+00> : vector<8x4xf32>
    %157 = tpu.matmul %156, %137, %cst_98 {dimension_numbers = #tpu.dot_dimension_numbers<[1], [0], [0], [1], [0, 0, 1, 1], [], []>} : vector<8x8xbf16>, vector<8x4xbf16>, vector<8x4xf32> -> vector<8x4xf32>
    %c0_99 = arith.constant 0 : index
    %c0_100 = arith.constant 0 : index
    %158 = vector.load %arg11[%c0_99, %c0_100] : memref<8x32xf32, #tpu.memory_space<vmem>>, vector<8x32xf32>
    %159 = arith.truncf %157 : vector<8x4xf32> to vector<8x4xbf16>
    %c4_101 = arith.constant 4 : index
    %c0_102 = arith.constant 0 : index
    %c0_103 = arith.constant 0 : index
    %160 = vector.load %arg5[%c4_101, %c0_102, %c0_103] : memref<8x4x32xbf16, #tpu.memory_space<vmem>>, vector<1x4x32xbf16>
    %161 = vector.shape_cast %160 : vector<1x4x32xbf16> to vector<4x32xbf16>
    %cst_104 = arith.constant dense<0.000000e+00> : vector<8x32xf32>
    %162 = tpu.matmul %159, %161, %cst_104 {dimension_numbers = #tpu.dot_dimension_numbers<[1], [0], [0], [1], [0, 0, 1, 1], [], []>} : vector<8x4xbf16>, vector<4x32xbf16>, vector<8x32xf32> -> vector<8x32xf32>
    %163 = arith.addf %158, %162 : vector<8x32xf32>
    %c0_105 = arith.constant 0 : index
    %c0_106 = arith.constant 0 : index
    %164 = vector.load %arg11[%c0_105, %c0_106] : memref<8x32xf32, #tpu.memory_space<vmem>>, vector<8x32xf32>
    tpu.vector_store %arg11[%c0_105, %c0_106], %163 {strides = array<i32>} : memref<8x32xf32, #tpu.memory_space<vmem>>, vector<8x32xf32>,
    %c0_107 = arith.constant 0 : index
    %c20 = arith.constant 20 : index
    %165 = vector.load %arg10[%c0_107, %c20] : memref<8x32xbf16, #tpu.memory_space<vmem>>, vector<8x4xbf16>
    %c0_108 = arith.constant 0 : index
    %c20_109 = arith.constant 20 : index
    %166 = vector.load %arg9[%c0_108, %c20_109] : memref<8x64xbf16, #tpu.memory_space<vmem>>, vector<8x4xbf16>
    %c0_110 = arith.constant 0 : index
    %c52 = arith.constant 52 : index
    %167 = vector.load %arg9[%c0_110, %c52] : memref<8x64xbf16, #tpu.memory_space<vmem>>, vector<8x4xbf16>
    %cst_111 = arith.constant dense<0.000000e+00> : vector<8x8xf32>
    %168 = tpu.matmul %165, %166, %cst_111 {dimension_numbers = #tpu.dot_dimension_numbers<[1], [1], [0], [0], [0, 0, 1, 0], [], []>} : vector<8x4xbf16>, vector<8x4xbf16>, vector<8x8xf32> -> vector<8x8xf32>
    %cst_112 = arith.constant dense<0xFF800000> : vector<8xf32>
    %169 = vector.multi_reduction <maximumf>, %168, %cst_112 [1] : vector<8x8xf32> to vector<8xf32>
    %170 = vector.shape_cast %169 : vector<8xf32> to vector<8x1xf32>
    %171 = vector.broadcast %170 : vector<8x1xf32> to vector<8x8xf32>
    %172 = arith.subf %168, %171 : vector<8x8xf32>
    %173 = math.exp %172 : vector<8x8xf32>
    %cst_113 = arith.constant dense<0.000000e+00> : vector<8xf32>
    %174 = vector.multi_reduction <add>, %173, %cst_113 [1] : vector<8x8xf32> to vector<8xf32>
    %175 = vector.shape_cast %174 : vector<8xf32> to vector<8x1xf32>
    %176 = tpu.reciprocal %175 : vector<8x1xf32> -> vector<8x1xf32>
    %177 = vector.broadcast %176 : vector<8x1xf32> to vector<8x8xf32>
    %178 = arith.mulf %173, %177 : vector<8x8xf32>
    %179 = arith.truncf %178 : vector<8x8xf32> to vector<8x8xbf16>
    %c0_114 = arith.constant 0 : index
    %c5 = arith.constant 5 : index
    %c0_115 = arith.constant 0 : index
    %c0_116 = arith.constant 0 : index
    %180 = vector.load %arg8[%c0_114, %c5, %c0_115, %c0_116] : memref<1x8x8x8xbf16, #tpu.memory_space<vmem>>, vector<1x1x8x8xbf16>
    %181 = vector.shape_cast %180 : vector<1x1x8x8xbf16> to vector<8x8xbf16>
    %182 = vector.shape_cast %179 : vector<8x8xbf16> to vector<1x1x8x8xbf16>
    tpu.vector_store %arg8[%c0_114, %c5, %c0_115, %c0_116], %182 {strides = array<i32>} : memref<1x8x8x8xbf16, #tpu.memory_space<vmem>>, vector<1x1x8x8xbf16>,
    %183 = tpu.reciprocal %175 {approx = true} : vector<8x1xf32> -> vector<8x1xf32>
    %184 = vector.broadcast %183 : vector<8x1xf32> to vector<8x8xf32>
    %185 = arith.mulf %173, %184 : vector<8x8xf32>
    %186 = arith.truncf %185 : vector<8x8xf32> to vector<8x8xbf16>
    %cst_117 = arith.constant dense<0.000000e+00> : vector<8x4xf32>
    %187 = tpu.matmul %186, %167, %cst_117 {dimension_numbers = #tpu.dot_dimension_numbers<[1], [0], [0], [1], [0, 0, 1, 1], [], []>} : vector<8x8xbf16>, vector<8x4xbf16>, vector<8x4xf32> -> vector<8x4xf32>
    %c0_118 = arith.constant 0 : index
    %c0_119 = arith.constant 0 : index
    %188 = vector.load %arg11[%c0_118, %c0_119] : memref<8x32xf32, #tpu.memory_space<vmem>>, vector<8x32xf32>
    %189 = arith.truncf %187 : vector<8x4xf32> to vector<8x4xbf16>
    %c5_120 = arith.constant 5 : index
    %c0_121 = arith.constant 0 : index
    %c0_122 = arith.constant 0 : index
    %190 = vector.load %arg5[%c5_120, %c0_121, %c0_122] : memref<8x4x32xbf16, #tpu.memory_space<vmem>>, vector<1x4x32xbf16>
    %191 = vector.shape_cast %190 : vector<1x4x32xbf16> to vector<4x32xbf16>
    %cst_123 = arith.constant dense<0.000000e+00> : vector<8x32xf32>
    %192 = tpu.matmul %189, %191, %cst_123 {dimension_numbers = #tpu.dot_dimension_numbers<[1], [0], [0], [1], [0, 0, 1, 1], [], []>} : vector<8x4xbf16>, vector<4x32xbf16>, vector<8x32xf32> -> vector<8x32xf32>
    %193 = arith.addf %188, %192 : vector<8x32xf32>
    %c0_124 = arith.constant 0 : index
    %c0_125 = arith.constant 0 : index
    %194 = vector.load %arg11[%c0_124, %c0_125] : memref<8x32xf32, #tpu.memory_space<vmem>>, vector<8x32xf32>
    tpu.vector_store %arg11[%c0_124, %c0_125], %193 {strides = array<i32>} : memref<8x32xf32, #tpu.memory_space<vmem>>, vector<8x32xf32>,
    %c0_126 = arith.constant 0 : index
    %c24 = arith.constant 24 : index
    %195 = vector.load %arg10[%c0_126, %c24] : memref<8x32xbf16, #tpu.memory_space<vmem>>, vector<8x4xbf16>
    %c0_127 = arith.constant 0 : index
    %c24_128 = arith.constant 24 : index
    %196 = vector.load %arg9[%c0_127, %c24_128] : memref<8x64xbf16, #tpu.memory_space<vmem>>, vector<8x4xbf16>
    %c0_129 = arith.constant 0 : index
    %c56 = arith.constant 56 : index
    %197 = vector.load %arg9[%c0_129, %c56] : memref<8x64xbf16, #tpu.memory_space<vmem>>, vector<8x4xbf16>
    %cst_130 = arith.constant dense<0.000000e+00> : vector<8x8xf32>
    %198 = tpu.matmul %195, %196, %cst_130 {dimension_numbers = #tpu.dot_dimension_numbers<[1], [1], [0], [0], [0, 0, 1, 0], [], []>} : vector<8x4xbf16>, vector<8x4xbf16>, vector<8x8xf32> -> vector<8x8xf32>
    %cst_131 = arith.constant dense<0xFF800000> : vector<8xf32>
    %199 = vector.multi_reduction <maximumf>, %198, %cst_131 [1] : vector<8x8xf32> to vector<8xf32>
    %200 = vector.shape_cast %199 : vector<8xf32> to vector<8x1xf32>
    %201 = vector.broadcast %200 : vector<8x1xf32> to vector<8x8xf32>
    %202 = arith.subf %198, %201 : vector<8x8xf32>
    %203 = math.exp %202 : vector<8x8xf32>
    %cst_132 = arith.constant dense<0.000000e+00> : vector<8xf32>
    %204 = vector.multi_reduction <add>, %203, %cst_132 [1] : vector<8x8xf32> to vector<8xf32>
    %205 = vector.shape_cast %204 : vector<8xf32> to vector<8x1xf32>
    %206 = tpu.reciprocal %205 : vector<8x1xf32> -> vector<8x1xf32>
    %207 = vector.broadcast %206 : vector<8x1xf32> to vector<8x8xf32>
    %208 = arith.mulf %203, %207 : vector<8x8xf32>
    %209 = arith.truncf %208 : vector<8x8xf32> to vector<8x8xbf16>
    %c0_133 = arith.constant 0 : index
    %c6 = arith.constant 6 : index
    %c0_134 = arith.constant 0 : index
    %c0_135 = arith.constant 0 : index
    %210 = vector.load %arg8[%c0_133, %c6, %c0_134, %c0_135] : memref<1x8x8x8xbf16, #tpu.memory_space<vmem>>, vector<1x1x8x8xbf16>
    %211 = vector.shape_cast %210 : vector<1x1x8x8xbf16> to vector<8x8xbf16>
    %212 = vector.shape_cast %209 : vector<8x8xbf16> to vector<1x1x8x8xbf16>
    tpu.vector_store %arg8[%c0_133, %c6, %c0_134, %c0_135], %212 {strides = array<i32>} : memref<1x8x8x8xbf16, #tpu.memory_space<vmem>>, vector<1x1x8x8xbf16>,
    %213 = tpu.reciprocal %205 {approx = true} : vector<8x1xf32> -> vector<8x1xf32>
    %214 = vector.broadcast %213 : vector<8x1xf32> to vector<8x8xf32>
    %215 = arith.mulf %203, %214 : vector<8x8xf32>
    %216 = arith.truncf %215 : vector<8x8xf32> to vector<8x8xbf16>
    %cst_136 = arith.constant dense<0.000000e+00> : vector<8x4xf32>
    %217 = tpu.matmul %216, %197, %cst_136 {dimension_numbers = #tpu.dot_dimension_numbers<[1], [0], [0], [1], [0, 0, 1, 1], [], []>} : vector<8x8xbf16>, vector<8x4xbf16>, vector<8x4xf32> -> vector<8x4xf32>
    %c0_137 = arith.constant 0 : index
    %c0_138 = arith.constant 0 : index
    %218 = vector.load %arg11[%c0_137, %c0_138] : memref<8x32xf32, #tpu.memory_space<vmem>>, vector<8x32xf32>
    %219 = arith.truncf %217 : vector<8x4xf32> to vector<8x4xbf16>
    %c6_139 = arith.constant 6 : index
    %c0_140 = arith.constant 0 : index
    %c0_141 = arith.constant 0 : index
    %220 = vector.load %arg5[%c6_139, %c0_140, %c0_141] : memref<8x4x32xbf16, #tpu.memory_space<vmem>>, vector<1x4x32xbf16>
    %221 = vector.shape_cast %220 : vector<1x4x32xbf16> to vector<4x32xbf16>
    %cst_142 = arith.constant dense<0.000000e+00> : vector<8x32xf32>
    %222 = tpu.matmul %219, %221, %cst_142 {dimension_numbers = #tpu.dot_dimension_numbers<[1], [0], [0], [1], [0, 0, 1, 1], [], []>} : vector<8x4xbf16>, vector<4x32xbf16>, vector<8x32xf32> -> vector<8x32xf32>
    %223 = arith.addf %218, %222 : vector<8x32xf32>
    %c0_143 = arith.constant 0 : index
    %c0_144 = arith.constant 0 : index
    %224 = vector.load %arg11[%c0_143, %c0_144] : memref<8x32xf32, #tpu.memory_space<vmem>>, vector<8x32xf32>
    tpu.vector_store %arg11[%c0_143, %c0_144], %223 {strides = array<i32>} : memref<8x32xf32, #tpu.memory_space<vmem>>, vector<8x32xf32>,
    %c0_145 = arith.constant 0 : index
    %c28 = arith.constant 28 : index
    %225 = vector.load %arg10[%c0_145, %c28] : memref<8x32xbf16, #tpu.memory_space<vmem>>, vector<8x4xbf16>
    %c0_146 = arith.constant 0 : index
    %c28_147 = arith.constant 28 : index
    %226 = vector.load %arg9[%c0_146, %c28_147] : memref<8x64xbf16, #tpu.memory_space<vmem>>, vector<8x4xbf16>
    %c0_148 = arith.constant 0 : index
    %c60 = arith.constant 60 : index
    %227 = vector.load %arg9[%c0_148, %c60] : memref<8x64xbf16, #tpu.memory_space<vmem>>, vector<8x4xbf16>
    %cst_149 = arith.constant dense<0.000000e+00> : vector<8x8xf32>
    %228 = tpu.matmul %225, %226, %cst_149 {dimension_numbers = #tpu.dot_dimension_numbers<[1], [1], [0], [0], [0, 0, 1, 0], [], []>} : vector<8x4xbf16>, vector<8x4xbf16>, vector<8x8xf32> -> vector<8x8xf32>
    %cst_150 = arith.constant dense<0xFF800000> : vector<8xf32>
    %229 = vector.multi_reduction <maximumf>, %228, %cst_150 [1] : vector<8x8xf32> to vector<8xf32>
    %230 = vector.shape_cast %229 : vector<8xf32> to vector<8x1xf32>
    %231 = vector.broadcast %230 : vector<8x1xf32> to vector<8x8xf32>
    %232 = arith.subf %228, %231 : vector<8x8xf32>
    %233 = math.exp %232 : vector<8x8xf32>
    %cst_151 = arith.constant dense<0.000000e+00> : vector<8xf32>
    %234 = vector.multi_reduction <add>, %233, %cst_151 [1] : vector<8x8xf32> to vector<8xf32>
    %235 = vector.shape_cast %234 : vector<8xf32> to vector<8x1xf32>
    %236 = tpu.reciprocal %235 : vector<8x1xf32> -> vector<8x1xf32>
    %237 = vector.broadcast %236 : vector<8x1xf32> to vector<8x8xf32>
    %238 = arith.mulf %233, %237 : vector<8x8xf32>
    %239 = arith.truncf %238 : vector<8x8xf32> to vector<8x8xbf16>
    %c0_152 = arith.constant 0 : index
    %c7 = arith.constant 7 : index
    %c0_153 = arith.constant 0 : index
    %c0_154 = arith.constant 0 : index
    %240 = vector.load %arg8[%c0_152, %c7, %c0_153, %c0_154] : memref<1x8x8x8xbf16, #tpu.memory_space<vmem>>, vector<1x1x8x8xbf16>
    %241 = vector.shape_cast %240 : vector<1x1x8x8xbf16> to vector<8x8xbf16>
    %242 = vector.shape_cast %239 : vector<8x8xbf16> to vector<1x1x8x8xbf16>
    tpu.vector_store %arg8[%c0_152, %c7, %c0_153, %c0_154], %242 {strides = array<i32>} : memref<1x8x8x8xbf16, #tpu.memory_space<vmem>>, vector<1x1x8x8xbf16>,
    %243 = tpu.reciprocal %235 {approx = true} : vector<8x1xf32> -> vector<8x1xf32>
    %244 = vector.broadcast %243 : vector<8x1xf32> to vector<8x8xf32>
    %245 = arith.mulf %233, %244 : vector<8x8xf32>
    %246 = arith.truncf %245 : vector<8x8xf32> to vector<8x8xbf16>
    %cst_155 = arith.constant dense<0.000000e+00> : vector<8x4xf32>
    %247 = tpu.matmul %246, %227, %cst_155 {dimension_numbers = #tpu.dot_dimension_numbers<[1], [0], [0], [1], [0, 0, 1, 1], [], []>} : vector<8x8xbf16>, vector<8x4xbf16>, vector<8x4xf32> -> vector<8x4xf32>
    %c0_156 = arith.constant 0 : index
    %c0_157 = arith.constant 0 : index
    %248 = vector.load %arg11[%c0_156, %c0_157] : memref<8x32xf32, #tpu.memory_space<vmem>>, vector<8x32xf32>
    %249 = arith.truncf %247 : vector<8x4xf32> to vector<8x4xbf16>
    %c7_158 = arith.constant 7 : index
    %c0_159 = arith.constant 0 : index
    %c0_160 = arith.constant 0 : index
    %250 = vector.load %arg5[%c7_158, %c0_159, %c0_160] : memref<8x4x32xbf16, #tpu.memory_space<vmem>>, vector<1x4x32xbf16>
    %251 = vector.shape_cast %250 : vector<1x4x32xbf16> to vector<4x32xbf16>
    %cst_161 = arith.constant dense<0.000000e+00> : vector<8x32xf32>
    %252 = tpu.matmul %249, %251, %cst_161 {dimension_numbers = #tpu.dot_dimension_numbers<[1], [0], [0], [1], [0, 0, 1, 1], [], []>} : vector<8x4xbf16>, vector<4x32xbf16>, vector<8x32xf32> -> vector<8x32xf32>
    %253 = arith.addf %248, %252 : vector<8x32xf32>
    %c0_162 = arith.constant 0 : index
    %c0_163 = arith.constant 0 : index
    %254 = vector.load %arg11[%c0_162, %c0_163] : memref<8x32xf32, #tpu.memory_space<vmem>>, vector<8x32xf32>
    tpu.vector_store %arg11[%c0_162, %c0_163], %253 {strides = array<i32>} : memref<8x32xf32, #tpu.memory_space<vmem>>, vector<8x32xf32>,
    %c0_164 = arith.constant 0 : index
    %c0_165 = arith.constant 0 : index
    %255 = vector.load %arg11[%c0_164, %c0_165] : memref<8x32xf32, #tpu.memory_space<vmem>>, vector<8x32xf32>
    %c0_166 = arith.constant 0 : index
    %c0_167 = arith.constant 0 : index
    %256 = vector.load %arg6[%c0_166, %c0_167] : memref<1x32xf32, #tpu.memory_space<vmem>>, vector<1x32xf32>
    %257 = vector.broadcast %256 : vector<1x32xf32> to vector<8x32xf32>
    %258 = arith.addf %255, %257 : vector<8x32xf32>
    %c0_168 = arith.constant 0 : index
    %c0_169 = arith.constant 0 : index
    %c0_170 = arith.constant 0 : index
    %259 = vector.load %arg7[%c0_168, %c0_169, %c0_170] : memref<1x8x32xf32, #tpu.memory_space<vmem>>, vector<1x8x32xf32>
    %260 = vector.shape_cast %259 : vector<1x8x32xf32> to vector<8x32xf32>
    %261 = vector.shape_cast %258 : vector<8x32xf32> to vector<1x8x32xf32>
    tpu.vector_store %arg7[%c0_168, %c0_169, %c0_170], %261 {strides = array<i32>} : memref<1x8x32xf32, #tpu.memory_space<vmem>>, vector<1x8x32xf32>,
    return
  }
  func.func @transform_0(%arg0: i32, %arg1: i32) -> (i32, i32, i32) {
    %c0_i32 = arith.constant 0 : i32
    %c0_i32_0 = arith.constant 0 : i32
    %c0_i32_1 = arith.constant 0 : i32
    return %arg0, %c0_i32, %c0_i32_0 : i32, i32, i32
  }
  func.func @transform_1(%arg0: i32, %arg1: i32) -> (i32, i32) {
    %c0_i32 = arith.constant 0 : i32
    %c0_i32_0 = arith.constant 0 : i32
    %c0_i32_1 = arith.constant 0 : i32
    return %c0_i32, %c0_i32_0 : i32, i32
  }
  func.func @transform_2(%arg0: i32, %arg1: i32) -> (i32, i32) {
    %c0_i32 = arith.constant 0 : i32
    %c0_i32_0 = arith.constant 0 : i32
    %c0_i32_1 = arith.constant 0 : i32
    return %c0_i32, %c0_i32_0 : i32, i32
  }
  func.func @transform_3(%arg0: i32, %arg1: i32) -> (i32, i32, i32) {
    %c0_i32 = arith.constant 0 : i32
    %c0_i32_0 = arith.constant 0 : i32
    %c0_i32_1 = arith.constant 0 : i32
    %c0_i32_2 = arith.constant 0 : i32
    return %c0_i32, %c0_i32_0, %c0_i32_1 : i32, i32, i32
  }
  func.func @transform_4(%arg0: i32, %arg1: i32) -> (i32, i32) {
    %c0_i32 = arith.constant 0 : i32
    %c0_i32_0 = arith.constant 0 : i32
    %c0_i32_1 = arith.constant 0 : i32
    return %c0_i32, %c0_i32_0 : i32, i32
  }
  func.func @transform_5(%arg0: i32, %arg1: i32) -> (i32, i32, i32) {
    %c0_i32 = arith.constant 0 : i32
    %c0_i32_0 = arith.constant 0 : i32
    return %arg0, %arg1, %c0_i32 : i32, i32, i32
  }
  func.func @transform_6(%arg0: i32, %arg1: i32) -> (i32, i32, i32, i32) {
    %c0_i32 = arith.constant 0 : i32
    %c0_i32_0 = arith.constant 0 : i32
    %c0_i32_1 = arith.constant 0 : i32
    return %arg0, %c0_i32, %arg1, %c0_i32_0 : i32, i32, i32, i32
  }
}

</mosaic_0001>

<llo_original>
// kernel: apla_attention_fused.1
$region0: #{apla_attention_fused.1}
  #allocation0 [shape = 'u32[]', space=smem, size = 0x4, offset = 0x4, fixed_abs, tag = 'smem constant byte address 0x4 - core index']
  #allocation1 [shape = 'u32[72,128]{1,0:T(1,128)}', space=vmem, size = 0x9000, scoped, tag = 'internal scratch']
  #allocation2 [shape = 'bf16[8,64]{1,0:T(8,128)(2,1)}', space=vmem, size = 0x800, scoped, tag = 'scratch operand']
  #allocation3 [shape = 'bf16[8,32]{1,0:T(8,128)(2,1)}', space=vmem, size = 0x800, scoped, tag = 'scratch operand']
  #allocation4 [shape = 'f32[8,32]{1,0:T(8,128)}', space=vmem, size = 0x1000, scoped, tag = 'scratch operand']
  %s0 = inlined_call_operand.hbm [shape: f32[2,8,32], index: 0, kind: input, shape index: {}]
  %s1 = inlined_call_operand.hbm [shape: bf16[32,32], index: 1, kind: input, shape index: {}]
  %s2 = inlined_call_operand.hbm [shape: bf16[32,64], index: 2, kind: input, shape index: {}]
  %s3 = inlined_call_operand.hbm [shape: bf16[8,4,32], index: 3, kind: input, shape index: {}]
  %s4 = inlined_call_operand.vmem [shape: f32[1,32], index: 4, kind: input, shape index: {}]
  %s5 = inlined_call_operand.hbm [shape: f32[2,8,32], index: 5, kind: output, shape index: {0}]
  %s6 = inlined_call_operand.hbm [shape: bf16[2,8,8,8], index: 6, kind: output, shape index: {1}]
  %7 = xla_tuple %s5, %s6
  %s8 = sld [smem:[#allocation0]]
  $region81: #{apla_attention_fused.1} parent=0
    _
  %s10 = ssub.s32 1, %s8
  %s11 = scalar_select 0, %s10, %s8
  $region1: #{apla_attention_fused.1} parent=0
    #allocation5 [shape = 'u8[8192]{0}', space=vmem, size = 0x2000, scoped, tag = 'input window, operand 0']
    #allocation6 [shape = 's32[2]{0}', space=sflag, size = 0x8, scoped, tag = 'scoped memory for apla_attention_fused.1']
    #allocation7 [shape = 's32[2]{0}', space=sflag, size = 0x8, scoped, tag = 'scoped memory for apla_attention_fused.1']
    #allocation8 [shape = 'u8[8192]{0}', space=vmem, size = 0x2000, scoped, tag = 'input window, operand 1, single buffered']
    #allocation9 [shape = 's32[1]{0}', space=sflag, size = 0x4, scoped, tag = 'scoped memory for apla_attention_fused.1']
    #allocation10 [shape = 'u8[8192]{0}', space=vmem, size = 0x2000, scoped, tag = 'input window, operand 2, single buffered']
    #allocation11 [shape = 'u8[8192]{0}', space=vmem, size = 0x2000, scoped, tag = 'input window, operand 3, single buffered']
    #allocation12 [shape = 's32[1]{0}', space=sflag, size = 0x4, scoped, tag = 'scoped memory for apla_attention_fused.1']
    #allocation13 [shape = 'u8[8192]{0}', space=vmem, size = 0x2000, scoped, tag = 'output window, operand 0']
    #allocation14 [shape = 'u8[32768]{0}', space=vmem, size = 0x8000, scoped, tag = 'output window, operand 1']
    #allocation15 [shape = 's32[2]{0}', space=sflag, size = 0x8, scoped, tag = 'scoped memory for apla_attention_fused.1']
    %12 = vsyncpa [#allocation6], 0
    %s13 = scalar_lea.sflag [#allocation6], 1
    %14 = vsyncpa %s13, 0
    %15 = vsyncpa [#allocation9], 0
    %16 = vsyncpa [#allocation12], 0
    %17 = vsyncpa [#allocation7], 0
    %s18 = scalar_lea.sflag [#allocation7], 1
    %19 = vsyncpa %s18, 0
    %20 = vsyncpa [#allocation15], 0
    %s21 = scalar_lea.sflag [#allocation15], 1
    %22 = vsyncpa %s21, 0
    loop: start=0, step=1, limit=4
    $region2: #{apla_attention_fused.1} parent=1 // loop_pre_header
      _
    $region3: #{apla_attention_fused.1} parent=1 // loop_header
      %s24 = sphi 0, %s28
      %p25 = scmp.ge.s32.totalorder %s24, 4
      %s31 = sphi 0, %s43
      %s32 = sphi 0, %s39
      %s33 = sphi 0, %s31
      %s34 = sphi 0, %s32
      %s35 = sphi 0, %s33
      %s36 = sphi 0, %s34
      %s46 = sphi 0, %s48
      %s49 = sphi 0, %s46
      %s50 = sphi 0, %s49
      %s66 = sphi 0, %s50
      %s70 = sphi 0, %s70
      %s72 = sphi 0, %s70
      %s73 = sphi 0, %s72
      %s87 = sphi 0, %s73
      %s91 = sphi 0, %s91
      %s93 = sphi 0, %s91
      %s94 = sphi 0, %s93
      %s108 = sphi 0, %s94
      %s112 = sphi 0, %s112
      %s114 = sphi 0, %s112
      %s115 = sphi 0, %s114
      %s129 = sphi 0, %s115
      %s133 = sphi 0, %s133
      %s135 = sphi 0, %s133
      %s136 = sphi 0, %s135
      %s150 = sphi 0, %s136
      %s158 = sphi 0, %s160
      %s161 = sphi 0, %s158
      %s162 = sphi 0, %s161
      %s178 = sphi 0, %s162
      %s186 = sphi 0, %s188
      %s189 = sphi 0, %s186
      %s190 = sphi 0, %s189
      %s206 = sphi 0, %s190
    $region4: #{apla_attention_fused.1} parent=1 // loop_header_branch
      %27 = sbr.rel (%p25) target = $region8
    $region5: #{apla_attention_fused.1} parent=1 // loop_body
      %s29 = ssub.s32 %s24, 1
      %s30 = ssub.s32 %s24, 2
      %s37 = sadd.s32 1, %s32
      %p38 = scmp.ge.s32.totalorder %s37, 1
      %s39 = scalar_select %p38, 0, %s37
      %s40 = sadd.s32 1, %s31
      %s41 = scalar_select %p38, %s40, %s31
      %p42 = scmp.ge.s32.totalorder %s41, 2
      %s43 = scalar_select %p42, 0, %s41
      %s44 = ssub.s32 %s31, %s43
      %p45 = scmp.eq.s32.totalorder %s44, 0
      %s47 = sadd.s32 %s46, 1
      %s48 = scalar_select %p45, %s46, %s47
      %p51 = pneg %p45
      %p52 = scmp.eq.s32.totalorder %s24, 1
      %p53 = por %p51, %p52
      %p54 = scmp.ne.s32.totalorder %s46, %s49
      %p55 = scmp.eq.s32.totalorder %s24, 0
      %p56 = por %p54, %p55
      %p57 = scmp.ne.s32.totalorder %s46, %s49
      %p58 = scmp.eq.s32.totalorder %s29, 1
      %p59 = por %p57, %p58
      %p60 = scmp.ne.s32.totalorder %s49, %s50
      %p61 = scmp.eq.s32.totalorder %s29, 0
      %p62 = por %p60, %p61
      %p63 = scmp.ne.s32.totalorder %s49, %s50
      %p64 = scmp.eq.s32.totalorder %s30, 1
      %p65 = por %p63, %p64
      %p67 = scmp.ne.s32.totalorder %s50, %s66
      %p68 = scmp.eq.s32.totalorder %s30, 0
      %p69 = por %p67, %p68
      %s71 = sadd.s32 %s70, 1
      %p74 = scmp.eq.s32.totalorder %s24, 1
      %p75 = scmp.ne.s32.totalorder %s70, %s72
      %p76 = scmp.eq.s32.totalorder %s24, 0
      %p77 = por %p75, %p76
      %p78 = scmp.ne.s32.totalorder %s70, %s72
      %p79 = scmp.eq.s32.totalorder %s29, 1
      %p80 = por %p78, %p79
      %p81 = scmp.ne.s32.totalorder %s72, %s73
      %p82 = scmp.eq.s32.totalorder %s29, 0
      %p83 = por %p81, %p82
      %p84 = scmp.ne.s32.totalorder %s72, %s73
      %p85 = scmp.eq.s32.totalorder %s30, 1
      %p86 = por %p84, %p85
      %p88 = scmp.ne.s32.totalorder %s73, %s87
      %p89 = scmp.eq.s32.totalorder %s30, 0
      %p90 = por %p88, %p89
      %s92 = sadd.s32 %s91, 1
      %p95 = scmp.eq.s32.totalorder %s24, 1
      %p96 = scmp.ne.s32.totalorder %s91, %s93
      %p97 = scmp.eq.s32.totalorder %s24, 0
      %p98 = por %p96, %p97
      %p99 = scmp.ne.s32.totalorder %s91, %s93
      %p100 = scmp.eq.s32.totalorder %s29, 1
      %p101 = por %p99, %p100
      %p102 = scmp.ne.s32.totalorder %s93, %s94
      %p103 = scmp.eq.s32.totalorder %s29, 0
      %p104 = por %p102, %p103
      %p105 = scmp.ne.s32.totalorder %s93, %s94
      %p106 = scmp.eq.s32.totalorder %s30, 1
      %p107 = por %p105, %p106
      %p109 = scmp.ne.s32.totalorder %s94, %s108
      %p110 = scmp.eq.s32.totalorder %s30, 0
      %p111 = por %p109, %p110
      %s113 = sadd.s32 %s112, 1
      %p116 = scmp.eq.s32.totalorder %s24, 1
      %p117 = scmp.ne.s32.totalorder %s112, %s114
      %p118 = scmp.eq.s32.totalorder %s24, 0
      %p119 = por %p117, %p118
      %p120 = scmp.ne.s32.totalorder %s112, %s114
      %p121 = scmp.eq.s32.totalorder %s29, 1
      %p122 = por %p120, %p121
      %p123 = scmp.ne.s32.totalorder %s114, %s115
      %p124 = scmp.eq.s32.totalorder %s29, 0
      %p125 = por %p123, %p124
      %p126 = scmp.ne.s32.totalorder %s114, %s115
      %p127 = scmp.eq.s32.totalorder %s30, 1
      %p128 = por %p126, %p127
      %p130 = scmp.ne.s32.totalorder %s115, %s129
      %p131 = scmp.eq.s32.totalorder %s30, 0
      %p132 = por %p130, %p131
      %s134 = sadd.s32 %s133, 1
      %p137 = scmp.eq.s32.totalorder %s24, 1
      %p138 = scmp.ne.s32.totalorder %s133, %s135
      %p139 = scmp.eq.s32.totalorder %s24, 0
      %p140 = por %p138, %p139
      %p141 = scmp.ne.s32.totalorder %s133, %s135
      %p142 = scmp.eq.s32.totalorder %s29, 1
      %p143 = por %p141, %p142
      %p144 = scmp.ne.s32.totalorder %s135, %s136
      %p145 = scmp.eq.s32.totalorder %s29, 0
      %p146 = por %p144, %p145
      %p147 = scmp.ne.s32.totalorder %s135, %s136
      %p148 = scmp.eq.s32.totalorder %s30, 1
      %p149 = por %p147, %p148
      %p151 = scmp.ne.s32.totalorder %s136, %s150
      %p152 = scmp.eq.s32.totalorder %s30, 0
      %p153 = por %p151, %p152
      %s154 = ssub.s32 %s31, %s43
      %s155 = ssub.s32 %s32, %s39
      %s156 = sor.u32 %s154, %s155
      %p157 = scmp.eq.s32.totalorder %s156, 0
      %s159 = sadd.s32 %s158, 1
      %s160 = scalar_select %p157, %s158, %s159
      %p163 = pneg %p157
      %p164 = scmp.eq.s32.totalorder %s24, 1
      %p165 = por %p163, %p164
      %p166 = scmp.ne.s32.totalorder %s158, %s161
      %p167 = scmp.eq.s32.totalorder %s24, 0
      %p168 = por %p166, %p167
      %p169 = scmp.ne.s32.totalorder %s158, %s161
      %p170 = scmp.eq.s32.totalorder %s29, 1
      %p171 = por %p169, %p170
      %p172 = scmp.ne.s32.totalorder %s161, %s162
      %p173 = scmp.eq.s32.totalorder %s29, 0
      %p174 = por %p172, %p173
      %p175 = scmp.ne.s32.totalorder %s161, %s162
      %p176 = scmp.eq.s32.totalorder %s30, 1
      %p177 = por %p175, %p176
      %p179 = scmp.ne.s32.totalorder %s162, %s178
      %p180 = scmp.eq.s32.totalorder %s30, 0
      %p181 = por %p179, %p180
      %s182 = ssub.s32 %s31, %s43
      %s183 = ssub.s32 %s32, %s39
      %s184 = sor.u32 %s182, %s183
      %p185 = scmp.eq.s32.totalorder %s184, 0
      %s187 = sadd.s32 %s186, 1
      %s188 = scalar_select %p185, %s186, %s187
      %p191 = pneg %p185
      %p192 = scmp.eq.s32.totalorder %s24, 1
      %p193 = por %p191, %p192
      %p194 = scmp.ne.s32.totalorder %s186, %s189
      %p195 = scmp.eq.s32.totalorder %s24, 0
      %p196 = por %p194, %p195
      %p197 = scmp.ne.s32.totalorder %s186, %s189
      %p198 = scmp.eq.s32.totalorder %s29, 1
      %p199 = por %p197, %p198
      %p200 = scmp.ne.s32.totalorder %s189, %s190
      %p201 = scmp.eq.s32.totalorder %s29, 0
      %p202 = por %p200, %p201
      %p203 = scmp.ne.s32.totalorder %s189, %s190
      %p204 = scmp.eq.s32.totalorder %s30, 1
      %p205 = por %p203, %p204
      %p207 = scmp.ne.s32.totalorder %s190, %s206
      %p208 = scmp.eq.s32.totalorder %s30, 0
      %p209 = por %p207, %p208
      %p210 = scmp.le.s32.totalorder 1, %s24
      %p211 = scmp.lt.s32.totalorder %s24, 3
      %p212 = pnand %p210, %p211
      %p213 = pneg %p212
      // Predicated region
      $region9: #{apla_attention_fused.1} parent=5 // pred_check
        _
      $region10: #{apla_attention_fused.1} parent=5 // pred_check_branch
        %215 = sbr.rel (%p212) target = $region12
      $region11: #{apla_attention_fused.1} parent=5 // pred_region
        %s216 = ssub.s32 %s24, 1
        // Predicated region
        $region13: #{apla_attention_fused.1} parent=11 // pred_check
          %p217 = pneg %p83
        $region14: #{apla_attention_fused.1} parent=11 // pred_check_branch
          %219 = sbr.rel (%p217) target = $region16
        $region15: #{apla_attention_fused.1} parent=11 // pred_region
          %221 = vsyncadd [#allocation9], 0
          %s222 = sshll.u32 %s1, 4
          %s223 = int_to_ptr.hbm [resolvable:$true] %s222
          %s224 = sshll.u32 [#allocation8], 4
          %s225 = int_to_ptr.vmem [resolvable:$true] %s224
          %230 = dma.hbm_to_vmem [thread:$0]  %s223, 256, %s225, [#allocation9], 64, 64, 4
        $region16: #{apla_attention_fused.1} parent=11 // pred_fallthru
          _
        // Predicated region
        $region17: #{apla_attention_fused.1} parent=11 // pred_check
          %p231 = pneg %p104
        $region18: #{apla_attention_fused.1} parent=11 // pred_check_branch
          %233 = sbr.rel (%p231) target = $region20
        $region19: #{apla_attention_fused.1} parent=11 // pred_region
          %235 = vsyncadd [#allocation9], 0
          %s236 = sshll.u32 %s2, 4
          %s237 = int_to_ptr.hbm [resolvable:$true] %s236
          %s238 = sshll.u32 [#allocation10], 4
          %s239 = int_to_ptr.vmem [resolvable:$true] %s238
          %244 = dma.hbm_to_vmem [thread:$0]  %s237, 256, %s239, [#allocation9], 64, 64, 4
        $region20: #{apla_attention_fused.1} parent=11 // pred_fallthru
          _
        // Predicated region
        $region21: #{apla_attention_fused.1} parent=11 // pred_check
          %p245 = pneg %p125
        $region22: #{apla_attention_fused.1} parent=11 // pred_check_branch
          %247 = sbr.rel (%p245) target = $region24
        $region23: #{apla_attention_fused.1} parent=11 // pred_region
          %249 = vsyncadd [#allocation12], 0
          %s250 = sshll.u32 %s3, 4
          %s251 = int_to_ptr.hbm [resolvable:$true] %s250
          %s252 = sshll.u32 [#allocation11], 4
          %s253 = int_to_ptr.vmem [resolvable:$true] %s252
          %258 = dma.hbm_to_vmem [thread:$0]  %s251, 256, %s253, [#allocation12], 32, 32, 2
        $region24: #{apla_attention_fused.1} parent=11 // pred_fallthru
          _
        // Predicated region
        $region25: #{apla_attention_fused.1} parent=11 // pred_check
          %p259 = pneg %p146
        $region26: #{apla_attention_fused.1} parent=11 // pred_check_branch
          %261 = sbr.rel (%p259) target = $region28
        $region27: #{apla_attention_fused.1} parent=11 // pred_region
          _
        $region28: #{apla_attention_fused.1} parent=11 // pred_fallthru
          _
      $region12: #{apla_attention_fused.1} parent=5 // pred_fallthru
        _
      %p262 = scmp.lt.s32.totalorder %s24, 2
      // Predicated region
      $region29: #{apla_attention_fused.1} parent=5 // pred_check
        %p263 = pneg %p262
      $region30: #{apla_attention_fused.1} parent=5 // pred_check_branch
        %265 = sbr.rel (%p263) target = $region32
      $region31: #{apla_attention_fused.1} parent=5 // pred_region
        // Predicated region
        $region33: #{apla_attention_fused.1} parent=31 // pred_check
          %p266 = pneg %p56
        $region34: #{apla_attention_fused.1} parent=31 // pred_check_branch
          %268 = sbr.rel (%p266) target = $region36
        $region35: #{apla_attention_fused.1} parent=31 // pred_region
          %s269 = sand.u32 %s46, 1
          %s270 = scalar_lea.sflag [#allocation6], %s269
          %s271 = sand.u32 %s46, 1
          %s272 = smul.addr %s271, 8
          %s273 = scalar_lea.vmem [#allocation5], %s272
          %275 = vsyncadd %s270, 0
          %s276 = smul.addr %s31, 8
          %s277 = scalar_lea.hbm %s0, %s276
          %s279 = sshll.u32 %s277, 4
          %s280 = int_to_ptr.hbm [resolvable:$true] %s279
          %s281 = sshll.u32 %s273, 4
          %s282 = int_to_ptr.vmem [resolvable:$true] %s281
          %284 = dma.hbm_to_vmem [thread:$0]  %s280, 128, %s282, %s270
        $region36: #{apla_attention_fused.1} parent=31 // pred_fallthru
          _
      $region32: #{apla_attention_fused.1} parent=5 // pred_fallthru
        _
      %p285 = scmp.le.s32.totalorder 1, %s24
      %p286 = scmp.lt.s32.totalorder %s24, 3
      %p287 = pnand %p285, %p286
      %p288 = pneg %p287
      // Predicated region
      $region37: #{apla_attention_fused.1} parent=5 // pred_check
        _
      $region38: #{apla_attention_fused.1} parent=5 // pred_check_branch
        %290 = sbr.rel (%p287) target = $region40
      $region39: #{apla_attention_fused.1} parent=5 // pred_region
        %s291 = ssub.s32 %s24, 1
        %s292 = sand.u32 %s49, 1
        %s293 = scalar_lea.sflag [#allocation6], %s292
        %s294 = sand.u32 %s49, 1
        %s295 = smul.addr %s294, 8
        %s296 = scalar_lea.vmem [#allocation5], %s295
        // Predicated region
        $region41: #{apla_attention_fused.1} parent=39 // pred_check
          %p297 = pneg %p62
        $region42: #{apla_attention_fused.1} parent=39 // pred_check_branch
          %299 = sbr.rel (%p297) target = $region44
        $region43: #{apla_attention_fused.1} parent=39 // pred_region
          %301 = dma.done %s293, 128
        $region44: #{apla_attention_fused.1} parent=39 // pred_fallthru
          _
        // Predicated region
        $region45: #{apla_attention_fused.1} parent=39 // pred_check
          %p302 = pneg %p83
        $region46: #{apla_attention_fused.1} parent=39 // pred_check_branch
          %304 = sbr.rel (%p302) target = $region48
        $region47: #{apla_attention_fused.1} parent=39 // pred_region
          %306 = dma.done [#allocation9], 256
        $region48: #{apla_attention_fused.1} parent=39 // pred_fallthru
          _
        // Predicated region
        $region49: #{apla_attention_fused.1} parent=39 // pred_check
          %p307 = pneg %p104
        $region50: #{apla_attention_fused.1} parent=39 // pred_check_branch
          %309 = sbr.rel (%p307) target = $region52
        $region51: #{apla_attention_fused.1} parent=39 // pred_region
          %311 = dma.done [#allocation9], 256
        $region52: #{apla_attention_fused.1} parent=39 // pred_fallthru
          _
        // Predicated region
        $region53: #{apla_attention_fused.1} parent=39 // pred_check
          %p312 = pneg %p125
        $region54: #{apla_attention_fused.1} parent=39 // pred_check_branch
          %314 = sbr.rel (%p312) target = $region56
        $region55: #{apla_attention_fused.1} parent=39 // pred_region
          %316 = dma.done [#allocation12], 256
        $region56: #{apla_attention_fused.1} parent=39 // pred_fallthru
          _
        %s317 = sand.u32 %s49, 1
        %s318 = scalar_lea.sflag [#allocation6], %s317
        %s319 = sand.u32 %s49, 1
        %s320 = smul.addr %s319, 8
        %s321 = scalar_lea.vmem [#allocation5], %s320
        %p322 = pneg %p62
        %p323 = pneg %p59
        %p324 = pneg %p83
        %p325 = pneg %p80
        %p326 = pneg %p104
        %p327 = pneg %p101
        %p328 = pneg %p125
        %p329 = pneg %p122
        %p330 = pneg %p146
        %p331 = pneg %p143
        %p332 = pneg %p174
        %p333 = pneg %p171
        %s334 = sand.u32 %s161, 1
        %s335 = scalar_lea.sflag [#allocation7], %s334
        %s336 = sand.u32 %s161, 1
        %s337 = smul.addr %s336, 8
        %s338 = scalar_lea.vmem [#allocation13], %s337
        %p339 = pneg %p202
        %p340 = pneg %p199
        %s341 = sand.u32 %s189, 1
        %s342 = scalar_lea.sflag [#allocation15], %s341
        %s343 = sand.u32 %s189, 1
        %s344 = smul.addr %s343, 32
        %s345 = scalar_lea.vmem [#allocation14], %s344
        %p347 = scmp.eq.s32.totalorder %s34, 0
        // Predicated region
        $region57: #{apla_attention_fused.1} parent=39 // pred_check
          %p348 = pneg %p347
        $region58: #{apla_attention_fused.1} parent=39 // pred_check_branch
          %350 = sbr.rel (%p348) target = $region60
        $region59: #{apla_attention_fused.1} parent=39 // pred_region
          %v351 = vld [vmem:[%s296] sm:$0xff]
          %v352 = vpack.c.bf16 %v351, %v351
          %v353 = vld [vmem:[#allocation10] sm:$0xf]
          %v354 = vld [vmem:[#allocation10 + $0x4] sm:$0xf]
          %v355 = vld [vmem:[#allocation10 + $0x8] sm:$0xf]
          %v356 = vld [vmem:[#allocation10 + $0xc] sm:$0xf]
          %v361 = vunpack.c.l.b16 %v353
          %v362 = vunpack.c.l.b16 %v354
          %v363 = vunpack.c.l.b16 %v355
          %v364 = vunpack.c.l.b16 %v356
          %v365 = vpack.c.b16 %v362, %v361
          %v366 = vpack.c.b16 %v364, %v363
          %vm369 = vcmask 261120
          %v371 = vsel %vm369, %v352, 0
          %373 = vmatpush.bf16.msra.mxu0 0
          %374 = vmatpush.bf16.msra.mxu0 0
          %375 = vmatpush.bf16.msra.mxu0 0
          %376 = vmatpush.bf16.msra.mxu0 0
          %377 = vmatpush.bf16.msra.mxu0 0
          %378 = vmatpush.bf16.msra.mxu0 0
          %379 = vmatpush.bf16.msra.mxu0 %v366
          %380 = vmatpush.bf16.msra.mxu0 %v365
          %381 = vmatmul.bf16.gmra.mxu0 %v371
          %v382 = vpop.f32.mrf.mxu0
          %v383 = vadd.f32 0.0, %v382
          %v384 = vpop.f32.mrf.mxu0
          %385 = vdwg.mxu0
          %v386 = vpack.c.bf16 %v383, %v383
          %vm387 = vcmask 519168
          %388 = vst.msk [vmem:[#allocation2] sm:$0xf] %vm387, %v386
        $region60: #{apla_attention_fused.1} parent=39 // pred_fallthru
          _
        %s389 = smul.u32 %s34, 8
        %s390 = scalar_lea.vmem %s296, %s389 [#allocation5]
        %v391 = vld [vmem:[%s390] sm:$0xff]
        %v392 = vpack.c.bf16 %v391, %v391
        %v393 = vld [vmem:[#allocation8] sm:$0xf]
        %v394 = vld [vmem:[#allocation8 + $0x4] sm:$0xf]
        %v395 = vld [vmem:[#allocation8 + $0x8] sm:$0xf]
        %v396 = vld [vmem:[#allocation8 + $0xc] sm:$0xf]
        %v401 = vunpack.c.l.b16 %v393
        %v402 = vunpack.c.l.b16 %v394
        %v403 = vunpack.c.l.b16 %v395
        %v404 = vunpack.c.l.b16 %v396
        %v405 = vpack.c.b16 %v402, %v401
        %v406 = vpack.c.b16 %v404, %v403
        %vm409 = vcmask 261120
        %v411 = vsel %vm409, %v392, 0
        %413 = vmatpush.bf16.msra.mxu0 0
        %414 = vmatpush.bf16.msra.mxu0 0
        %415 = vmatpush.bf16.msra.mxu0 0
        %416 = vmatpush.bf16.msra.mxu0 0
        %417 = vmatpush.bf16.msra.mxu0 0
        %418 = vmatpush.bf16.msra.mxu0 0
        %419 = vmatpush.bf16.msra.mxu0 %v406
        %420 = vmatpush.bf16.msra.mxu0 %v405
        %421 = vmatmul.bf16.gmra.mxu0 %v411
        %v422 = vpop.f32.mrf.mxu0
        %v423 = vadd.f32 0.0, %v422
        %v424 = vpop.f32.mrf.mxu0
        %425 = vdwg.mxu0
        %v426 = vpack.c.bf16 %v423, %v423
        %vm427 = vcmask 257024
        %428 = vst.msk [vmem:[#allocation3] sm:$0xf] %vm427, %v426
        %429 = vst.msk [vmem:[#allocation4] sm:$0xff] %vm409, 0.0
        %v430 = vld [vmem:[#allocation3] sm:$0xf]
        %v431 = vld [vmem:[#allocation2] sm:$0xf]
        %vm432 = vcmask 31744
        %v434 = vsel %vm432, %v430, 0
        %v437 = vsel %vm432, %v431, 0
        %439 = vmatpush.bf16.xpose.msra.mxu0 0
        %440 = vmatpush.bf16.xpose.msra.mxu0 0
        %441 = vmatpush.bf16.xpose.msra.mxu0 0
        %442 = vmatpush.bf16.xpose.msra.mxu0 0
        %443 = vmatpush.bf16.xpose.msra.mxu0 0
        %444 = vmatpush.bf16.xpose.msra.mxu0 0
        %445 = vmatpush.bf16.xpose.msra.mxu0 0
        %446 = vmatpush.bf16.xpose.msra.mxu0 %v437
        %447 = vmatmul.bf16.gmra.mxu0 %v434
        %v448 = vpop.f32.mrf.mxu0
        %v449 = vadd.f32 0.0, %v448
        %v450 = vpop.f32.mrf.mxu0
        %451 = vdwg.mxu0
        %vm452 = vcmask 64512
        %v453 = vsel %vm452, %v449, -inf
        %454 = vmax.xlane.f32.xlu0 %v453
        %v455 = vpop.xlane.xlu0 %454
        %v456 = vsub.f32 %v449, %v455
        %v457 = vmul.f32 %v456, 1.442695
        %v458 = vpow.pop %v457
        %v459 = vsel %vm452, %v458, 0.0
        %460 = vadd.xlane.f32.xlu0 %v459
        %v461 = vpop.xlane.xlu0 %460
        %v462 = vrcp.pop %v461
        %v463 = vmul.f32 %v461, %v462
        %v464 = vsub.f32 1.0, %v463
        %v465 = vmul.f32 %v462, %v464
        %v466 = vadd.f32 %v462, %v465
        %vm467 = vweird.f32 %v461
        %vm468 = vweird.f32 %v462
        %vm469 = vmor %vm467, %vm468
        %v470 = vsel %vm469, %v462, %v466
        %v471 = vand.u32 2147483647, %v461
        %vm472 = vcmp.eq.f32.partialorder %v471, 8.507059e+37
        %v473 = vand.u32 %v461, 2147483648
        %v474 = vor.u32 1.1754944e-38, %v473
        %v475 = vsel %vm472, %v474, %v470
        %v476 = vmul.f32 %v458, %v475
        %v477 = vpack.c.bf16 %v476, %v476
        %vm478 = vcmask 60416
        %479 = vst.msk [vmem:[%s345] sm:$0xf] %vm478, %v477
        %v480 = vrcp.pop %v461
        %v481 = vmul.f32 %v458, %v480
        %v482 = vpack.c.bf16 %v481, %v481
        %v484 = vunpack.c.l.b16 %v431
        %v485 = vpack.c.b16 %v484, %v484
        %486 = vrot.lane.b32.xlu0 %v485, 96
        %v487 = vpop.permute.xlu0 %486
        %v489 = vsel %vm452, %v482, 0
        %vm491 = vcmask 1043456
        %v493 = vsel %vm491, %v487, 0
        %495 = vmatpush.bf16.msra.mxu0 0
        %496 = vmatpush.bf16.msra.mxu0 0
        %497 = vmatpush.bf16.msra.mxu0 0
        %498 = vmatpush.bf16.msra.mxu0 0
        %499 = vmatpush.bf16.msra.mxu0 0
        %500 = vmatpush.bf16.msra.mxu0 0
        %501 = vmatpush.bf16.msra.mxu0 0
        %502 = vmatpush.bf16.msra.mxu0 %v493
        %503 = vmatmul.bf16.gmra.mxu0 %v489
        %v504 = vpop.f32.mrf.mxu0
        %v505 = vadd.f32 0.0, %v504
        %v506 = vpop.f32.mrf.mxu0
        %507 = vdwg.mxu0
        %v508 = vld [vmem:[#allocation4] sm:$0xff]
        %v509 = vpack.c.bf16 %v505, %v505
        %v510 = vld [vmem:[#allocation11] sm:$0x3]
        %v512 = vsel %vm432, %v509, 0
        %vm514 = vcmask 1041408
        %v516 = vsel %vm514, %v510, 0
        %518 = vmatpush.bf16.msra.mxu0 0
        %519 = vmatpush.bf16.msra.mxu0 0
        %520 = vmatpush.bf16.msra.mxu0 0
        %521 = vmatpush.bf16.msra.mxu0 0
        %522 = vmatpush.bf16.msra.mxu0 0
        %523 = vmatpush.bf16.msra.mxu0 0
        %524 = vmatpush.bf16.msra.mxu0 0
        %525 = vmatpush.bf16.msra.mxu0 %v516
        %526 = vmatmul.bf16.gmra.mxu0 %v512
        %v527 = vpop.f32.mrf.mxu0
        %v528 = vadd.f32 0.0, %v527
        %v529 = vpop.f32.mrf.mxu0
        %530 = vdwg.mxu0
        %v531 = vadd.f32 %v508, %v528
        %532 = vst.msk [vmem:[#allocation4] sm:$0xff] %vm409, %v531
        %v533 = vld [vmem:[#allocation3] sm:$0xf]
        %v534 = vld [vmem:[#allocation2] sm:$0xf]
        %v536 = vunpack.c.l.b16 %v533
        %v537 = vpack.c.b16 %v536, %v536
        %538 = vrot.lane.b32.xlu0 %v537, 124
        %v539 = vpop.permute.xlu0 %538
        %v541 = vunpack.c.l.b16 %v534
        %v542 = vpack.c.b16 %v541, %v541
        %543 = vrot.lane.b32.xlu0 %v542, 124
        %v544 = vpop.permute.xlu0 %543
        %v546 = vsel %vm432, %v539, 0
        %v549 = vsel %vm432, %v544, 0
        %551 = vmatpush.bf16.xpose.msra.mxu0 0
        %552 = vmatpush.bf16.xpose.msra.mxu0 0
        %553 = vmatpush.bf16.xpose.msra.mxu0 0
        %554 = vmatpush.bf16.xpose.msra.mxu0 0
        %555 = vmatpush.bf16.xpose.msra.mxu0 0
        %556 = vmatpush.bf16.xpose.msra.mxu0 0
        %557 = vmatpush.bf16.xpose.msra.mxu0 0
        %558 = vmatpush.bf16.xpose.msra.mxu0 %v549
        %559 = vmatmul.bf16.gmra.mxu0 %v546
        %v560 = vpop.f32.mrf.mxu0
        %v561 = vadd.f32 0.0, %v560
        %v562 = vpop.f32.mrf.mxu0
        %563 = vdwg.mxu0
        %v564 = vsel %vm452, %v561, -inf
        %565 = vmax.xlane.f32.xlu0 %v564
        %v566 = vpop.xlane.xlu0 %565
        %v567 = vsub.f32 %v561, %v566
        %v568 = vmul.f32 %v567, 1.442695
        %v569 = vpow.pop %v568
        %v570 = vsel %vm452, %v569, 0.0
        %571 = vadd.xlane.f32.xlu0 %v570
        %v572 = vpop.xlane.xlu0 %571
        %v573 = vrcp.pop %v572
        %v574 = vmul.f32 %v572, %v573
        %v575 = vsub.f32 1.0, %v574
        %v576 = vmul.f32 %v573, %v575
        %v577 = vadd.f32 %v573, %v576
        %vm578 = vweird.f32 %v572
        %vm579 = vweird.f32 %v573
        %vm580 = vmor %vm578, %vm579
        %v581 = vsel %vm580, %v573, %v577
        %v582 = vand.u32 2147483647, %v572
        %vm583 = vcmp.eq.f32.partialorder %v582, 8.507059e+37
        %v584 = vand.u32 %v572, 2147483648
        %v585 = vor.u32 1.1754944e-38, %v584
        %v586 = vsel %vm583, %v585, %v581
        %v587 = vmul.f32 %v569, %v586
        %v588 = vpack.c.bf16 %v587, %v587
        %s589 = scalar_lea.vmem %s345, 4 [#allocation14]
        %590 = vst.msk [vmem:[%s589] sm:$0xf] %vm478, %v588
        %v591 = vrcp.pop %v572
        %v592 = vmul.f32 %v569, %v591
        %v593 = vpack.c.bf16 %v592, %v592
        %594 = vrot.lane.b32.xlu0 %v542, 92
        %v595 = vpop.permute.xlu0 %594
        %v597 = vsel %vm452, %v593, 0
        %v600 = vsel %vm491, %v595, 0
        %602 = vmatpush.bf16.msra.mxu0 0
        %603 = vmatpush.bf16.msra.mxu0 0
        %604 = vmatpush.bf16.msra.mxu0 0
        %605 = vmatpush.bf16.msra.mxu0 0
        %606 = vmatpush.bf16.msra.mxu0 0
        %607 = vmatpush.bf16.msra.mxu0 0
        %608 = vmatpush.bf16.msra.mxu0 0
        %609 = vmatpush.bf16.msra.mxu0 %v600
        %610 = vmatmul.bf16.gmra.mxu0 %v597
        %v611 = vpop.f32.mrf.mxu0
        %v612 = vadd.f32 0.0, %v611
        %v613 = vpop.f32.mrf.mxu0
        %614 = vdwg.mxu0
        %v615 = vld [vmem:[#allocation4] sm:$0xff]
        %v616 = vpack.c.bf16 %v612, %v612
        %s617 = scalar_lea.vmem [#allocation11], 2
        %v618 = vld [vmem:[%s617] sm:$0x3]
        %v620 = vsel %vm432, %v616, 0
        %v623 = vsel %vm514, %v618, 0
        %625 = vmatpush.bf16.msra.mxu0 0
        %626 = vmatpush.bf16.msra.mxu0 0
        %627 = vmatpush.bf16.msra.mxu0 0
        %628 = vmatpush.bf16.msra.mxu0 0
        %629 = vmatpush.bf16.msra.mxu0 0
        %630 = vmatpush.bf16.msra.mxu0 0
        %631 = vmatpush.bf16.msra.mxu0 0
        %632 = vmatpush.bf16.msra.mxu0 %v623
        %633 = vmatmul.bf16.gmra.mxu0 %v620
        %v634 = vpop.f32.mrf.mxu0
        %v635 = vadd.f32 0.0, %v634
        %v636 = vpop.f32.mrf.mxu0
        %637 = vdwg.mxu0
        %v638 = vadd.f32 %v615, %v635
        %639 = vst.msk [vmem:[#allocation4] sm:$0xff] %vm409, %v638
        %v640 = vld [vmem:[#allocation3] sm:$0xf]
        %v641 = vld [vmem:[#allocation2] sm:$0xf]
        %v643 = vunpack.c.l.b16 %v640
        %v644 = vpack.c.b16 %v643, %v643
        %645 = vrot.lane.b32.xlu0 %v644, 120
        %v646 = vpop.permute.xlu0 %645
        %v648 = vunpack.c.l.b16 %v641
        %v649 = vpack.c.b16 %v648, %v648
        %650 = vrot.lane.b32.xlu0 %v649, 120
        %v651 = vpop.permute.xlu0 %650
        %v653 = vsel %vm432, %v646, 0
        %v656 = vsel %vm432, %v651, 0
        %658 = vmatpush.bf16.xpose.msra.mxu0 0
        %659 = vmatpush.bf16.xpose.msra.mxu0 0
        %660 = vmatpush.bf16.xpose.msra.mxu0 0
        %661 = vmatpush.bf16.xpose.msra.mxu0 0
        %662 = vmatpush.bf16.xpose.msra.mxu0 0
        %663 = vmatpush.bf16.xpose.msra.mxu0 0
        %664 = vmatpush.bf16.xpose.msra.mxu0 0
        %665 = vmatpush.bf16.xpose.msra.mxu0 %v656
        %666 = vmatmul.bf16.gmra.mxu0 %v653
        %v667 = vpop.f32.mrf.mxu0
        %v668 = vadd.f32 0.0, %v667
        %v669 = vpop.f32.mrf.mxu0
        %670 = vdwg.mxu0
        %v671 = vsel %vm452, %v668, -inf
        %672 = vmax.xlane.f32.xlu0 %v671
        %v673 = vpop.xlane.xlu0 %672
        %v674 = vsub.f32 %v668, %v673
        %v675 = vmul.f32 %v674, 1.442695
        %v676 = vpow.pop %v675
        %v677 = vsel %vm452, %v676, 0.0
        %678 = vadd.xlane.f32.xlu0 %v677
        %v679 = vpop.xlane.xlu0 %678
        %v680 = vrcp.pop %v679
        %v681 = vmul.f32 %v679, %v680
        %v682 = vsub.f32 1.0, %v681
        %v683 = vmul.f32 %v680, %v682
        %v684 = vadd.f32 %v680, %v683
        %vm685 = vweird.f32 %v679
        %vm686 = vweird.f32 %v680
        %vm687 = vmor %vm685, %vm686
        %v688 = vsel %vm687, %v680, %v684
        %v689 = vand.u32 2147483647, %v679
        %vm690 = vcmp.eq.f32.partialorder %v689, 8.507059e+37
        %v691 = vand.u32 %v679, 2147483648
        %v692 = vor.u32 1.1754944e-38, %v691
        %v693 = vsel %vm690, %v692, %v688
        %v694 = vmul.f32 %v676, %v693
        %v695 = vpack.c.bf16 %v694, %v694
        %s696 = scalar_lea.vmem %s345, 8 [#allocation14]
        %697 = vst.msk [vmem:[%s696] sm:$0xf] %vm478, %v695
        %v698 = vrcp.pop %v679
        %v699 = vmul.f32 %v676, %v698
        %v700 = vpack.c.bf16 %v699, %v699
        %701 = vrot.lane.b32.xlu0 %v649, 88
        %v702 = vpop.permute.xlu0 %701
        %v704 = vsel %vm452, %v700, 0
        %v707 = vsel %vm491, %v702, 0
        %709 = vmatpush.bf16.msra.mxu0 0
        %710 = vmatpush.bf16.msra.mxu0 0
        %711 = vmatpush.bf16.msra.mxu0 0
        %712 = vmatpush.bf16.msra.mxu0 0
        %713 = vmatpush.bf16.msra.mxu0 0
        %714 = vmatpush.bf16.msra.mxu0 0
        %715 = vmatpush.bf16.msra.mxu0 0
        %716 = vmatpush.bf16.msra.mxu0 %v707
        %717 = vmatmul.bf16.gmra.mxu0 %v704
        %v718 = vpop.f32.mrf.mxu0
        %v719 = vadd.f32 0.0, %v718
        %v720 = vpop.f32.mrf.mxu0
        %721 = vdwg.mxu0
        %v722 = vld [vmem:[#allocation4] sm:$0xff]
        %v723 = vpack.c.bf16 %v719, %v719
        %s724 = scalar_lea.vmem [#allocation11], 4
        %v725 = vld [vmem:[%s724] sm:$0x3]
        %v727 = vsel %vm432, %v723, 0
        %v730 = vsel %vm514, %v725, 0
        %732 = vmatpush.bf16.msra.mxu0 0
        %733 = vmatpush.bf16.msra.mxu0 0
        %734 = vmatpush.bf16.msra.mxu0 0
        %735 = vmatpush.bf16.msra.mxu0 0
        %736 = vmatpush.bf16.msra.mxu0 0
        %737 = vmatpush.bf16.msra.mxu0 0
        %738 = vmatpush.bf16.msra.mxu0 0
        %739 = vmatpush.bf16.msra.mxu0 %v730
        %740 = vmatmul.bf16.gmra.mxu0 %v727
        %v741 = vpop.f32.mrf.mxu0
        %v742 = vadd.f32 0.0, %v741
        %v743 = vpop.f32.mrf.mxu0
        %744 = vdwg.mxu0
        %v745 = vadd.f32 %v722, %v742
        %746 = vst.msk [vmem:[#allocation4] sm:$0xff] %vm409, %v745
        %v747 = vld [vmem:[#allocation3] sm:$0xf]
        %v748 = vld [vmem:[#allocation2] sm:$0xf]
        %v750 = vunpack.c.l.b16 %v747
        %v751 = vpack.c.b16 %v750, %v750
        %752 = vrot.lane.b32.xlu0 %v751, 116
        %v753 = vpop.permute.xlu0 %752
        %v755 = vunpack.c.l.b16 %v748
        %v756 = vpack.c.b16 %v755, %v755
        %757 = vrot.lane.b32.xlu0 %v756, 116
        %v758 = vpop.permute.xlu0 %757
        %v760 = vsel %vm432, %v753, 0
        %v763 = vsel %vm432, %v758, 0
        %765 = vmatpush.bf16.xpose.msra.mxu0 0
        %766 = vmatpush.bf16.xpose.msra.mxu0 0
        %767 = vmatpush.bf16.xpose.msra.mxu0 0
        %768 = vmatpush.bf16.xpose.msra.mxu0 0
        %769 = vmatpush.bf16.xpose.msra.mxu0 0
        %770 = vmatpush.bf16.xpose.msra.mxu0 0
        %771 = vmatpush.bf16.xpose.msra.mxu0 0
        %772 = vmatpush.bf16.xpose.msra.mxu0 %v763
        %773 = vmatmul.bf16.gmra.mxu0 %v760
        %v774 = vpop.f32.mrf.mxu0
        %v775 = vadd.f32 0.0, %v774
        %v776 = vpop.f32.mrf.mxu0
        %777 = vdwg.mxu0
        %v778 = vsel %vm452, %v775, -inf
        %779 = vmax.xlane.f32.xlu0 %v778
        %v780 = vpop.xlane.xlu0 %779
        %v781 = vsub.f32 %v775, %v780
        %v782 = vmul.f32 %v781, 1.442695
        %v783 = vpow.pop %v782
        %v784 = vsel %vm452, %v783, 0.0
        %785 = vadd.xlane.f32.xlu0 %v784
        %v786 = vpop.xlane.xlu0 %785
        %v787 = vrcp.pop %v786
        %v788 = vmul.f32 %v786, %v787
        %v789 = vsub.f32 1.0, %v788
        %v790 = vmul.f32 %v787, %v789
        %v791 = vadd.f32 %v787, %v790
        %vm792 = vweird.f32 %v786
        %vm793 = vweird.f32 %v787
        %vm794 = vmor %vm792, %vm793
        %v795 = vsel %vm794, %v787, %v791
        %v796 = vand.u32 2147483647, %v786
        %vm797 = vcmp.eq.f32.partialorder %v796, 8.507059e+37
        %v798 = vand.u32 %v786, 2147483648
        %v799 = vor.u32 1.1754944e-38, %v798
        %v800 = vsel %vm797, %v799, %v795
        %v801 = vmul.f32 %v783, %v800
        %v802 = vpack.c.bf16 %v801, %v801
        %s803 = scalar_lea.vmem %s345, 12 [#allocation14]
        %804 = vst.msk [vmem:[%s803] sm:$0xf] %vm478, %v802
        %v805 = vrcp.pop %v786
        %v806 = vmul.f32 %v783, %v805
        %v807 = vpack.c.bf16 %v806, %v806
        %808 = vrot.lane.b32.xlu0 %v756, 84
        %v809 = vpop.permute.xlu0 %808
        %v811 = vsel %vm452, %v807, 0
        %v814 = vsel %vm491, %v809, 0
        %816 = vmatpush.bf16.msra.mxu0 0
        %817 = vmatpush.bf16.msra.mxu0 0
        %818 = vmatpush.bf16.msra.mxu0 0
        %819 = vmatpush.bf16.msra.mxu0 0
        %820 = vmatpush.bf16.msra.mxu0 0
        %821 = vmatpush.bf16.msra.mxu0 0
        %822 = vmatpush.bf16.msra.mxu0 0
        %823 = vmatpush.bf16.msra.mxu0 %v814
        %824 = vmatmul.bf16.gmra.mxu0 %v811
        %v825 = vpop.f32.mrf.mxu0
        %v826 = vadd.f32 0.0, %v825
        %v827 = vpop.f32.mrf.mxu0
        %828 = vdwg.mxu0
        %v829 = vld [vmem:[#allocation4] sm:$0xff]
        %v830 = vpack.c.bf16 %v826, %v826
        %s831 = scalar_lea.vmem [#allocation11], 6
        %v832 = vld [vmem:[%s831] sm:$0x3]
        %v834 = vsel %vm432, %v830, 0
        %v837 = vsel %vm514, %v832, 0
        %839 = vmatpush.bf16.msra.mxu0 0
        %840 = vmatpush.bf16.msra.mxu0 0
        %841 = vmatpush.bf16.msra.mxu0 0
        %842 = vmatpush.bf16.msra.mxu0 0
        %843 = vmatpush.bf16.msra.mxu0 0
        %844 = vmatpush.bf16.msra.mxu0 0
        %845 = vmatpush.bf16.msra.mxu0 0
        %846 = vmatpush.bf16.msra.mxu0 %v837
        %847 = vmatmul.bf16.gmra.mxu0 %v834
        %v848 = vpop.f32.mrf.mxu0
        %v849 = vadd.f32 0.0, %v848
        %v850 = vpop.f32.mrf.mxu0
        %851 = vdwg.mxu0
        %v852 = vadd.f32 %v829, %v849
        %853 = vst.msk [vmem:[#allocation4] sm:$0xff] %vm409, %v852
        %v854 = vld [vmem:[#allocation3] sm:$0xf]
        %v855 = vld [vmem:[#allocation2] sm:$0xf]
        %v857 = vunpack.c.l.b16 %v854
        %v858 = vpack.c.b16 %v857, %v857
        %859 = vrot.lane.b32.xlu0 %v858, 112
        %v860 = vpop.permute.xlu0 %859
        %v862 = vunpack.c.l.b16 %v855
        %v863 = vpack.c.b16 %v862, %v862
        %864 = vrot.lane.b32.xlu0 %v863, 112
        %v865 = vpop.permute.xlu0 %864
        %v867 = vsel %vm432, %v860, 0
        %v870 = vsel %vm432, %v865, 0
        %872 = vmatpush.bf16.xpose.msra.mxu0 0
        %873 = vmatpush.bf16.xpose.msra.mxu0 0
        %874 = vmatpush.bf16.xpose.msra.mxu0 0
        %875 = vmatpush.bf16.xpose.msra.mxu0 0
        %876 = vmatpush.bf16.xpose.msra.mxu0 0
        %877 = vmatpush.bf16.xpose.msra.mxu0 0
        %878 = vmatpush.bf16.xpose.msra.mxu0 0
        %879 = vmatpush.bf16.xpose.msra.mxu0 %v870
        %880 = vmatmul.bf16.gmra.mxu0 %v867
        %v881 = vpop.f32.mrf.mxu0
        %v882 = vadd.f32 0.0, %v881
        %v883 = vpop.f32.mrf.mxu0
        %884 = vdwg.mxu0
        %v885 = vsel %vm452, %v882, -inf
        %886 = vmax.xlane.f32.xlu0 %v885
        %v887 = vpop.xlane.xlu0 %886
        %v888 = vsub.f32 %v882, %v887
        %v889 = vmul.f32 %v888, 1.442695
        %v890 = vpow.pop %v889
        %v891 = vsel %vm452, %v890, 0.0
        %892 = vadd.xlane.f32.xlu0 %v891
        %v893 = vpop.xlane.xlu0 %892
        %v894 = vrcp.pop %v893
        %v895 = vmul.f32 %v893, %v894
        %v896 = vsub.f32 1.0, %v895
        %v897 = vmul.f32 %v894, %v896
        %v898 = vadd.f32 %v894, %v897
        %vm899 = vweird.f32 %v893
        %vm900 = vweird.f32 %v894
        %vm901 = vmor %vm899, %vm900
        %v902 = vsel %vm901, %v894, %v898
        %v903 = vand.u32 2147483647, %v893
        %vm904 = vcmp.eq.f32.partialorder %v903, 8.507059e+37
        %v905 = vand.u32 %v893, 2147483648
        %v906 = vor.u32 1.1754944e-38, %v905
        %v907 = vsel %vm904, %v906, %v902
        %v908 = vmul.f32 %v890, %v907
        %v909 = vpack.c.bf16 %v908, %v908
        %s910 = scalar_lea.vmem %s345, 16 [#allocation14]
        %911 = vst.msk [vmem:[%s910] sm:$0xf] %vm478, %v909
        %v912 = vrcp.pop %v893
        %v913 = vmul.f32 %v890, %v912
        %v914 = vpack.c.bf16 %v913, %v913
        %915 = vrot.lane.b32.xlu0 %v863, 80
        %v916 = vpop.permute.xlu0 %915
        %v918 = vsel %vm452, %v914, 0
        %v921 = vsel %vm491, %v916, 0
        %923 = vmatpush.bf16.msra.mxu0 0
        %924 = vmatpush.bf16.msra.mxu0 0
        %925 = vmatpush.bf16.msra.mxu0 0
        %926 = vmatpush.bf16.msra.mxu0 0
        %927 = vmatpush.bf16.msra.mxu0 0
        %928 = vmatpush.bf16.msra.mxu0 0
        %929 = vmatpush.bf16.msra.mxu0 0
        %930 = vmatpush.bf16.msra.mxu0 %v921
        %931 = vmatmul.bf16.gmra.mxu0 %v918
        %v932 = vpop.f32.mrf.mxu0
        %v933 = vadd.f32 0.0, %v932
        %v934 = vpop.f32.mrf.mxu0
        %935 = vdwg.mxu0
        %v936 = vld [vmem:[#allocation4] sm:$0xff]
        %v937 = vpack.c.bf16 %v933, %v933
        %s938 = scalar_lea.vmem [#allocation11], 8
        %v939 = vld [vmem:[%s938] sm:$0x3]
        %v941 = vsel %vm432, %v937, 0
        %v944 = vsel %vm514, %v939, 0
        %946 = vmatpush.bf16.msra.mxu0 0
        %947 = vmatpush.bf16.msra.mxu0 0
        %948 = vmatpush.bf16.msra.mxu0 0
        %949 = vmatpush.bf16.msra.mxu0 0
        %950 = vmatpush.bf16.msra.mxu0 0
        %951 = vmatpush.bf16.msra.mxu0 0
        %952 = vmatpush.bf16.msra.mxu0 0
        %953 = vmatpush.bf16.msra.mxu0 %v944
        %954 = vmatmul.bf16.gmra.mxu0 %v941
        %v955 = vpop.f32.mrf.mxu0
        %v956 = vadd.f32 0.0, %v955
        %v957 = vpop.f32.mrf.mxu0
        %958 = vdwg.mxu0
        %v959 = vadd.f32 %v936, %v956
        %960 = vst.msk [vmem:[#allocation4] sm:$0xff] %vm409, %v959
        %v961 = vld [vmem:[#allocation3] sm:$0xf]
        %v962 = vld [vmem:[#allocation2] sm:$0xf]
        %v964 = vunpack.c.l.b16 %v961
        %v965 = vpack.c.b16 %v964, %v964
        %966 = vrot.lane.b32.xlu0 %v965, 108
        %v967 = vpop.permute.xlu0 %966
        %v969 = vunpack.c.l.b16 %v962
        %v970 = vpack.c.b16 %v969, %v969
        %971 = vrot.lane.b32.xlu0 %v970, 108
        %v972 = vpop.permute.xlu0 %971
        %v974 = vsel %vm432, %v967, 0
        %v977 = vsel %vm432, %v972, 0
        %979 = vmatpush.bf16.xpose.msra.mxu0 0
        %980 = vmatpush.bf16.xpose.msra.mxu0 0
        %981 = vmatpush.bf16.xpose.msra.mxu0 0
        %982 = vmatpush.bf16.xpose.msra.mxu0 0
        %983 = vmatpush.bf16.xpose.msra.mxu0 0
        %984 = vmatpush.bf16.xpose.msra.mxu0 0
        %985 = vmatpush.bf16.xpose.msra.mxu0 0
        %986 = vmatpush.bf16.xpose.msra.mxu0 %v977
        %987 = vmatmul.bf16.gmra.mxu0 %v974
        %v988 = vpop.f32.mrf.mxu0
        %v989 = vadd.f32 0.0, %v988
        %v990 = vpop.f32.mrf.mxu0
        %991 = vdwg.mxu0
        %v992 = vsel %vm452, %v989, -inf
        %993 = vmax.xlane.f32.xlu0 %v992
        %v994 = vpop.xlane.xlu0 %993
        %v995 = vsub.f32 %v989, %v994
        %v996 = vmul.f32 %v995, 1.442695
        %v997 = vpow.pop %v996
        %v998 = vsel %vm452, %v997, 0.0
        %999 = vadd.xlane.f32.xlu0 %v998
        %v1000 = vpop.xlane.xlu0 %999
        %v1001 = vrcp.pop %v1000
        %v1002 = vmul.f32 %v1000, %v1001
        %v1003 = vsub.f32 1.0, %v1002
        %v1004 = vmul.f32 %v1001, %v1003
        %v1005 = vadd.f32 %v1001, %v1004
        %vm1006 = vweird.f32 %v1000
        %vm1007 = vweird.f32 %v1001
        %vm1008 = vmor %vm1006, %vm1007
        %v1009 = vsel %vm1008, %v1001, %v1005
        %v1010 = vand.u32 2147483647, %v1000
        %vm1011 = vcmp.eq.f32.partialorder %v1010, 8.507059e+37
        %v1012 = vand.u32 %v1000, 2147483648
        %v1013 = vor.u32 1.1754944e-38, %v1012
        %v1014 = vsel %vm1011, %v1013, %v1009
        %v1015 = vmul.f32 %v997, %v1014
        %v1016 = vpack.c.bf16 %v1015, %v1015
        %s1017 = scalar_lea.vmem %s345, 20 [#allocation14]
        %1018 = vst.msk [vmem:[%s1017] sm:$0xf] %vm478, %v1016
        %v1019 = vrcp.pop %v1000
        %v1020 = vmul.f32 %v997, %v1019
        %v1021 = vpack.c.bf16 %v1020, %v1020
        %1022 = vrot.lane.b32.xlu0 %v970, 76
        %v1023 = vpop.permute.xlu0 %1022
        %v1025 = vsel %vm452, %v1021, 0
        %v1028 = vsel %vm491, %v1023, 0
        %1030 = vmatpush.bf16.msra.mxu0 0
        %1031 = vmatpush.bf16.msra.mxu0 0
        %1032 = vmatpush.bf16.msra.mxu0 0
        %1033 = vmatpush.bf16.msra.mxu0 0
        %1034 = vmatpush.bf16.msra.mxu0 0
        %1035 = vmatpush.bf16.msra.mxu0 0
        %1036 = vmatpush.bf16.msra.mxu0 0
        %1037 = vmatpush.bf16.msra.mxu0 %v1028
        %1038 = vmatmul.bf16.gmra.mxu0 %v1025
        %v1039 = vpop.f32.mrf.mxu0
        %v1040 = vadd.f32 0.0, %v1039
        %v1041 = vpop.f32.mrf.mxu0
        %1042 = vdwg.mxu0
        %v1043 = vld [vmem:[#allocation4] sm:$0xff]
        %v1044 = vpack.c.bf16 %v1040, %v1040
        %s1045 = scalar_lea.vmem [#allocation11], 10
        %v1046 = vld [vmem:[%s1045] sm:$0x3]
        %v1048 = vsel %vm432, %v1044, 0
        %v1051 = vsel %vm514, %v1046, 0
        %1053 = vmatpush.bf16.msra.mxu0 0
        %1054 = vmatpush.bf16.msra.mxu0 0
        %1055 = vmatpush.bf16.msra.mxu0 0
        %1056 = vmatpush.bf16.msra.mxu0 0
        %1057 = vmatpush.bf16.msra.mxu0 0
        %1058 = vmatpush.bf16.msra.mxu0 0
        %1059 = vmatpush.bf16.msra.mxu0 0
        %1060 = vmatpush.bf16.msra.mxu0 %v1051
        %1061 = vmatmul.bf16.gmra.mxu0 %v1048
        %v1062 = vpop.f32.mrf.mxu0
        %v1063 = vadd.f32 0.0, %v1062
        %v1064 = vpop.f32.mrf.mxu0
        %1065 = vdwg.mxu0
        %v1066 = vadd.f32 %v1043, %v1063
        %1067 = vst.msk [vmem:[#allocation4] sm:$0xff] %vm409, %v1066
        %v1068 = vld [vmem:[#allocation3] sm:$0xf]
        %v1069 = vld [vmem:[#allocation2] sm:$0xf]
        %v1071 = vunpack.c.l.b16 %v1068
        %v1072 = vpack.c.b16 %v1071, %v1071
        %1073 = vrot.lane.b32.xlu0 %v1072, 104
        %v1074 = vpop.permute.xlu0 %1073
        %v1076 = vunpack.c.l.b16 %v1069
        %v1077 = vpack.c.b16 %v1076, %v1076
        %1078 = vrot.lane.b32.xlu0 %v1077, 104
        %v1079 = vpop.permute.xlu0 %1078
        %v1081 = vsel %vm432, %v1074, 0
        %v1084 = vsel %vm432, %v1079, 0
        %1086 = vmatpush.bf16.xpose.msra.mxu0 0
        %1087 = vmatpush.bf16.xpose.msra.mxu0 0
        %1088 = vmatpush.bf16.xpose.msra.mxu0 0
        %1089 = vmatpush.bf16.xpose.msra.mxu0 0
        %1090 = vmatpush.bf16.xpose.msra.mxu0 0
        %1091 = vmatpush.bf16.xpose.msra.mxu0 0
        %1092 = vmatpush.bf16.xpose.msra.mxu0 0
        %1093 = vmatpush.bf16.xpose.msra.mxu0 %v1084
        %1094 = vmatmul.bf16.gmra.mxu0 %v1081
        %v1095 = vpop.f32.mrf.mxu0
        %v1096 = vadd.f32 0.0, %v1095
        %v1097 = vpop.f32.mrf.mxu0
        %1098 = vdwg.mxu0
        %v1099 = vsel %vm452, %v1096, -inf
        %1100 = vmax.xlane.f32.xlu0 %v1099
        %v1101 = vpop.xlane.xlu0 %1100
        %v1102 = vsub.f32 %v1096, %v1101
        %v1103 = vmul.f32 %v1102, 1.442695
        %v1104 = vpow.pop %v1103
        %v1105 = vsel %vm452, %v1104, 0.0
        %1106 = vadd.xlane.f32.xlu0 %v1105
        %v1107 = vpop.xlane.xlu0 %1106
        %v1108 = vrcp.pop %v1107
        %v1109 = vmul.f32 %v1107, %v1108
        %v1110 = vsub.f32 1.0, %v1109
        %v1111 = vmul.f32 %v1108, %v1110
        %v1112 = vadd.f32 %v1108, %v1111
        %vm1113 = vweird.f32 %v1107
        %vm1114 = vweird.f32 %v1108
        %vm1115 = vmor %vm1113, %vm1114
        %v1116 = vsel %vm1115, %v1108, %v1112
        %v1117 = vand.u32 2147483647, %v1107
        %vm1118 = vcmp.eq.f32.partialorder %v1117, 8.507059e+37
        %v1119 = vand.u32 %v1107, 2147483648
        %v1120 = vor.u32 1.1754944e-38, %v1119
        %v1121 = vsel %vm1118, %v1120, %v1116
        %v1122 = vmul.f32 %v1104, %v1121
        %v1123 = vpack.c.bf16 %v1122, %v1122
        %s1124 = scalar_lea.vmem %s345, 24 [#allocation14]
        %1125 = vst.msk [vmem:[%s1124] sm:$0xf] %vm478, %v1123
        %v1126 = vrcp.pop %v1107
        %v1127 = vmul.f32 %v1104, %v1126
        %v1128 = vpack.c.bf16 %v1127, %v1127
        %1129 = vrot.lane.b32.xlu0 %v1077, 72
        %v1130 = vpop.permute.xlu0 %1129
        %v1132 = vsel %vm452, %v1128, 0
        %v1135 = vsel %vm491, %v1130, 0
        %1137 = vmatpush.bf16.msra.mxu0 0
        %1138 = vmatpush.bf16.msra.mxu0 0
        %1139 = vmatpush.bf16.msra.mxu0 0
        %1140 = vmatpush.bf16.msra.mxu0 0
        %1141 = vmatpush.bf16.msra.mxu0 0
        %1142 = vmatpush.bf16.msra.mxu0 0
        %1143 = vmatpush.bf16.msra.mxu0 0
        %1144 = vmatpush.bf16.msra.mxu0 %v1135
        %1145 = vmatmul.bf16.gmra.mxu0 %v1132
        %v1146 = vpop.f32.mrf.mxu0
        %v1147 = vadd.f32 0.0, %v1146
        %v1148 = vpop.f32.mrf.mxu0
        %1149 = vdwg.mxu0
        %v1150 = vld [vmem:[#allocation4] sm:$0xff]
        %v1151 = vpack.c.bf16 %v1147, %v1147
        %s1152 = scalar_lea.vmem [#allocation11], 12
        %v1153 = vld [vmem:[%s1152] sm:$0x3]
        %v1155 = vsel %vm432, %v1151, 0
        %v1158 = vsel %vm514, %v1153, 0
        %1160 = vmatpush.bf16.msra.mxu0 0
        %1161 = vmatpush.bf16.msra.mxu0 0
        %1162 = vmatpush.bf16.msra.mxu0 0
        %1163 = vmatpush.bf16.msra.mxu0 0
        %1164 = vmatpush.bf16.msra.mxu0 0
        %1165 = vmatpush.bf16.msra.mxu0 0
        %1166 = vmatpush.bf16.msra.mxu0 0
        %1167 = vmatpush.bf16.msra.mxu0 %v1158
        %1168 = vmatmul.bf16.gmra.mxu0 %v1155
        %v1169 = vpop.f32.mrf.mxu0
        %v1170 = vadd.f32 0.0, %v1169
        %v1171 = vpop.f32.mrf.mxu0
        %1172 = vdwg.mxu0
        %v1173 = vadd.f32 %v1150, %v1170
        %1174 = vst.msk [vmem:[#allocation4] sm:$0xff] %vm409, %v1173
        %v1175 = vld [vmem:[#allocation3] sm:$0xf]
        %v1176 = vld [vmem:[#allocation2] sm:$0xf]
        %v1178 = vunpack.c.l.b16 %v1175
        %v1179 = vpack.c.b16 %v1178, %v1178
        %1180 = vrot.lane.b32.xlu0 %v1179, 100
        %v1181 = vpop.permute.xlu0 %1180
        %v1183 = vunpack.c.l.b16 %v1176
        %v1184 = vpack.c.b16 %v1183, %v1183
        %1185 = vrot.lane.b32.xlu0 %v1184, 100
        %v1186 = vpop.permute.xlu0 %1185
        %v1188 = vsel %vm432, %v1181, 0
        %v1191 = vsel %vm432, %v1186, 0
        %1193 = vmatpush.bf16.xpose.msra.mxu0 0
        %1194 = vmatpush.bf16.xpose.msra.mxu0 0
        %1195 = vmatpush.bf16.xpose.msra.mxu0 0
        %1196 = vmatpush.bf16.xpose.msra.mxu0 0
        %1197 = vmatpush.bf16.xpose.msra.mxu0 0
        %1198 = vmatpush.bf16.xpose.msra.mxu0 0
        %1199 = vmatpush.bf16.xpose.msra.mxu0 0
        %1200 = vmatpush.bf16.xpose.msra.mxu0 %v1191
        %1201 = vmatmul.bf16.gmra.mxu0 %v1188
        %v1202 = vpop.f32.mrf.mxu0
        %v1203 = vadd.f32 0.0, %v1202
        %v1204 = vpop.f32.mrf.mxu0
        %1205 = vdwg.mxu0
        %v1206 = vsel %vm452, %v1203, -inf
        %1207 = vmax.xlane.f32.xlu0 %v1206
        %v1208 = vpop.xlane.xlu0 %1207
        %v1209 = vsub.f32 %v1203, %v1208
        %v1210 = vmul.f32 %v1209, 1.442695
        %v1211 = vpow.pop %v1210
        %v1212 = vsel %vm452, %v1211, 0.0
        %1213 = vadd.xlane.f32.xlu0 %v1212
        %v1214 = vpop.xlane.xlu0 %1213
        %v1215 = vrcp.pop %v1214
        %v1216 = vmul.f32 %v1214, %v1215
        %v1217 = vsub.f32 1.0, %v1216
        %v1218 = vmul.f32 %v1215, %v1217
        %v1219 = vadd.f32 %v1215, %v1218
        %vm1220 = vweird.f32 %v1214
        %vm1221 = vweird.f32 %v1215
        %vm1222 = vmor %vm1220, %vm1221
        %v1223 = vsel %vm1222, %v1215, %v1219
        %v1224 = vand.u32 2147483647, %v1214
        %vm1225 = vcmp.eq.f32.partialorder %v1224, 8.507059e+37
        %v1226 = vand.u32 %v1214, 2147483648
        %v1227 = vor.u32 1.1754944e-38, %v1226
        %v1228 = vsel %vm1225, %v1227, %v1223
        %v1229 = vmul.f32 %v1211, %v1228
        %v1230 = vpack.c.bf16 %v1229, %v1229
        %s1231 = scalar_lea.vmem %s345, 28 [#allocation14]
        %1232 = vst.msk [vmem:[%s1231] sm:$0xf] %vm478, %v1230
        %v1233 = vrcp.pop %v1214
        %v1234 = vmul.f32 %v1211, %v1233
        %v1235 = vpack.c.bf16 %v1234, %v1234
        %1236 = vrot.lane.b32.xlu0 %v1184, 68
        %v1237 = vpop.permute.xlu0 %1236
        %v1239 = vsel %vm452, %v1235, 0
        %v1242 = vsel %vm491, %v1237, 0
        %1244 = vmatpush.bf16.msra.mxu0 0
        %1245 = vmatpush.bf16.msra.mxu0 0
        %1246 = vmatpush.bf16.msra.mxu0 0
        %1247 = vmatpush.bf16.msra.mxu0 0
        %1248 = vmatpush.bf16.msra.mxu0 0
        %1249 = vmatpush.bf16.msra.mxu0 0
        %1250 = vmatpush.bf16.msra.mxu0 0
        %1251 = vmatpush.bf16.msra.mxu0 %v1242
        %1252 = vmatmul.bf16.gmra.mxu0 %v1239
        %v1253 = vpop.f32.mrf.mxu0
        %v1254 = vadd.f32 0.0, %v1253
        %v1255 = vpop.f32.mrf.mxu0
        %1256 = vdwg.mxu0
        %v1257 = vld [vmem:[#allocation4] sm:$0xff]
        %v1258 = vpack.c.bf16 %v1254, %v1254
        %s1259 = scalar_lea.vmem [#allocation11], 14
        %v1260 = vld [vmem:[%s1259] sm:$0x3]
        %v1262 = vsel %vm432, %v1258, 0
        %v1265 = vsel %vm514, %v1260, 0
        %1267 = vmatpush.bf16.msra.mxu0 0
        %1268 = vmatpush.bf16.msra.mxu0 0
        %1269 = vmatpush.bf16.msra.mxu0 0
        %1270 = vmatpush.bf16.msra.mxu0 0
        %1271 = vmatpush.bf16.msra.mxu0 0
        %1272 = vmatpush.bf16.msra.mxu0 0
        %1273 = vmatpush.bf16.msra.mxu0 0
        %1274 = vmatpush.bf16.msra.mxu0 %v1265
        %1275 = vmatmul.bf16.gmra.mxu0 %v1262
        %v1276 = vpop.f32.mrf.mxu0
        %v1277 = vadd.f32 0.0, %v1276
        %v1278 = vpop.f32.mrf.mxu0
        %1279 = vdwg.mxu0
        %v1280 = vadd.f32 %v1257, %v1277
        %1281 = vst.msk [vmem:[#allocation4] sm:$0xff] %vm409, %v1280
        %v1282 = vld [vmem:[#allocation4] sm:$0xff]
        %v1283 = vld [vmem:[%s4] sm:$0x1]
        %v1285 = vperm.slane %v1283, 0
        %v1287 = vadd.f32 %v1282, %v1285
        %1288 = vst.msk [vmem:[%s338] sm:$0xff] %vm409, %v1287
        %s1289 = sand.u32 %s161, 1
        %s1290 = scalar_lea.sflag [#allocation7], %s1289
        %s1291 = sand.u32 %s161, 1
        %s1292 = smul.addr %s1291, 8
        %s1293 = scalar_lea.vmem [#allocation13], %s1292
        %s1294 = sand.u32 %s189, 1
        %s1295 = scalar_lea.sflag [#allocation15], %s1294
        %s1296 = sand.u32 %s189, 1
        %s1297 = smul.addr %s1296, 32
        %s1298 = scalar_lea.vmem [#allocation14], %s1297
        // Predicated region
        $region61: #{apla_attention_fused.1} parent=39 // pred_check
          %p1299 = pneg %p171
        $region62: #{apla_attention_fused.1} parent=39 // pred_check_branch
          %1301 = sbr.rel (%p1299) target = $region64
        $region63: #{apla_attention_fused.1} parent=39 // pred_region
          %1303 = vsyncadd %s1290, 0
          %s1304 = sadd.s32 %s34, %s33
          %s1305 = smul.addr %s1304, 8
          %s1306 = scalar_lea.hbm %s5, %s1305
          %s1308 = sshll.u32 %s1293, 4
          %s1309 = int_to_ptr.vmem [resolvable:$true] %s1308
          %s1310 = sshll.u32 %s1306, 4
          %s1311 = int_to_ptr.hbm [resolvable:$true] %s1310
          %1313 = dma.vmem_to_hbm [thread:$0]  %s1309, 128, %s1311, %s1290
        $region64: #{apla_attention_fused.1} parent=39 // pred_fallthru
          _
        // Predicated region
        $region65: #{apla_attention_fused.1} parent=39 // pred_check
          %p1314 = pneg %p199
        $region66: #{apla_attention_fused.1} parent=39 // pred_check_branch
          %1316 = sbr.rel (%p1314) target = $region68
        $region67: #{apla_attention_fused.1} parent=39 // pred_region
          %1318 = vsyncadd %s1295, 0
          %s1319 = smul.addr %s33, 8
          %s1320 = sadd.s32 %s34, %s1319
          %s1321 = smul.addr %s1320, 4
          %s1322 = scalar_lea.hbm %s6, %s1321
          %s1323 = sshll.u32 %s1298, 4
          %s1324 = int_to_ptr.vmem [resolvable:$true] %s1323
          %s1325 = sshll.u32 %s1322, 4
          %s1326 = int_to_ptr.hbm [resolvable:$true] %s1325
          %1331 = dma.vmem_to_hbm [thread:$0]  %s1324, 512, %s1326, %s1295, 64, 64, 4
        $region68: #{apla_attention_fused.1} parent=39 // pred_fallthru
          _
      $region40: #{apla_attention_fused.1} parent=5 // pred_fallthru
        _
      %p1332 = scmp.le.s32.totalorder 2, %s24
      // Predicated region
      $region69: #{apla_attention_fused.1} parent=5 // pred_check
        %p1333 = pneg %p1332
      $region70: #{apla_attention_fused.1} parent=5 // pred_check_branch
        %1335 = sbr.rel (%p1333) target = $region72
      $region71: #{apla_attention_fused.1} parent=5 // pred_region
        %s1336 = ssub.s32 %s24, 2
        // Predicated region
        $region73: #{apla_attention_fused.1} parent=71 // pred_check
          %p1337 = pneg %p177
        $region74: #{apla_attention_fused.1} parent=71 // pred_check_branch
          %1339 = sbr.rel (%p1337) target = $region76
        $region75: #{apla_attention_fused.1} parent=71 // pred_region
          %s1340 = sand.u32 %s162, 1
          %s1341 = scalar_lea.sflag [#allocation7], %s1340
          %s1342 = sand.u32 %s162, 1
          %s1343 = smul.addr %s1342, 8
          %s1344 = scalar_lea.vmem [#allocation13], %s1343
          %1346 = dma.done %s1341, 128
        $region76: #{apla_attention_fused.1} parent=71 // pred_fallthru
          _
        // Predicated region
        $region77: #{apla_attention_fused.1} parent=71 // pred_check
          %p1347 = pneg %p205
        $region78: #{apla_attention_fused.1} parent=71 // pred_check_branch
          %1349 = sbr.rel (%p1347) target = $region80
        $region79: #{apla_attention_fused.1} parent=71 // pred_region
          %s1350 = sand.u32 %s190, 1
          %s1351 = scalar_lea.sflag [#allocation15], %s1350
          %s1352 = sand.u32 %s190, 1
          %s1353 = smul.addr %s1352, 32
          %s1354 = scalar_lea.vmem [#allocation14], %s1353
          %1356 = dma.done %s1351, 512
        $region80: #{apla_attention_fused.1} parent=71 // pred_fallthru
          _
      $region72: #{apla_attention_fused.1} parent=5 // pred_fallthru
        _
    $region6: #{apla_attention_fused.1} parent=1 // loop_footer
      %s28 = sadd.s32 1, %s24
    $region7: #{apla_attention_fused.1} parent=1 // loop_footer_branch
      %23 = sbr.rel target = $region3
    $region8: #{apla_attention_fused.1} parent=1 // loop_exit
      _
    %1357 = vsyncpa [#allocation6], 1
    %s1358 = scalar_lea.sflag [#allocation6], 1
    %1359 = vsyncpa %s1358, 1
    %1360 = vsyncpa [#allocation9], 1
    %1361 = vsyncpa [#allocation12], 1
    %1362 = vsyncpa [#allocation7], 1
    %s1363 = scalar_lea.sflag [#allocation7], 1
    %1364 = vsyncpa %s1363, 1
    %1365 = vsyncpa [#allocation15], 1
    %s1366 = scalar_lea.sflag [#allocation15], 1
    %1367 = vsyncpa %s1366, 1

// kernel: apla_attention_fused.1
$region0: #{apla_attention_fused.1}
  #allocation0 [shape = 'u32[]', space=smem, size = 0x4, offset = 0x4, fixed_abs, tag = 'smem constant byte address 0x4 - core index']
  #allocation1 [shape = 'u32[72,128]{1,0:T(1,128)}', space=vmem, size = 0x9000, scoped, tag = 'internal scratch']
  #allocation2 [shape = 'bf16[8,64]{1,0:T(8,128)(2,1)}', space=vmem, size = 0x800, scoped, tag = 'scratch operand']
  #allocation3 [shape = 'bf16[8,32]{1,0:T(8,128)(2,1)}', space=vmem, size = 0x800, scoped, tag = 'scratch operand']
  #allocation4 [shape = 'f32[8,32]{1,0:T(8,128)}', space=vmem, size = 0x1000, scoped, tag = 'scratch operand']
  %s0 = inlined_call_operand.hbm [shape: f32[2,8,32], index: 0, kind: input, shape index: {}]
  %s1 = inlined_call_operand.hbm [shape: bf16[32,32], index: 1, kind: input, shape index: {}]
  %s2 = inlined_call_operand.hbm [shape: bf16[32,64], index: 2, kind: input, shape index: {}]
  %s3 = inlined_call_operand.hbm [shape: bf16[8,4,32], index: 3, kind: input, shape index: {}]
  %s4 = inlined_call_operand.vmem [shape: f32[1,32], index: 4, kind: input, shape index: {}]
  %s5 = inlined_call_operand.hbm [shape: f32[2,8,32], index: 5, kind: output, shape index: {0}]
  %s6 = inlined_call_operand.hbm [shape: bf16[2,8,8,8], index: 6, kind: output, shape index: {1}]
  %7 = xla_tuple %s5, %s6
  %s8 = sld [smem:[#allocation0]]
  $region81: #{apla_attention_fused.1} parent=0
    _
  %s10 = ssub.s32 1, %s8
  %s11 = scalar_select 0, %s10, %s8
  $region1: #{apla_attention_fused.1} parent=0
    #allocation5 [shape = 'u8[8192]{0}', space=vmem, size = 0x2000, scoped, tag = 'input window, operand 0']
    #allocation6 [shape = 's32[2]{0}', space=sflag, size = 0x8, scoped, tag = 'scoped memory for apla_attention_fused.1']
    #allocation7 [shape = 's32[2]{0}', space=sflag, size = 0x8, scoped, tag = 'scoped memory for apla_attention_fused.1']
    #allocation8 [shape = 'u8[8192]{0}', space=vmem, size = 0x2000, scoped, tag = 'input window, operand 1, single buffered']
    #allocation9 [shape = 's32[1]{0}', space=sflag, size = 0x4, scoped, tag = 'scoped memory for apla_attention_fused.1']
    #allocation10 [shape = 'u8[8192]{0}', space=vmem, size = 0x2000, scoped, tag = 'input window, operand 2, single buffered']
    #allocation11 [shape = 'u8[8192]{0}', space=vmem, size = 0x2000, scoped, tag = 'input window, operand 3, single buffered']
    #allocation12 [shape = 's32[1]{0}', space=sflag, size = 0x4, scoped, tag = 'scoped memory for apla_attention_fused.1']
    #allocation13 [shape = 'u8[8192]{0}', space=vmem, size = 0x2000, scoped, tag = 'output window, operand 0']
    #allocation14 [shape = 'u8[32768]{0}', space=vmem, size = 0x8000, scoped, tag = 'output window, operand 1']
    #allocation15 [shape = 's32[2]{0}', space=sflag, size = 0x8, scoped, tag = 'scoped memory for apla_attention_fused.1']
    %12 = vsyncpa [#allocation6], 0
    %s13 = scalar_lea.sflag [#allocation6], 1
    %14 = vsyncpa %s13, 0
    %15 = vsyncpa [#allocation9], 0
    %16 = vsyncpa [#allocation12], 0
    %17 = vsyncpa [#allocation7], 0
    %s18 = scalar_lea.sflag [#allocation7], 1
    %19 = vsyncpa %s18, 0
    %20 = vsyncpa [#allocation15], 0
    %s21 = scalar_lea.sflag [#allocation15], 1
    %22 = vsyncpa %s21, 0
    loop: start=0, step=1, limit=4
    $region2: #{apla_attention_fused.1} parent=1 // loop_pre_header
      _
    $region3: #{apla_attention_fused.1} parent=1 // loop_header
      %s24 = sphi 0, %s28
      %p25 = scmp.ge.s32.totalorder %s24, 4
      %s31 = sphi 0, %s43
      %s32 = sphi 0, %s39
      %s33 = sphi 0, %s31
      %s34 = sphi 0, %s32
      %s35 = sphi 0, %s33
      %s36 = sphi 0, %s34
      %s46 = sphi 0, %s48
      %s49 = sphi 0, %s46
      %s50 = sphi 0, %s49
      %s66 = sphi 0, %s50
      %s70 = sphi 0, %s70
      %s72 = sphi 0, %s70
      %s73 = sphi 0, %s72
      %s87 = sphi 0, %s73
      %s91 = sphi 0, %s91
      %s93 = sphi 0, %s91
      %s94 = sphi 0, %s93
      %s108 = sphi 0, %s94
      %s112 = sphi 0, %s112
      %s114 = sphi 0, %s112
      %s115 = sphi 0, %s114
      %s129 = sphi 0, %s115
      %s133 = sphi 0, %s133
      %s135 = sphi 0, %s133
      %s136 = sphi 0, %s135
      %s150 = sphi 0, %s136
      %s158 = sphi 0, %s160
      %s161 = sphi 0, %s158
      %s162 = sphi 0, %s161
      %s178 = sphi 0, %s162
      %s186 = sphi 0, %s188
      %s189 = sphi 0, %s186
      %s190 = sphi 0, %s189
      %s206 = sphi 0, %s190
    $region4: #{apla_attention_fused.1} parent=1 // loop_header_branch
      %27 = sbr.rel (%p25) target = $region8
    $region5: #{apla_attention_fused.1} parent=1 // loop_body
      %s29 = ssub.s32 %s24, 1
      %s30 = ssub.s32 %s24, 2
      %s37 = sadd.s32 1, %s32
      %p38 = scmp.ge.s32.totalorder %s37, 1
      %s39 = scalar_select %p38, 0, %s37
      %s40 = sadd.s32 1, %s31
      %s41 = scalar_select %p38, %s40, %s31
      %p42 = scmp.ge.s32.totalorder %s41, 2
      %s43 = scalar_select %p42, 0, %s41
      %s44 = ssub.s32 %s31, %s43
      %p45 = scmp.eq.s32.totalorder %s44, 0
      %s47 = sadd.s32 %s46, 1
      %s48 = scalar_select %p45, %s46, %s47
      %p51 = pneg %p45
      %p52 = scmp.eq.s32.totalorder %s24, 1
      %p53 = por %p51, %p52
      %p54 = scmp.ne.s32.totalorder %s46, %s49
      %p55 = scmp.eq.s32.totalorder %s24, 0
      %p56 = por %p54, %p55
      %p57 = scmp.ne.s32.totalorder %s46, %s49
      %p58 = scmp.eq.s32.totalorder %s29, 1
      %p59 = por %p57, %p58
      %p60 = scmp.ne.s32.totalorder %s49, %s50
      %p61 = scmp.eq.s32.totalorder %s29, 0
      %p62 = por %p60, %p61
      %p63 = scmp.ne.s32.totalorder %s49, %s50
      %p64 = scmp.eq.s32.totalorder %s30, 1
      %p65 = por %p63, %p64
      %p67 = scmp.ne.s32.totalorder %s50, %s66
      %p68 = scmp.eq.s32.totalorder %s30, 0
      %p69 = por %p67, %p68
      %s71 = sadd.s32 %s70, 1
      %p74 = scmp.eq.s32.totalorder %s24, 1
      %p75 = scmp.ne.s32.totalorder %s70, %s72
      %p76 = scmp.eq.s32.totalorder %s24, 0
      %p77 = por %p75, %p76
      %p78 = scmp.ne.s32.totalorder %s70, %s72
      %p79 = scmp.eq.s32.totalorder %s29, 1
      %p80 = por %p78, %p79
      %p81 = scmp.ne.s32.totalorder %s72, %s73
      %p82 = scmp.eq.s32.totalorder %s29, 0
      %p83 = por %p81, %p82
      %p84 = scmp.ne.s32.totalorder %s72, %s73
      %p85 = scmp.eq.s32.totalorder %s30, 1
      %p86 = por %p84, %p85
      %p88 = scmp.ne.s32.totalorder %s73, %s87
      %p89 = scmp.eq.s32.totalorder %s30, 0
      %p90 = por %p88, %p89
      %s92 = sadd.s32 %s91, 1
      %p95 = scmp.eq.s32.totalorder %s24, 1
      %p96 = scmp.ne.s32.totalorder %s91, %s93
      %p97 = scmp.eq.s32.totalorder %s24, 0
      %p98 = por %p96, %p97
      %p99 = scmp.ne.s32.totalorder %s91, %s93
      %p100 = scmp.eq.s32.totalorder %s29, 1
      %p101 = por %p99, %p100
      %p102 = scmp.ne.s32.totalorder %s93, %s94
      %p103 = scmp.eq.s32.totalorder %s29, 0
      %p104 = por %p102, %p103
      %p105 = scmp.ne.s32.totalorder %s93, %s94
      %p106 = scmp.eq.s32.totalorder %s30, 1
      %p107 = por %p105, %p106
      %p109 = scmp.ne.s32.totalorder %s94, %s108
      %p110 = scmp.eq.s32.totalorder %s30, 0
      %p111 = por %p109, %p110
      %s113 = sadd.s32 %s112, 1
      %p116 = scmp.eq.s32.totalorder %s24, 1
      %p117 = scmp.ne.s32.totalorder %s112, %s114
      %p118 = scmp.eq.s32.totalorder %s24, 0
      %p119 = por %p117, %p118
      %p120 = scmp.ne.s32.totalorder %s112, %s114
      %p121 = scmp.eq.s32.totalorder %s29, 1
      %p122 = por %p120, %p121
      %p123 = scmp.ne.s32.totalorder %s114, %s115
      %p124 = scmp.eq.s32.totalorder %s29, 0
      %p125 = por %p123, %p124
      %p126 = scmp.ne.s32.totalorder %s114, %s115
      %p127 = scmp.eq.s32.totalorder %s30, 1
      %p128 = por %p126, %p127
      %p130 = scmp.ne.s32.totalorder %s115, %s129
      %p131 = scmp.eq.s32.totalorder %s30, 0
      %p132 = por %p130, %p131
      %s134 = sadd.s32 %s133, 1
      %p137 = scmp.eq.s32.totalorder %s24, 1
      %p138 = scmp.ne.s32.totalorder %s133, %s135
      %p139 = scmp.eq.s32.totalorder %s24, 0
      %p140 = por %p138, %p139
      %p141 = scmp.ne.s32.totalorder %s133, %s135
      %p142 = scmp.eq.s32.totalorder %s29, 1
      %p143 = por %p141, %p142
      %p144 = scmp.ne.s32.totalorder %s135, %s136
      %p145 = scmp.eq.s32.totalorder %s29, 0
      %p146 = por %p144, %p145
      %p147 = scmp.ne.s32.totalorder %s135, %s136
      %p148 = scmp.eq.s32.totalorder %s30, 1
      %p149 = por %p147, %p148
      %p151 = scmp.ne.s32.totalorder %s136, %s150
      %p152 = scmp.eq.s32.totalorder %s30, 0
      %p153 = por %p151, %p152
      %s154 = ssub.s32 %s31, %s43
      %s155 = ssub.s32 %s32, %s39
      %s156 = sor.u32 %s154, %s155
      %p157 = scmp.eq.s32.totalorder %s156, 0
      %s159 = sadd.s32 %s158, 1
      %s160 = scalar_select %p157, %s158, %s159
      %p163 = pneg %p157
      %p164 = scmp.eq.s32.totalorder %s24, 1
      %p165 = por %p163, %p164
      %p166 = scmp.ne.s32.totalorder %s158, %s161
      %p167 = scmp.eq.s32.totalorder %s24, 0
      %p168 = por %p166, %p167
      %p169 = scmp.ne.s32.totalorder %s158, %s161
      %p170 = scmp.eq.s32.totalorder %s29, 1
      %p171 = por %p169, %p170
      %p172 = scmp.ne.s32.totalorder %s161, %s162
      %p173 = scmp.eq.s32.totalorder %s29, 0
      %p174 = por %p172, %p173
      %p175 = scmp.ne.s32.totalorder %s161, %s162
      %p176 = scmp.eq.s32.totalorder %s30, 1
      %p177 = por %p175, %p176
      %p179 = scmp.ne.s32.totalorder %s162, %s178
      %p180 = scmp.eq.s32.totalorder %s30, 0
      %p181 = por %p179, %p180
      %s182 = ssub.s32 %s31, %s43
      %s183 = ssub.s32 %s32, %s39
      %s184 = sor.u32 %s182, %s183
      %p185 = scmp.eq.s32.totalorder %s184, 0
      %s187 = sadd.s32 %s186, 1
      %s188 = scalar_select %p185, %s186, %s187
      %p191 = pneg %p185
      %p192 = scmp.eq.s32.totalorder %s24, 1
      %p193 = por %p191, %p192
      %p194 = scmp.ne.s32.totalorder %s186, %s189
      %p195 = scmp.eq.s32.totalorder %s24, 0
      %p196 = por %p194, %p195
      %p197 = scmp.ne.s32.totalorder %s186, %s189
      %p198 = scmp.eq.s32.totalorder %s29, 1
      %p199 = por %p197, %p198
      %p200 = scmp.ne.s32.totalorder %s189, %s190
      %p201 = scmp.eq.s32.totalorder %s29, 0
      %p202 = por %p200, %p201
      %p203 = scmp.ne.s32.totalorder %s189, %s190
      %p204 = scmp.eq.s32.totalorder %s30, 1
      %p205 = por %p203, %p204
      %p207 = scmp.ne.s32.totalorder %s190, %s206
      %p208 = scmp.eq.s32.totalorder %s30, 0
      %p209 = por %p207, %p208
      %p210 = scmp.le.s32.totalorder 1, %s24
      %p211 = scmp.lt.s32.totalorder %s24, 3
      %p212 = pnand %p210, %p211
      %p213 = pneg %p212
      // Predicated region
      $region9: #{apla_attention_fused.1} parent=5 // pred_check
        _
      $region10: #{apla_attention_fused.1} parent=5 // pred_check_branch
        %215 = sbr.rel (%p212) target = $region12
      $region11: #{apla_attention_fused.1} parent=5 // pred_region
        %s216 = ssub.s32 %s24, 1
        // Predicated region
        $region13: #{apla_attention_fused.1} parent=11 // pred_check
          %p217 = pneg %p83
        $region14: #{apla_attention_fused.1} parent=11 // pred_check_branch
          %219 = sbr.rel (%p217) target = $region16
        $region15: #{apla_attention_fused.1} parent=11 // pred_region
          %221 = vsyncadd [#allocation9], 0
          %s222 = sshll.u32 %s1, 4
          %s223 = int_to_ptr.hbm [resolvable:$true] %s222
          %s224 = sshll.u32 [#allocation8], 4
          %s225 = int_to_ptr.vmem [resolvable:$true] %s224
          %230 = dma.hbm_to_vmem [thread:$0]  %s223, 256, %s225, [#allocation9], 64, 64, 4
        $region16: #{apla_attention_fused.1} parent=11 // pred_fallthru
          _
        // Predicated region
        $region17: #{apla_attention_fused.1} parent=11 // pred_check
          %p231 = pneg %p104
        $region18: #{apla_attention_fused.1} parent=11 // pred_check_branch
          %233 = sbr.rel (%p231) target = $region20
        $region19: #{apla_attention_fused.1} parent=11 // pred_region
          %235 = vsyncadd [#allocation9], 0
          %s236 = sshll.u32 %s2, 4
          %s237 = int_to_ptr.hbm [resolvable:$true] %s236
          %s238 = sshll.u32 [#allocation10], 4
          %s239 = int_to_ptr.vmem [resolvable:$true] %s238
          %244 = dma.hbm_to_vmem [thread:$0]  %s237, 256, %s239, [#allocation9], 64, 64, 4
        $region20: #{apla_attention_fused.1} parent=11 // pred_fallthru
          _
        // Predicated region
        $region21: #{apla_attention_fused.1} parent=11 // pred_check
          %p245 = pneg %p125
        $region22: #{apla_attention_fused.1} parent=11 // pred_check_branch
          %247 = sbr.rel (%p245) target = $region24
        $region23: #{apla_attention_fused.1} parent=11 // pred_region
          %249 = vsyncadd [#allocation12], 0
          %s250 = sshll.u32 %s3, 4
          %s251 = int_to_ptr.hbm [resolvable:$true] %s250
          %s252 = sshll.u32 [#allocation11], 4
          %s253 = int_to_ptr.vmem [resolvable:$true] %s252
          %258 = dma.hbm_to_vmem [thread:$0]  %s251, 256, %s253, [#allocation12], 32, 32, 2
        $region24: #{apla_attention_fused.1} parent=11 // pred_fallthru
          _
        // Predicated region
        $region25: #{apla_attention_fused.1} parent=11 // pred_check
          %p259 = pneg %p146
        $region26: #{apla_attention_fused.1} parent=11 // pred_check_branch
          %261 = sbr.rel (%p259) target = $region28
        $region27: #{apla_attention_fused.1} parent=11 // pred_region
          _
        $region28: #{apla_attention_fused.1} parent=11 // pred_fallthru
          _
      $region12: #{apla_attention_fused.1} parent=5 // pred_fallthru
        _
      %p262 = scmp.lt.s32.totalorder %s24, 2
      // Predicated region
      $region29: #{apla_attention_fused.1} parent=5 // pred_check
        %p263 = pneg %p262
      $region30: #{apla_attention_fused.1} parent=5 // pred_check_branch
        %265 = sbr.rel (%p263) target = $region32
      $region31: #{apla_attention_fused.1} parent=5 // pred_region
        // Predicated region
        $region33: #{apla_attention_fused.1} parent=31 // pred_check
          %p266 = pneg %p56
        $region34: #{apla_attention_fused.1} parent=31 // pred_check_branch
          %268 = sbr.rel (%p266) target = $region36
        $region35: #{apla_attention_fused.1} parent=31 // pred_region
          %s269 = sand.u32 %s46, 1
          %s270 = scalar_lea.sflag [#allocation6], %s269
          %s271 = sand.u32 %s46, 1
          %s272 = smul.addr %s271, 8
          %s273 = scalar_lea.vmem [#allocation5], %s272
          %275 = vsyncadd %s270, 0
          %s276 = smul.addr %s31, 8
          %s277 = scalar_lea.hbm %s0, %s276
          %s279 = sshll.u32 %s277, 4
          %s280 = int_to_ptr.hbm [resolvable:$true] %s279
          %s281 = sshll.u32 %s273, 4
          %s282 = int_to_ptr.vmem [resolvable:$true] %s281
          %284 = dma.hbm_to_vmem [thread:$0]  %s280, 128, %s282, %s270
        $region36: #{apla_attention_fused.1} parent=31 // pred_fallthru
          _
      $region32: #{apla_attention_fused.1} parent=5 // pred_fallthru
        _
      %p285 = scmp.le.s32.totalorder 1, %s24
      %p286 = scmp.lt.s32.totalorder %s24, 3
      %p287 = pnand %p285, %p286
      %p288 = pneg %p287
      // Predicated region
      $region37: #{apla_attention_fused.1} parent=5 // pred_check
        _
      $region38: #{apla_attention_fused.1} parent=5 // pred_check_branch
        %290 = sbr.rel (%p287) target = $region40
      $region39: #{apla_attention_fused.1} parent=5 // pred_region
        %s291 = ssub.s32 %s24, 1
        %s292 = sand.u32 %s49, 1
        %s293 = scalar_lea.sflag [#allocation6], %s292
        %s294 = sand.u32 %s49, 1
        %s295 = smul.addr %s294, 8
        %s296 = scalar_lea.vmem [#allocation5], %s295
        // Predicated region
        $region41: #{apla_attention_fused.1} parent=39 // pred_check
          %p297 = pneg %p62
        $region42: #{apla_attention_fused.1} parent=39 // pred_check_branch
          %299 = sbr.rel (%p297) target = $region44
        $region43: #{apla_attention_fused.1} parent=39 // pred_region
          %301 = dma.done %s293, 128
        $region44: #{apla_attention_fused.1} parent=39 // pred_fallthru
          _
        // Predicated region
        $region45: #{apla_attention_fused.1} parent=39 // pred_check
          %p302 = pneg %p83
        $region46: #{apla_attention_fused.1} parent=39 // pred_check_branch
          %304 = sbr.rel (%p302) target = $region48
        $region47: #{apla_attention_fused.1} parent=39 // pred_region
          %306 = dma.done [#allocation9], 256
        $region48: #{apla_attention_fused.1} parent=39 // pred_fallthru
          _
        // Predicated region
        $region49: #{apla_attention_fused.1} parent=39 // pred_check
          %p307 = pneg %p104
        $region50: #{apla_attention_fused.1} parent=39 // pred_check_branch
          %309 = sbr.rel (%p307) target = $region52
        $region51: #{apla_attention_fused.1} parent=39 // pred_region
          %311 = dma.done [#allocation9], 256
        $region52: #{apla_attention_fused.1} parent=39 // pred_fallthru
          _
        // Predicated region
        $region53: #{apla_attention_fused.1} parent=39 // pred_check
          %p312 = pneg %p125
        $region54: #{apla_attention_fused.1} parent=39 // pred_check_branch
          %314 = sbr.rel (%p312) target = $region56
        $region55: #{apla_attention_fused.1} parent=39 // pred_region
          %316 = dma.done [#allocation12], 256
        $region56: #{apla_attention_fused.1} parent=39 // pred_fallthru
          _
        %s317 = sand.u32 %s49, 1
        %s318 = scalar_lea.sflag [#allocation6], %s317
        %s319 = sand.u32 %s49, 1
        %s320 = smul.addr %s319, 8
        %s321 = scalar_lea.vmem [#allocation5], %s320
        %p322 = pneg %p62
        %p323 = pneg %p59
        %p324 = pneg %p83
        %p325 = pneg %p80
        %p326 = pneg %p104
        %p327 = pneg %p101
        %p328 = pneg %p125
        %p329 = pneg %p122
        %p330 = pneg %p146
        %p331 = pneg %p143
        %p332 = pneg %p174
        %p333 = pneg %p171
        %s334 = sand.u32 %s161, 1
        %s335 = scalar_lea.sflag [#allocation7], %s334
        %s336 = sand.u32 %s161, 1
        %s337 = smul.addr %s336, 8
        %s338 = scalar_lea.vmem [#allocation13], %s337
        %p339 = pneg %p202
        %p340 = pneg %p199
        %s341 = sand.u32 %s189, 1
        %s342 = scalar_lea.sflag [#allocation15], %s341
        %s343 = sand.u32 %s189, 1
        %s344 = smul.addr %s343, 32
        %s345 = scalar_lea.vmem [#allocation14], %s344
        %p347 = scmp.eq.s32.totalorder %s34, 0
        // Predicated region
        $region57: #{apla_attention_fused.1} parent=39 // pred_check
          %p348 = pneg %p347
        $region58: #{apla_attention_fused.1} parent=39 // pred_check_branch
          %350 = sbr.rel (%p348) target = $region60
        $region59: #{apla_attention_fused.1} parent=39 // pred_region
          %v351 = vld [vmem:[%s296] sm:$0xff]
          %v352 = vpack.c.bf16 %v351, %v351
          %v353 = vld [vmem:[#allocation10] sm:$0xf]
          %v354 = vld [vmem:[#allocation10 + $0x4] sm:$0xf]
          %v355 = vld [vmem:[#allocation10 + $0x8] sm:$0xf]
          %v356 = vld [vmem:[#allocation10 + $0xc] sm:$0xf]
          %v361 = vunpack.c.l.b16 %v353
          %v362 = vunpack.c.l.b16 %v354
          %v363 = vunpack.c.l.b16 %v355
          %v364 = vunpack.c.l.b16 %v356
          %v365 = vpack.c.b16 %v362, %v361
          %v366 = vpack.c.b16 %v364, %v363
          %vm369 = vcmask 261120
          %v371 = vsel %vm369, %v352, 0
          %373 = vmatpush.bf16.msra.mxu0 0
          %374 = vmatpush.bf16.msra.mxu0 0
          %375 = vmatpush.bf16.msra.mxu0 0
          %376 = vmatpush.bf16.msra.mxu0 0
          %377 = vmatpush.bf16.msra.mxu0 0
          %378 = vmatpush.bf16.msra.mxu0 0
          %379 = vmatpush.bf16.msra.mxu0 %v366
          %380 = vmatpush.bf16.msra.mxu0 %v365
          %381 = vmatmul.bf16.gmra.mxu0 %v371
          %v382 = vpop.f32.mrf.mxu0
          %v383 = vadd.f32 0.0, %v382
          %v384 = vpop.f32.mrf.mxu0
          %385 = vdwg.mxu0
          %v386 = vpack.c.bf16 %v383, %v383
          %vm387 = vcmask 519168
          %388 = vst.msk [vmem:[#allocation2] sm:$0xf] %vm387, %v386
        $region60: #{apla_attention_fused.1} parent=39 // pred_fallthru
          _
        %s389 = smul.u32 %s34, 8
        %s390 = scalar_lea.vmem %s296, %s389 [#allocation5]
        %v391 = vld [vmem:[%s390] sm:$0xff]
        %v392 = vpack.c.bf16 %v391, %v391
        %v393 = vld [vmem:[#allocation8] sm:$0xf]
        %v394 = vld [vmem:[#allocation8 + $0x4] sm:$0xf]
        %v395 = vld [vmem:[#allocation8 + $0x8] sm:$0xf]
        %v396 = vld [vmem:[#allocation8 + $0xc] sm:$0xf]
        %v401 = vunpack.c.l.b16 %v393
        %v402 = vunpack.c.l.b16 %v394
        %v403 = vunpack.c.l.b16 %v395
        %v404 = vunpack.c.l.b16 %v396
        %v405 = vpack.c.b16 %v402, %v401
        %v406 = vpack.c.b16 %v404, %v403
        %vm409 = vcmask 261120
        %v411 = vsel %vm409, %v392, 0
        %413 = vmatpush.bf16.msra.mxu0 0
        %414 = vmatpush.bf16.msra.mxu0 0
        %415 = vmatpush.bf16.msra.mxu0 0
        %416 = vmatpush.bf16.msra.mxu0 0
        %417 = vmatpush.bf16.msra.mxu0 0
        %418 = vmatpush.bf16.msra.mxu0 0
        %419 = vmatpush.bf16.msra.mxu0 %v406
        %420 = vmatpush.bf16.msra.mxu0 %v405
        %421 = vmatmul.bf16.gmra.mxu0 %v411
        %v422 = vpop.f32.mrf.mxu0
        %v423 = vadd.f32 0.0, %v422
        %v424 = vpop.f32.mrf.mxu0
        %425 = vdwg.mxu0
        %v426 = vpack.c.bf16 %v423, %v423
        %vm427 = vcmask 257024
        %428 = vst.msk [vmem:[#allocation3] sm:$0xf] %vm427, %v426
        %429 = vst.msk [vmem:[#allocation4] sm:$0xff] %vm409, 0.0
        %v430 = vld [vmem:[#allocation3] sm:$0xf]
        %v431 = vld [vmem:[#allocation2] sm:$0xf]
        %vm432 = vcmask 31744
        %v434 = vsel %vm432, %v430, 0
        %v437 = vsel %vm432, %v431, 0
        %439 = vmatpush.bf16.xpose.msra.mxu0 0
        %440 = vmatpush.bf16.xpose.msra.mxu0 0
        %441 = vmatpush.bf16.xpose.msra.mxu0 0
        %442 = vmatpush.bf16.xpose.msra.mxu0 0
        %443 = vmatpush.bf16.xpose.msra.mxu0 0
        %444 = vmatpush.bf16.xpose.msra.mxu0 0
        %445 = vmatpush.bf16.xpose.msra.mxu0 0
        %446 = vmatpush.bf16.xpose.msra.mxu0 %v437
        %447 = vmatmul.bf16.gmra.mxu0 %v434
        %v448 = vpop.f32.mrf.mxu0
        %v449 = vadd.f32 0.0, %v448
        %v450 = vpop.f32.mrf.mxu0
        %451 = vdwg.mxu0
        %vm452 = vcmask 64512
        %v453 = vsel %vm452, %v449, -inf
        %454 = vmax.xlane.f32.xlu0 %v453
        %v455 = vpop.xlane.xlu0 %454
        %v456 = vsub.f32 %v449, %v455
        %v457 = vmul.f32 %v456, 1.442695
        %v458 = vpow.pop %v457
        %v459 = vsel %vm452, %v458, 0.0
        %460 = vadd.xlane.f32.xlu0 %v459
        %v461 = vpop.xlane.xlu0 %460
        %v462 = vrcp.pop %v461
        %v463 = vmul.f32 %v461, %v462
        %v464 = vsub.f32 1.0, %v463
        %v465 = vmul.f32 %v462, %v464
        %v466 = vadd.f32 %v462, %v465
        %vm467 = vweird.f32 %v461
        %vm468 = vweird.f32 %v462
        %vm469 = vmor %vm467, %vm468
        %v470 = vsel %vm469, %v462, %v466
        %v471 = vand.u32 2147483647, %v461
        %vm472 = vcmp.eq.f32.partialorder %v471, 8.507059e+37
        %v473 = vand.u32 %v461, 2147483648
        %v474 = vor.u32 1.1754944e-38, %v473
        %v475 = vsel %vm472, %v474, %v470
        %v476 = vmul.f32 %v458, %v475
        %v477 = vpack.c.bf16 %v476, %v476
        %vm478 = vcmask 60416
        %479 = vst.msk [vmem:[%s345] sm:$0xf] %vm478, %v477
        %v480 = vrcp.pop %v461
        %v481 = vmul.f32 %v458, %v480
        %v482 = vpack.c.bf16 %v481, %v481
        %v484 = vunpack.c.l.b16 %v431
        %v485 = vpack.c.b16 %v484, %v484
        %486 = vrot.lane.b32.xlu0 %v485, 96
        %v487 = vpop.permute.xlu0 %486
        %v489 = vsel %vm452, %v482, 0
        %vm491 = vcmask 1043456
        %v493 = vsel %vm491, %v487, 0
        %495 = vmatpush.bf16.msra.mxu0 0
        %496 = vmatpush.bf16.msra.mxu0 0
        %497 = vmatpush.bf16.msra.mxu0 0
        %498 = vmatpush.bf16.msra.mxu0 0
        %499 = vmatpush.bf16.msra.mxu0 0
        %500 = vmatpush.bf16.msra.mxu0 0
        %501 = vmatpush.bf16.msra.mxu0 0
        %502 = vmatpush.bf16.msra.mxu0 %v493
        %503 = vmatmul.bf16.gmra.mxu0 %v489
        %v504 = vpop.f32.mrf.mxu0
        %v505 = vadd.f32 0.0, %v504
        %v506 = vpop.f32.mrf.mxu0
        %507 = vdwg.mxu0
        %v508 = vld [vmem:[#allocation4] sm:$0xff]
        %v509 = vpack.c.bf16 %v505, %v505
        %v510 = vld [vmem:[#allocation11] sm:$0x3]
        %v512 = vsel %vm432, %v509, 0
        %vm514 = vcmask 1041408
        %v516 = vsel %vm514, %v510, 0
        %518 = vmatpush.bf16.msra.mxu0 0
        %519 = vmatpush.bf16.msra.mxu0 0
        %520 = vmatpush.bf16.msra.mxu0 0
        %521 = vmatpush.bf16.msra.mxu0 0
        %522 = vmatpush.bf16.msra.mxu0 0
        %523 = vmatpush.bf16.msra.mxu0 0
        %524 = vmatpush.bf16.msra.mxu0 0
        %525 = vmatpush.bf16.msra.mxu0 %v516
        %526 = vmatmul.bf16.gmra.mxu0 %v512
        %v527 = vpop.f32.mrf.mxu0
        %v528 = vadd.f32 0.0, %v527
        %v529 = vpop.f32.mrf.mxu0
        %530 = vdwg.mxu0
        %v531 = vadd.f32 %v508, %v528
        %532 = vst.msk [vmem:[#allocation4] sm:$0xff] %vm409, %v531
        %v533 = vld [vmem:[#allocation3] sm:$0xf]
        %v534 = vld [vmem:[#allocation2] sm:$0xf]
        %v536 = vunpack.c.l.b16 %v533
        %v537 = vpack.c.b16 %v536, %v536
        %538 = vrot.lane.b32.xlu0 %v537, 124
        %v539 = vpop.permute.xlu0 %538
        %v541 = vunpack.c.l.b16 %v534
        %v542 = vpack.c.b16 %v541, %v541
        %543 = vrot.lane.b32.xlu0 %v542, 124
        %v544 = vpop.permute.xlu0 %543
        %v546 = vsel %vm432, %v539, 0
        %v549 = vsel %vm432, %v544, 0
        %551 = vmatpush.bf16.xpose.msra.mxu0 0
        %552 = vmatpush.bf16.xpose.msra.mxu0 0
        %553 = vmatpush.bf16.xpose.msra.mxu0 0
        %554 = vmatpush.bf16.xpose.msra.mxu0 0
        %555 = vmatpush.bf16.xpose.msra.mxu0 0
        %556 = vmatpush.bf16.xpose.msra.mxu0 0
        %557 = vmatpush.bf16.xpose.msra.mxu0 0
        %558 = vmatpush.bf16.xpose.msra.mxu0 %v549
        %559 = vmatmul.bf16.gmra.mxu0 %v546
        %v560 = vpop.f32.mrf.mxu0
        %v561 = vadd.f32 0.0, %v560
        %v562 = vpop.f32.mrf.mxu0
        %563 = vdwg.mxu0
        %v564 = vsel %vm452, %v561, -inf
        %565 = vmax.xlane.f32.xlu0 %v564
        %v566 = vpop.xlane.xlu0 %565
        %v567 = vsub.f32 %v561, %v566
        %v568 = vmul.f32 %v567, 1.442695
        %v569 = vpow.pop %v568
        %v570 = vsel %vm452, %v569, 0.0
        %571 = vadd.xlane.f32.xlu0 %v570
        %v572 = vpop.xlane.xlu0 %571
        %v573 = vrcp.pop %v572
        %v574 = vmul.f32 %v572, %v573
        %v575 = vsub.f32 1.0, %v574
        %v576 = vmul.f32 %v573, %v575
        %v577 = vadd.f32 %v573, %v576
        %vm578 = vweird.f32 %v572
        %vm579 = vweird.f32 %v573
        %vm580 = vmor %vm578, %vm579
        %v581 = vsel %vm580, %v573, %v577
        %v582 = vand.u32 2147483647, %v572
        %vm583 = vcmp.eq.f32.partialorder %v582, 8.507059e+37
        %v584 = vand.u32 %v572, 2147483648
        %v585 = vor.u32 1.1754944e-38, %v584
        %v586 = vsel %vm583, %v585, %v581
        %v587 = vmul.f32 %v569, %v586
        %v588 = vpack.c.bf16 %v587, %v587
        %s589 = scalar_lea.vmem %s345, 4 [#allocation14]
        %590 = vst.msk [vmem:[%s589] sm:$0xf] %vm478, %v588
        %v591 = vrcp.pop %v572
        %v592 = vmul.f32 %v569, %v591
        %v593 = vpack.c.bf16 %v592, %v592
        %594 = vrot.lane.b32.xlu0 %v542, 92
        %v595 = vpop.permute.xlu0 %594
        %v597 = vsel %vm452, %v593, 0
        %v600 = vsel %vm491, %v595, 0
        %602 = vmatpush.bf16.msra.mxu0 0
        %603 = vmatpush.bf16.msra.mxu0 0
        %604 = vmatpush.bf16.msra.mxu0 0
        %605 = vmatpush.bf16.msra.mxu0 0
        %606 = vmatpush.bf16.msra.mxu0 0
        %607 = vmatpush.bf16.msra.mxu0 0
        %608 = vmatpush.bf16.msra.mxu0 0
        %609 = vmatpush.bf16.msra.mxu0 %v600
        %610 = vmatmul.bf16.gmra.mxu0 %v597
        %v611 = vpop.f32.mrf.mxu0
        %v612 = vadd.f32 0.0, %v611
        %v613 = vpop.f32.mrf.mxu0
        %614 = vdwg.mxu0
        %v615 = vld [vmem:[#allocation4] sm:$0xff]
        %v616 = vpack.c.bf16 %v612, %v612
        %s617 = scalar_lea.vmem [#allocation11], 2
        %v618 = vld [vmem:[%s617] sm:$0x3]
        %v620 = vsel %vm432, %v616, 0
        %v623 = vsel %vm514, %v618, 0
        %625 = vmatpush.bf16.msra.mxu0 0
        %626 = vmatpush.bf16.msra.mxu0 0
        %627 = vmatpush.bf16.msra.mxu0 0
        %628 = vmatpush.bf16.msra.mxu0 0
        %629 = vmatpush.bf16.msra.mxu0 0
        %630 = vmatpush.bf16.msra.mxu0 0
        %631 = vmatpush.bf16.msra.mxu0 0
        %632 = vmatpush.bf16.msra.mxu0 %v623
        %633 = vmatmul.bf16.gmra.mxu0 %v620
        %v634 = vpop.f32.mrf.mxu0
        %v635 = vadd.f32 0.0, %v634
        %v636 = vpop.f32.mrf.mxu0
        %637 = vdwg.mxu0
        %v638 = vadd.f32 %v615, %v635
        %639 = vst.msk [vmem:[#allocation4] sm:$0xff] %vm409, %v638
        %v640 = vld [vmem:[#allocation3] sm:$0xf]
        %v641 = vld [vmem:[#allocation2] sm:$0xf]
        %v643 = vunpack.c.l.b16 %v640
        %v644 = vpack.c.b16 %v643, %v643
        %645 = vrot.lane.b32.xlu0 %v644, 120
        %v646 = vpop.permute.xlu0 %645
        %v648 = vunpack.c.l.b16 %v641
        %v649 = vpack.c.b16 %v648, %v648
        %650 = vrot.lane.b32.xlu0 %v649, 120
        %v651 = vpop.permute.xlu0 %650
        %v653 = vsel %vm432, %v646, 0
        %v656 = vsel %vm432, %v651, 0
        %658 = vmatpush.bf16.xpose.msra.mxu0 0
        %659 = vmatpush.bf16.xpose.msra.mxu0 0
        %660 = vmatpush.bf16.xpose.msra.mxu0 0
        %661 = vmatpush.bf16.xpose.msra.mxu0 0
        %662 = vmatpush.bf16.xpose.msra.mxu0 0
        %663 = vmatpush.bf16.xpose.msra.mxu0 0
        %664 = vmatpush.bf16.xpose.msra.mxu0 0
        %665 = vmatpush.bf16.xpose.msra.mxu0 %v656
        %666 = vmatmul.bf16.gmra.mxu0 %v653
        %v667 = vpop.f32.mrf.mxu0
        %v668 = vadd.f32 0.0, %v667
        %v669 = vpop.f32.mrf.mxu0
        %670 = vdwg.mxu0
        %v671 = vsel %vm452, %v668, -inf
        %672 = vmax.xlane.f32.xlu0 %v671
        %v673 = vpop.xlane.xlu0 %672
        %v674 = vsub.f32 %v668, %v673
        %v675 = vmul.f32 %v674, 1.442695
        %v676 = vpow.pop %v675
        %v677 = vsel %vm452, %v676, 0.0
        %678 = vadd.xlane.f32.xlu0 %v677
        %v679 = vpop.xlane.xlu0 %678
        %v680 = vrcp.pop %v679
        %v681 = vmul.f32 %v679, %v680
        %v682 = vsub.f32 1.0, %v681
        %v683 = vmul.f32 %v680, %v682
        %v684 = vadd.f32 %v680, %v683
        %vm685 = vweird.f32 %v679
        %vm686 = vweird.f32 %v680
        %vm687 = vmor %vm685, %vm686
        %v688 = vsel %vm687, %v680, %v684
        %v689 = vand.u32 2147483647, %v679
        %vm690 = vcmp.eq.f32.partialorder %v689, 8.507059e+37
        %v691 = vand.u32 %v679, 2147483648
        %v692 = vor.u32 1.1754944e-38, %v691
        %v693 = vsel %vm690, %v692, %v688
        %v694 = vmul.f32 %v676, %v693
        %v695 = vpack.c.bf16 %v694, %v694
        %s696 = scalar_lea.vmem %s345, 8 [#allocation14]
        %697 = vst.msk [vmem:[%s696] sm:$0xf] %vm478, %v695
        %v698 = vrcp.pop %v679
        %v699 = vmul.f32 %v676, %v698
        %v700 = vpack.c.bf16 %v699, %v699
        %701 = vrot.lane.b32.xlu0 %v649, 88
        %v702 = vpop.permute.xlu0 %701
        %v704 = vsel %vm452, %v700, 0
        %v707 = vsel %vm491, %v702, 0
        %709 = vmatpush.bf16.msra.mxu0 0
        %710 = vmatpush.bf16.msra.mxu0 0
        %711 = vmatpush.bf16.msra.mxu0 0
        %712 = vmatpush.bf16.msra.mxu0 0
        %713 = vmatpush.bf16.msra.mxu0 0
        %714 = vmatpush.bf16.msra.mxu0 0
        %715 = vmatpush.bf16.msra.mxu0 0
        %716 = vmatpush.bf16.msra.mxu0 %v707
        %717 = vmatmul.bf16.gmra.mxu0 %v704
        %v718 = vpop.f32.mrf.mxu0
        %v719 = vadd.f32 0.0, %v718
        %v720 = vpop.f32.mrf.mxu0
        %721 = vdwg.mxu0
        %v722 = vld [vmem:[#allocation4] sm:$0xff]
        %v723 = vpack.c.bf16 %v719, %v719
        %s724 = scalar_lea.vmem [#allocation11], 4
        %v725 = vld [vmem:[%s724] sm:$0x3]
        %v727 = vsel %vm432, %v723, 0
        %v730 = vsel %vm514, %v725, 0
        %732 = vmatpush.bf16.msra.mxu0 0
        %733 = vmatpush.bf16.msra.mxu0 0
        %734 = vmatpush.bf16.msra.mxu0 0
        %735 = vmatpush.bf16.msra.mxu0 0
        %736 = vmatpush.bf16.msra.mxu0 0
        %737 = vmatpush.bf16.msra.mxu0 0
        %738 = vmatpush.bf16.msra.mxu0 0
        %739 = vmatpush.bf16.msra.mxu0 %v730
        %740 = vmatmul.bf16.gmra.mxu0 %v727
        %v741 = vpop.f32.mrf.mxu0
        %v742 = vadd.f32 0.0, %v741
        %v743 = vpop.f32.mrf.mxu0
        %744 = vdwg.mxu0
        %v745 = vadd.f32 %v722, %v742
        %746 = vst.msk [vmem:[#allocation4] sm:$0xff] %vm409, %v745
        %v747 = vld [vmem:[#allocation3] sm:$0xf]
        %v748 = vld [vmem:[#allocation2] sm:$0xf]
        %v750 = vunpack.c.l.b16 %v747
        %v751 = vpack.c.b16 %v750, %v750
        %752 = vrot.lane.b32.xlu0 %v751, 116
        %v753 = vpop.permute.xlu0 %752
        %v755 = vunpack.c.l.b16 %v748
        %v756 = vpack.c.b16 %v755, %v755
        %757 = vrot.lane.b32.xlu0 %v756, 116
        %v758 = vpop.permute.xlu0 %757
        %v760 = vsel %vm432, %v753, 0
        %v763 = vsel %vm432, %v758, 0
        %765 = vmatpush.bf16.xpose.msra.mxu0 0
        %766 = vmatpush.bf16.xpose.msra.mxu0 0
        %767 = vmatpush.bf16.xpose.msra.mxu0 0
        %768 = vmatpush.bf16.xpose.msra.mxu0 0
        %769 = vmatpush.bf16.xpose.msra.mxu0 0
        %770 = vmatpush.bf16.xpose.msra.mxu0 0
        %771 = vmatpush.bf16.xpose.msra.mxu0 0
        %772 = vmatpush.bf16.xpose.msra.mxu0 %v763
        %773 = vmatmul.bf16.gmra.mxu0 %v760
        %v774 = vpop.f32.mrf.mxu0
        %v775 = vadd.f32 0.0, %v774
        %v776 = vpop.f32.mrf.mxu0
        %777 = vdwg.mxu0
        %v778 = vsel %vm452, %v775, -inf
        %779 = vmax.xlane.f32.xlu0 %v778
        %v780 = vpop.xlane.xlu0 %779
        %v781 = vsub.f32 %v775, %v780
        %v782 = vmul.f32 %v781, 1.442695
        %v783 = vpow.pop %v782
        %v784 = vsel %vm452, %v783, 0.0
        %785 = vadd.xlane.f32.xlu0 %v784
        %v786 = vpop.xlane.xlu0 %785
        %v787 = vrcp.pop %v786
        %v788 = vmul.f32 %v786, %v787
        %v789 = vsub.f32 1.0, %v788
        %v790 = vmul.f32 %v787, %v789
        %v791 = vadd.f32 %v787, %v790
        %vm792 = vweird.f32 %v786
        %vm793 = vweird.f32 %v787
        %vm794 = vmor %vm792, %vm793
        %v795 = vsel %vm794, %v787, %v791
        %v796 = vand.u32 2147483647, %v786
        %vm797 = vcmp.eq.f32.partialorder %v796, 8.507059e+37
        %v798 = vand.u32 %v786, 2147483648
        %v799 = vor.u32 1.1754944e-38, %v798
        %v800 = vsel %vm797, %v799, %v795
        %v801 = vmul.f32 %v783, %v800
        %v802 = vpack.c.bf16 %v801, %v801
        %s803 = scalar_lea.vmem %s345, 12 [#allocation14]
        %804 = vst.msk [vmem:[%s803] sm:$0xf] %vm478, %v802
        %v805 = vrcp.pop %v786
        %v806 = vmul.f32 %v783, %v805
        %v807 = vpack.c.bf16 %v806, %v806
        %808 = vrot.lane.b32.xlu0 %v756, 84
        %v809 = vpop.permute.xlu0 %808
        %v811 = vsel %vm452, %v807, 0
        %v814 = vsel %vm491, %v809, 0
        %816 = vmatpush.bf16.msra.mxu0 0
        %817 = vmatpush.bf16.msra.mxu0 0
        %818 = vmatpush.bf16.msra.mxu0 0
        %819 = vmatpush.bf16.msra.mxu0 0
        %820 = vmatpush.bf16.msra.mxu0 0
        %821 = vmatpush.bf16.msra.mxu0 0
        %822 = vmatpush.bf16.msra.mxu0 0
        %823 = vmatpush.bf16.msra.mxu0 %v814
        %824 = vmatmul.bf16.gmra.mxu0 %v811
        %v825 = vpop.f32.mrf.mxu0
        %v826 = vadd.f32 0.0, %v825
        %v827 = vpop.f32.mrf.mxu0
        %828 = vdwg.mxu0
        %v829 = vld [vmem:[#allocation4] sm:$0xff]
        %v830 = vpack.c.bf16 %v826, %v826
        %s831 = scalar_lea.vmem [#allocation11], 6
        %v832 = vld [vmem:[%s831] sm:$0x3]
        %v834 = vsel %vm432, %v830, 0
        %v837 = vsel %vm514, %v832, 0
        %839 = vmatpush.bf16.msra.mxu0 0
        %840 = vmatpush.bf16.msra.mxu0 0
        %841 = vmatpush.bf16.msra.mxu0 0
        %842 = vmatpush.bf16.msra.mxu0 0
        %843 = vmatpush.bf16.msra.mxu0 0
        %844 = vmatpush.bf16.msra.mxu0 0
        %845 = vmatpush.bf16.msra.mxu0 0
        %846 = vmatpush.bf16.msra.mxu0 %v837
        %847 = vmatmul.bf16.gmra.mxu0 %v834
        %v848 = vpop.f32.mrf.mxu0
        %v849 = vadd.f32 0.0, %v848
        %v850 = vpop.f32.mrf.mxu0
        %851 = vdwg.mxu0
        %v852 = vadd.f32 %v829, %v849
        %853 = vst.msk [vmem:[#allocation4] sm:$0xff] %vm409, %v852
        %v854 = vld [vmem:[#allocation3] sm:$0xf]
        %v855 = vld [vmem:[#allocation2] sm:$0xf]
        %v857 = vunpack.c.l.b16 %v854
        %v858 = vpack.c.b16 %v857, %v857
        %859 = vrot.lane.b32.xlu0 %v858, 112
        %v860 = vpop.permute.xlu0 %859
        %v862 = vunpack.c.l.b16 %v855
        %v863 = vpack.c.b16 %v862, %v862
        %864 = vrot.lane.b32.xlu0 %v863, 112
        %v865 = vpop.permute.xlu0 %864
        %v867 = vsel %vm432, %v860, 0
        %v870 = vsel %vm432, %v865, 0
        %872 = vmatpush.bf16.xpose.msra.mxu0 0
        %873 = vmatpush.bf16.xpose.msra.mxu0 0
        %874 = vmatpush.bf16.xpose.msra.mxu0 0
        %875 = vmatpush.bf16.xpose.msra.mxu0 0
        %876 = vmatpush.bf16.xpose.msra.mxu0 0
        %877 = vmatpush.bf16.xpose.msra.mxu0 0
        %878 = vmatpush.bf16.xpose.msra.mxu0 0
        %879 = vmatpush.bf16.xpose.msra.mxu0 %v870
        %880 = vmatmul.bf16.gmra.mxu0 %v867
        %v881 = vpop.f32.mrf.mxu0
        %v882 = vadd.f32 0.0, %v881
        %v883 = vpop.f32.mrf.mxu0
        %884 = vdwg.mxu0
        %v885 = vsel %vm452, %v882, -inf
        %886 = vmax.xlane.f32.xlu0 %v885
        %v887 = vpop.xlane.xlu0 %886
        %v888 = vsub.f32 %v882, %v887
        %v889 = vmul.f32 %v888, 1.442695
        %v890 = vpow.pop %v889
        %v891 = vsel %vm452, %v890, 0.0
        %892 = vadd.xlane.f32.xlu0 %v891
        %v893 = vpop.xlane.xlu0 %892
        %v894 = vrcp.pop %v893
        %v895 = vmul.f32 %v893, %v894
        %v896 = vsub.f32 1.0, %v895
        %v897 = vmul.f32 %v894, %v896
        %v898 = vadd.f32 %v894, %v897
        %vm899 = vweird.f32 %v893
        %vm900 = vweird.f32 %v894
        %vm901 = vmor %vm899, %vm900
        %v902 = vsel %vm901, %v894, %v898
        %v903 = vand.u32 2147483647, %v893
        %vm904 = vcmp.eq.f32.partialorder %v903, 8.507059e+37
        %v905 = vand.u32 %v893, 2147483648
        %v906 = vor.u32 1.1754944e-38, %v905
        %v907 = vsel %vm904, %v906, %v902
        %v908 = vmul.f32 %v890, %v907
        %v909 = vpack.c.bf16 %v908, %v908
        %s910 = scalar_lea.vmem %s345, 16 [#allocation14]
        %911 = vst.msk [vmem:[%s910] sm:$0xf] %vm478, %v909
        %v912 = vrcp.pop %v893
        %v913 = vmul.f32 %v890, %v912
        %v914 = vpack.c.bf16 %v913, %v913
        %915 = vrot.lane.b32.xlu0 %v863, 80
        %v916 = vpop.permute.xlu0 %915
        %v918 = vsel %vm452, %v914, 0
        %v921 = vsel %vm491, %v916, 0
        %923 = vmatpush.bf16.msra.mxu0 0
        %924 = vmatpush.bf16.msra.mxu0 0
        %925 = vmatpush.bf16.msra.mxu0 0
        %926 = vmatpush.bf16.msra.mxu0 0
        %927 = vmatpush.bf16.msra.mxu0 0
        %928 = vmatpush.bf16.msra.mxu0 0
        %929 = vmatpush.bf16.msra.mxu0 0
        %930 = vmatpush.bf16.msra.mxu0 %v921
        %931 = vmatmul.bf16.gmra.mxu0 %v918
        %v932 = vpop.f32.mrf.mxu0
        %v933 = vadd.f32 0.0, %v932
        %v934 = vpop.f32.mrf.mxu0
        %935 = vdwg.mxu0
        %v936 = vld [vmem:[#allocation4] sm:$0xff]
        %v937 = vpack.c.bf16 %v933, %v933
        %s938 = scalar_lea.vmem [#allocation11], 8
        %v939 = vld [vmem:[%s938] sm:$0x3]
        %v941 = vsel %vm432, %v937, 0
        %v944 = vsel %vm514, %v939, 0
        %946 = vmatpush.bf16.msra.mxu0 0
        %947 = vmatpush.bf16.msra.mxu0 0
        %948 = vmatpush.bf16.msra.mxu0 0
        %949 = vmatpush.bf16.msra.mxu0 0
        %950 = vmatpush.bf16.msra.mxu0 0
        %951 = vmatpush.bf16.msra.mxu0 0
        %952 = vmatpush.bf16.msra.mxu0 0
        %953 = vmatpush.bf16.msra.mxu0 %v944
        %954 = vmatmul.bf16.gmra.mxu0 %v941
        %v955 = vpop.f32.mrf.mxu0
        %v956 = vadd.f32 0.0, %v955
        %v957 = vpop.f32.mrf.mxu0
        %958 = vdwg.mxu0
        %v959 = vadd.f32 %v936, %v956
        %960 = vst.msk [vmem:[#allocation4] sm:$0xff] %vm409, %v959
        %v961 = vld [vmem:[#allocation3] sm:$0xf]
        %v962 = vld [vmem:[#allocation2] sm:$0xf]
        %v964 = vunpack.c.l.b16 %v961
        %v965 = vpack.c.b16 %v964, %v964
        %966 = vrot.lane.b32.xlu0 %v965, 108
        %v967 = vpop.permute.xlu0 %966
        %v969 = vunpack.c.l.b16 %v962
        %v970 = vpack.c.b16 %v969, %v969
        %971 = vrot.lane.b32.xlu0 %v970, 108
        %v972 = vpop.permute.xlu0 %971
        %v974 = vsel %vm432, %v967, 0
        %v977 = vsel %vm432, %v972, 0
        %979 = vmatpush.bf16.xpose.msra.mxu0 0
        %980 = vmatpush.bf16.xpose.msra.mxu0 0
        %981 = vmatpush.bf16.xpose.msra.mxu0 0
        %982 = vmatpush.bf16.xpose.msra.mxu0 0
        %983 = vmatpush.bf16.xpose.msra.mxu0 0
        %984 = vmatpush.bf16.xpose.msra.mxu0 0
        %985 = vmatpush.bf16.xpose.msra.mxu0 0
        %986 = vmatpush.bf16.xpose.msra.mxu0 %v977
        %987 = vmatmul.bf16.gmra.mxu0 %v974
        %v988 = vpop.f32.mrf.mxu0
        %v989 = vadd.f32 0.0, %v988
        %v990 = vpop.f32.mrf.mxu0
        %991 = vdwg.mxu0
        %v992 = vsel %vm452, %v989, -inf
        %993 = vmax.xlane.f32.xlu0 %v992
        %v994 = vpop.xlane.xlu0 %993
        %v995 = vsub.f32 %v989, %v994
        %v996 = vmul.f32 %v995, 1.442695
        %v997 = vpow.pop %v996
        %v998 = vsel %vm452, %v997, 0.0
        %999 = vadd.xlane.f32.xlu0 %v998
        %v1000 = vpop.xlane.xlu0 %999
        %v1001 = vrcp.pop %v1000
        %v1002 = vmul.f32 %v1000, %v1001
        %v1003 = vsub.f32 1.0, %v1002
        %v1004 = vmul.f32 %v1001, %v1003
        %v1005 = vadd.f32 %v1001, %v1004
        %vm1006 = vweird.f32 %v1000
        %vm1007 = vweird.f32 %v1001
        %vm1008 = vmor %vm1006, %vm1007
        %v1009 = vsel %vm1008, %v1001, %v1005
        %v1010 = vand.u32 2147483647, %v1000
        %vm1011 = vcmp.eq.f32.partialorder %v1010, 8.507059e+37
        %v1012 = vand.u32 %v1000, 2147483648
        %v1013 = vor.u32 1.1754944e-38, %v1012
        %v1014 = vsel %vm1011, %v1013, %v1009
        %v1015 = vmul.f32 %v997, %v1014
        %v1016 = vpack.c.bf16 %v1015, %v1015
        %s1017 = scalar_lea.vmem %s345, 20 [#allocation14]
        %1018 = vst.msk [vmem:[%s1017] sm:$0xf] %vm478, %v1016
        %v1019 = vrcp.pop %v1000
        %v1020 = vmul.f32 %v997, %v1019
        %v1021 = vpack.c.bf16 %v1020, %v1020
        %1022 = vrot.lane.b32.xlu0 %v970, 76
        %v1023 = vpop.permute.xlu0 %1022
        %v1025 = vsel %vm452, %v1021, 0
        %v1028 = vsel %vm491, %v1023, 0
        %1030 = vmatpush.bf16.msra.mxu0 0
        %1031 = vmatpush.bf16.msra.mxu0 0
        %1032 = vmatpush.bf16.msra.mxu0 0
        %1033 = vmatpush.bf16.msra.mxu0 0
        %1034 = vmatpush.bf16.msra.mxu0 0
        %1035 = vmatpush.bf16.msra.mxu0 0
        %1036 = vmatpush.bf16.msra.mxu0 0
        %1037 = vmatpush.bf16.msra.mxu0 %v1028
        %1038 = vmatmul.bf16.gmra.mxu0 %v1025
        %v1039 = vpop.f32.mrf.mxu0
        %v1040 = vadd.f32 0.0, %v1039
        %v1041 = vpop.f32.mrf.mxu0
        %1042 = vdwg.mxu0
        %v1043 = vld [vmem:[#allocation4] sm:$0xff]
        %v1044 = vpack.c.bf16 %v1040, %v1040
        %s1045 = scalar_lea.vmem [#allocation11], 10
        %v1046 = vld [vmem:[%s1045] sm:$0x3]
        %v1048 = vsel %vm432, %v1044, 0
        %v1051 = vsel %vm514, %v1046, 0
        %1053 = vmatpush.bf16.msra.mxu0 0
        %1054 = vmatpush.bf16.msra.mxu0 0
        %1055 = vmatpush.bf16.msra.mxu0 0
        %1056 = vmatpush.bf16.msra.mxu0 0
        %1057 = vmatpush.bf16.msra.mxu0 0
        %1058 = vmatpush.bf16.msra.mxu0 0
        %1059 = vmatpush.bf16.msra.mxu0 0
        %1060 = vmatpush.bf16.msra.mxu0 %v1051
        %1061 = vmatmul.bf16.gmra.mxu0 %v1048
        %v1062 = vpop.f32.mrf.mxu0
        %v1063 = vadd.f32 0.0, %v1062
        %v1064 = vpop.f32.mrf.mxu0
        %1065 = vdwg.mxu0
        %v1066 = vadd.f32 %v1043, %v1063
        %1067 = vst.msk [vmem:[#allocation4] sm:$0xff] %vm409, %v1066
        %v1068 = vld [vmem:[#allocation3] sm:$0xf]
        %v1069 = vld [vmem:[#allocation2] sm:$0xf]
        %v1071 = vunpack.c.l.b16 %v1068
        %v1072 = vpack.c.b16 %v1071, %v1071
        %1073 = vrot.lane.b32.xlu0 %v1072, 104
        %v1074 = vpop.permute.xlu0 %1073
        %v1076 = vunpack.c.l.b16 %v1069
        %v1077 = vpack.c.b16 %v1076, %v1076
        %1078 = vrot.lane.b32.xlu0 %v1077, 104
        %v1079 = vpop.permute.xlu0 %1078
        %v1081 = vsel %vm432, %v1074, 0
        %v1084 = vsel %vm432, %v1079, 0
        %1086 = vmatpush.bf16.xpose.msra.mxu0 0
        %1087 = vmatpush.bf16.xpose.msra.mxu0 0
        %1088 = vmatpush.bf16.xpose.msra.mxu0 0
        %1089 = vmatpush.bf16.xpose.msra.mxu0 0
        %1090 = vmatpush.bf16.xpose.msra.mxu0 0
        %1091 = vmatpush.bf16.xpose.msra.mxu0 0
        %1092 = vmatpush.bf16.xpose.msra.mxu0 0
        %1093 = vmatpush.bf16.xpose.msra.mxu0 %v1084
        %1094 = vmatmul.bf16.gmra.mxu0 %v1081
        %v1095 = vpop.f32.mrf.mxu0
        %v1096 = vadd.f32 0.0, %v1095
        %v1097 = vpop.f32.mrf.mxu0
        %1098 = vdwg.mxu0
        %v1099 = vsel %vm452, %v1096, -inf
        %1100 = vmax.xlane.f32.xlu0 %v1099
        %v1101 = vpop.xlane.xlu0 %1100
        %v1102 = vsub.f32 %v1096, %v1101
        %v1103 = vmul.f32 %v1102, 1.442695
        %v1104 = vpow.pop %v1103
        %v1105 = vsel %vm452, %v1104, 0.0
        %1106 = vadd.xlane.f32.xlu0 %v1105
        %v1107 = vpop.xlane.xlu0 %1106
        %v1108 = vrcp.pop %v1107
        %v1109 = vmul.f32 %v1107, %v1108
        %v1110 = vsub.f32 1.0, %v1109
        %v1111 = vmul.f32 %v1108, %v1110
        %v1112 = vadd.f32 %v1108, %v1111
        %vm1113 = vweird.f32 %v1107
        %vm1114 = vweird.f32 %v1108
        %vm1115 = vmor %vm1113, %vm1114
        %v1116 = vsel %vm1115, %v1108, %v1112
        %v1117 = vand.u32 2147483647, %v1107
        %vm1118 = vcmp.eq.f32.partialorder %v1117, 8.507059e+37
        %v1119 = vand.u32 %v1107, 2147483648
        %v1120 = vor.u32 1.1754944e-38, %v1119
        %v1121 = vsel %vm1118, %v1120, %v1116
        %v1122 = vmul.f32 %v1104, %v1121
        %v1123 = vpack.c.bf16 %v1122, %v1122
        %s1124 = scalar_lea.vmem %s345, 24 [#allocation14]
        %1125 = vst.msk [vmem:[%s1124] sm:$0xf] %vm478, %v1123
        %v1126 = vrcp.pop %v1107
        %v1127 = vmul.f32 %v1104, %v1126
        %v1128 = vpack.c.bf16 %v1127, %v1127
        %1129 = vrot.lane.b32.xlu0 %v1077, 72
        %v1130 = vpop.permute.xlu0 %1129
        %v1132 = vsel %vm452, %v1128, 0
        %v1135 = vsel %vm491, %v1130, 0
        %1137 = vmatpush.bf16.msra.mxu0 0
        %1138 = vmatpush.bf16.msra.mxu0 0
        %1139 = vmatpush.bf16.msra.mxu0 0
        %1140 = vmatpush.bf16.msra.mxu0 0
        %1141 = vmatpush.bf16.msra.mxu0 0
        %1142 = vmatpush.bf16.msra.mxu0 0
        %1143 = vmatpush.bf16.msra.mxu0 0
        %1144 = vmatpush.bf16.msra.mxu0 %v1135
        %1145 = vmatmul.bf16.gmra.mxu0 %v1132
        %v1146 = vpop.f32.mrf.mxu0
        %v1147 = vadd.f32 0.0, %v1146
        %v1148 = vpop.f32.mrf.mxu0
        %1149 = vdwg.mxu0
        %v1150 = vld [vmem:[#allocation4] sm:$0xff]
        %v1151 = vpack.c.bf16 %v1147, %v1147
        %s1152 = scalar_lea.vmem [#allocation11], 12
        %v1153 = vld [vmem:[%s1152] sm:$0x3]
        %v1155 = vsel %vm432, %v1151, 0
        %v1158 = vsel %vm514, %v1153, 0
        %1160 = vmatpush.bf16.msra.mxu0 0
        %1161 = vmatpush.bf16.msra.mxu0 0
        %1162 = vmatpush.bf16.msra.mxu0 0
        %1163 = vmatpush.bf16.msra.mxu0 0
        %1164 = vmatpush.bf16.msra.mxu0 0
        %1165 = vmatpush.bf16.msra.mxu0 0
        %1166 = vmatpush.bf16.msra.mxu0 0
        %1167 = vmatpush.bf16.msra.mxu0 %v1158
        %1168 = vmatmul.bf16.gmra.mxu0 %v1155
        %v1169 = vpop.f32.mrf.mxu0
        %v1170 = vadd.f32 0.0, %v1169
        %v1171 = vpop.f32.mrf.mxu0
        %1172 = vdwg.mxu0
        %v1173 = vadd.f32 %v1150, %v1170
        %1174 = vst.msk [vmem:[#allocation4] sm:$0xff] %vm409, %v1173
        %v1175 = vld [vmem:[#allocation3] sm:$0xf]
        %v1176 = vld [vmem:[#allocation2] sm:$0xf]
        %v1178 = vunpack.c.l.b16 %v1175
        %v1179 = vpack.c.b16 %v1178, %v1178
        %1180 = vrot.lane.b32.xlu0 %v1179, 100
        %v1181 = vpop.permute.xlu0 %1180
        %v1183 = vunpack.c.l.b16 %v1176
        %v1184 = vpack.c.b16 %v1183, %v1183
        %1185 = vrot.lane.b32.xlu0 %v1184, 100
        %v1186 = vpop.permute.xlu0 %1185
        %v1188 = vsel %vm432, %v1181, 0
        %v1191 = vsel %vm432, %v1186, 0
        %1193 = vmatpush.bf16.xpose.msra.mxu0 0
        %1194 = vmatpush.bf16.xpose.msra.mxu0 0
        %1195 = vmatpush.bf16.xpose.msra.mxu0 0
        %1196 = vmatpush.bf16.xpose.msra.mxu0 0
        %1197 = vmatpush.bf16.xpose.msra.mxu0 0
        %1198 = vmatpush.bf16.xpose.msra.mxu0 0
        %1199 = vmatpush.bf16.xpose.msra.mxu0 0
        %1200 = vmatpush.bf16.xpose.msra.mxu0 %v1191
        %1201 = vmatmul.bf16.gmra.mxu0 %v1188
        %v1202 = vpop.f32.mrf.mxu0
        %v1203 = vadd.f32 0.0, %v1202
        %v1204 = vpop.f32.mrf.mxu0
        %1205 = vdwg.mxu0
        %v1206 = vsel %vm452, %v1203, -inf
        %1207 = vmax.xlane.f32.xlu0 %v1206
        %v1208 = vpop.xlane.xlu0 %1207
        %v1209 = vsub.f32 %v1203, %v1208
        %v1210 = vmul.f32 %v1209, 1.442695
        %v1211 = vpow.pop %v1210
        %v1212 = vsel %vm452, %v1211, 0.0
        %1213 = vadd.xlane.f32.xlu0 %v1212
        %v1214 = vpop.xlane.xlu0 %1213
        %v1215 = vrcp.pop %v1214
        %v1216 = vmul.f32 %v1214, %v1215
        %v1217 = vsub.f32 1.0, %v1216
        %v1218 = vmul.f32 %v1215, %v1217
        %v1219 = vadd.f32 %v1215, %v1218
        %vm1220 = vweird.f32 %v1214
        %vm1221 = vweird.f32 %v1215
        %vm1222 = vmor %vm1220, %vm1221
        %v1223 = vsel %vm1222, %v1215, %v1219
        %v1224 = vand.u32 2147483647, %v1214
        %vm1225 = vcmp.eq.f32.partialorder %v1224, 8.507059e+37
        %v1226 = vand.u32 %v1214, 2147483648
        %v1227 = vor.u32 1.1754944e-38, %v1226
        %v1228 = vsel %vm1225, %v1227, %v1223
        %v1229 = vmul.f32 %v1211, %v1228
        %v1230 = vpack.c.bf16 %v1229, %v1229
        %s1231 = scalar_lea.vmem %s345, 28 [#allocation14]
        %1232 = vst.msk [vmem:[%s1231] sm:$0xf] %vm478, %v1230
        %v1233 = vrcp.pop %v1214
        %v1234 = vmul.f32 %v1211, %v1233
        %v1235 = vpack.c.bf16 %v1234, %v1234
        %1236 = vrot.lane.b32.xlu0 %v1184, 68
        %v1237 = vpop.permute.xlu0 %1236
        %v1239 = vsel %vm452, %v1235, 0
        %v1242 = vsel %vm491, %v1237, 0
        %1244 = vmatpush.bf16.msra.mxu0 0
        %1245 = vmatpush.bf16.msra.mxu0 0
        %1246 = vmatpush.bf16.msra.mxu0 0
        %1247 = vmatpush.bf16.msra.mxu0 0
        %1248 = vmatpush.bf16.msra.mxu0 0
        %1249 = vmatpush.bf16.msra.mxu0 0
        %1250 = vmatpush.bf16.msra.mxu0 0
        %1251 = vmatpush.bf16.msra.mxu0 %v1242
        %1252 = vmatmul.bf16.gmra.mxu0 %v1239
        %v1253 = vpop.f32.mrf.mxu0
        %v1254 = vadd.f32 0.0, %v1253
        %v1255 = vpop.f32.mrf.mxu0
        %1256 = vdwg.mxu0
        %v1257 = vld [vmem:[#allocation4] sm:$0xff]
        %v1258 = vpack.c.bf16 %v1254, %v1254
        %s1259 = scalar_lea.vmem [#allocation11], 14
        %v1260 = vld [vmem:[%s1259] sm:$0x3]
        %v1262 = vsel %vm432, %v1258, 0
        %v1265 = vsel %vm514, %v1260, 0
        %1267 = vmatpush.bf16.msra.mxu0 0
        %1268 = vmatpush.bf16.msra.mxu0 0
        %1269 = vmatpush.bf16.msra.mxu0 0
        %1270 = vmatpush.bf16.msra.mxu0 0
        %1271 = vmatpush.bf16.msra.mxu0 0
        %1272 = vmatpush.bf16.msra.mxu0 0
        %1273 = vmatpush.bf16.msra.mxu0 0
        %1274 = vmatpush.bf16.msra.mxu0 %v1265
        %1275 = vmatmul.bf16.gmra.mxu0 %v1262
        %v1276 = vpop.f32.mrf.mxu0
        %v1277 = vadd.f32 0.0, %v1276
        %v1278 = vpop.f32.mrf.mxu0
        %1279 = vdwg.mxu0
        %v1280 = vadd.f32 %v1257, %v1277
        %1281 = vst.msk [vmem:[#allocation4] sm:$0xff] %vm409, %v1280
        %v1282 = vld [vmem:[#allocation4] sm:$0xff]
        %v1283 = vld [vmem:[%s4] sm:$0x1]
        %v1285 = vperm.slane %v1283, 0
        %v1287 = vadd.f32 %v1282, %v1285
        %1288 = vst.msk [vmem:[%s338] sm:$0xff] %vm409, %v1287
        %s1289 = sand.u32 %s161, 1
        %s1290 = scalar_lea.sflag [#allocation7], %s1289
        %s1291 = sand.u32 %s161, 1
        %s1292 = smul.addr %s1291, 8
        %s1293 = scalar_lea.vmem [#allocation13], %s1292
        %s1294 = sand.u32 %s189, 1
        %s1295 = scalar_lea.sflag [#allocation15], %s1294
        %s1296 = sand.u32 %s189, 1
        %s1297 = smul.addr %s1296, 32
        %s1298 = scalar_lea.vmem [#allocation14], %s1297
        // Predicated region
        $region61: #{apla_attention_fused.1} parent=39 // pred_check
          %p1299 = pneg %p171
        $region62: #{apla_attention_fused.1} parent=39 // pred_check_branch
          %1301 = sbr.rel (%p1299) target = $region64
        $region63: #{apla_attention_fused.1} parent=39 // pred_region
          %1303 = vsyncadd %s1290, 0
          %s1304 = sadd.s32 %s34, %s33
          %s1305 = smul.addr %s1304, 8
          %s1306 = scalar_lea.hbm %s5, %s1305
          %s1308 = sshll.u32 %s1293, 4
          %s1309 = int_to_ptr.vmem [resolvable:$true] %s1308
          %s1310 = sshll.u32 %s1306, 4
          %s1311 = int_to_ptr.hbm [resolvable:$true] %s1310
          %1313 = dma.vmem_to_hbm [thread:$0]  %s1309, 128, %s1311, %s1290
        $region64: #{apla_attention_fused.1} parent=39 // pred_fallthru
          _
        // Predicated region
        $region65: #{apla_attention_fused.1} parent=39 // pred_check
          %p1314 = pneg %p199
        $region66: #{apla_attention_fused.1} parent=39 // pred_check_branch
          %1316 = sbr.rel (%p1314) target = $region68
        $region67: #{apla_attention_fused.1} parent=39 // pred_region
          %1318 = vsyncadd %s1295, 0
          %s1319 = smul.addr %s33, 8
          %s1320 = sadd.s32 %s34, %s1319
          %s1321 = smul.addr %s1320, 4
          %s1322 = scalar_lea.hbm %s6, %s1321
          %s1323 = sshll.u32 %s1298, 4
          %s1324 = int_to_ptr.vmem [resolvable:$true] %s1323
          %s1325 = sshll.u32 %s1322, 4
          %s1326 = int_to_ptr.hbm [resolvable:$true] %s1325
          %1331 = dma.vmem_to_hbm [thread:$0]  %s1324, 512, %s1326, %s1295, 64, 64, 4
        $region68: #{apla_attention_fused.1} parent=39 // pred_fallthru
          _
      $region40: #{apla_attention_fused.1} parent=5 // pred_fallthru
        _
      %p1332 = scmp.le.s32.totalorder 2, %s24
      // Predicated region
      $region69: #{apla_attention_fused.1} parent=5 // pred_check
        %p1333 = pneg %p1332
      $region70: #{apla_attention_fused.1} parent=5 // pred_check_branch
        %1335 = sbr.rel (%p1333) target = $region72
      $region71: #{apla_attention_fused.1} parent=5 // pred_region
        %s1336 = ssub.s32 %s24, 2
        // Predicated region
        $region73: #{apla_attention_fused.1} parent=71 // pred_check
          %p1337 = pneg %p177
        $region74: #{apla_attention_fused.1} parent=71 // pred_check_branch
          %1339 = sbr.rel (%p1337) target = $region76
        $region75: #{apla_attention_fused.1} parent=71 // pred_region
          %s1340 = sand.u32 %s162, 1
          %s1341 = scalar_lea.sflag [#allocation7], %s1340
          %s1342 = sand.u32 %s162, 1
          %s1343 = smul.addr %s1342, 8
          %s1344 = scalar_lea.vmem [#allocation13], %s1343
          %1346 = dma.done %s1341, 128
        $region76: #{apla_attention_fused.1} parent=71 // pred_fallthru
          _
        // Predicated region
        $region77: #{apla_attention_fused.1} parent=71 // pred_check
          %p1347 = pneg %p205
        $region78: #{apla_attention_fused.1} parent=71 // pred_check_branch
          %1349 = sbr.rel (%p1347) target = $region80
        $region79: #{apla_attention_fused.1} parent=71 // pred_region
          %s1350 = sand.u32 %s190, 1
          %s1351 = scalar_lea.sflag [#allocation15], %s1350
          %s1352 = sand.u32 %s190, 1
          %s1353 = smul.addr %s1352, 32
          %s1354 = scalar_lea.vmem [#allocation14], %s1353
          %1356 = dma.done %s1351, 512
        $region80: #{apla_attention_fused.1} parent=71 // pred_fallthru
          _
      $region72: #{apla_attention_fused.1} parent=5 // pred_fallthru
        _
    $region6: #{apla_attention_fused.1} parent=1 // loop_footer
      %s28 = sadd.s32 1, %s24
    $region7: #{apla_attention_fused.1} parent=1 // loop_footer_branch
      %23 = sbr.rel target = $region3
    $region8: #{apla_attention_fused.1} parent=1 // loop_exit
      _
    %1357 = vsyncpa [#allocation6], 1
    %s1358 = scalar_lea.sflag [#allocation6], 1
    %1359 = vsyncpa %s1358, 1
    %1360 = vsyncpa [#allocation9], 1
    %1361 = vsyncpa [#allocation12], 1
    %1362 = vsyncpa [#allocation7], 1
    %s1363 = scalar_lea.sflag [#allocation7], 1
    %1364 = vsyncpa %s1363, 1
    %1365 = vsyncpa [#allocation15], 1
    %s1366 = scalar_lea.sflag [#allocation15], 1
    %1367 = vsyncpa %s1366, 1

</llo_original>
